<compile_context>
chip_gen: v5e
topology: v5e:2x2
jax: 0.10.0
libtpu: 0.0.40
codegen_flags: <defaults>
</compile_context>

<pallas_src>
import jax
import jax.numpy as jnp
from jax.experimental import pallas as pl
from jax.experimental.pallas import tpu as pltpu


def _round_up(x, m):
    return ((x + m - 1) // m) * m


def _pad_axis(x, axis, target):
    pad = target - x.shape[axis]
    if pad == 0:
        return x
    widths = [(0, 0)] * x.ndim
    widths[axis] = (0, pad)
    return jnp.pad(x, widths)


def _two_stream_kernel(flow_ref, rgb_ref, wf_ref, wr_ref, wcf_ref, wcr_ref,
                       b_ref, out_ref):
    """Grid = (batch blocks,). All weights are VMEM-resident.

    flow_ref : (tb, Kf)   bf16  flattened flow activations
    rgb_ref  : (tb, Dr)   bf16  time-averaged flattened rgb activations
    wf_ref   : (Kf, F)    bf16  flow backbone stand-in weight
    wr_ref   : (Dr, F)    bf16  rgb backbone stand-in weight
    wcf_ref  : (F, Np)    bf16  classifier rows acting on flow features
    wcr_ref  : (F, Np)    bf16  classifier rows acting on rgb features
    b_ref    : (1, Np)    f32   classifier bias
    out_ref  : (tb, Np)   f32   logits
    """
    # Stand-in backbones: single projection per stream, f32 MXU accumulation.
    flow_feats = jnp.dot(flow_ref[...], wf_ref[...],
                         preferred_element_type=jnp.float32)
    rgb_feats = jnp.dot(rgb_ref[...], wr_ref[...],
                        preferred_element_type=jnp.float32)

    # cat((flow, rgb), 1) -> Dropout(0.5) [eval: identity] -> Linear(1024, C)
    # expressed as two dots on the pre-split classifier weight (identical math,
    # no lane-axis concat).
    logits = (jnp.dot(flow_feats.astype(jnp.bfloat16), wcf_ref[...],
                      preferred_element_type=jnp.float32)
              + jnp.dot(rgb_feats.astype(jnp.bfloat16), wcr_ref[...],
                        preferred_element_type=jnp.float32)
              + b_ref[...])
    out_ref[...] = logits.astype(out_ref.dtype)


def two_stream_attention_forward(input_flow, input_frame, params):
    """input_flow: (B, 2*stackSize, H, W); input_frame: (T, B, 3, H, W)."""
    B = input_flow.shape[0]
    feat = params["wf"].shape[1]
    n_pad = params["wcf"].shape[1]
    num_classes = params["num_classes"]

    # ---- plain-JAX glue: flatten flow, time-average + flatten frames ----
    flow_flat = input_flow.reshape(B, -1).astype(jnp.bfloat16)
    frame_flat = jnp.mean(input_frame.astype(jnp.float32),
                          axis=0).reshape(B, -1).astype(jnp.bfloat16)

    wf, wr = params["wf"], params["wr"]
    wcf, wcr, bias = params["wcf"], params["wcr"], params["b"]

    # ---- pad to TPU-friendly shapes (zero padding keeps the math exact) ----
    # Batch rounds to 16 so bf16 activation rows are fully sublane-packed.
    b_pad = _round_up(B, 16)
    tb = b_pad if b_pad <= 256 else 256   # 256-row blocks fill v6e/v7x MXU
    b_pad = _round_up(b_pad, tb)

    kf_pad = _round_up(wf.shape[0], 128)
    dr_pad = _round_up(wr.shape[0], 128)

    flow_flat = _pad_axis(_pad_axis(flow_flat, 0, b_pad), 1, kf_pad)
    frame_flat = _pad_axis(_pad_axis(frame_flat, 0, b_pad), 1, dr_pad)
    wf = _pad_axis(wf, 0, kf_pad)
    wr = _pad_axis(wr, 0, dr_pad)

    grid = (b_pad // tb,)

    # Weights are streamed exactly once (batch-invariant index maps), so count
    # them once in the advisory cost estimate.
    flops = 2 * b_pad * (kf_pad * feat + dr_pad * feat + 2 * feat * n_pad)
    bytes_accessed = (flow_flat.nbytes + frame_flat.nbytes + wf.nbytes
                      + wr.nbytes + wcf.nbytes + wcr.nbytes + bias.nbytes
                      + b_pad * n_pad * 4)

    out = pl.pallas_call(
        _two_stream_kernel,
        out_shape=jax.ShapeDtypeStruct((b_pad, n_pad), jnp.float32),
        grid_spec=pltpu.PrefetchScalarGridSpec(
            num_scalar_prefetch=0,
            grid=grid,
            in_specs=[
                pl.BlockSpec((tb, kf_pad), lambda i: (i, 0)),    # flow acts
                pl.BlockSpec((tb, dr_pad), lambda i: (i, 0)),    # rgb acts
                pl.BlockSpec((kf_pad, feat), lambda i: (0, 0)),  # wf (resident)
                pl.BlockSpec((dr_pad, feat), lambda i: (0, 0)),  # wr (resident)
                pl.BlockSpec((feat, n_pad), lambda i: (0, 0)),   # wc flow half
                pl.BlockSpec((feat, n_pad), lambda i: (0, 0)),   # wc rgb half
                pl.BlockSpec((1, n_pad), lambda i: (0, 0)),      # bias
            ],
            out_specs=pl.BlockSpec((tb, n_pad), lambda i: (i, 0)),
        ),
        compiler_params=pltpu.CompilerParams(
            dimension_semantics=("parallel",)),
        cost_estimate=pl.CostEstimate(
            flops=flops, transcendentals=0, bytes_accessed=bytes_accessed),
    )(flow_flat, frame_flat, wf, wr, wcf, wcr, bias)

    return out[:B, :num_classes]


def init_params(key, flow_in_dim, rgb_in_dim, feat_dim=512, num_classes=61):
    k1, k2, k3, k4 = jax.random.split(key, 4)
    scale = 0.02
    n_pad = _round_up(num_classes, 128)

    # Stand-in backbone projections -> 512-d features per stream.
    wf = scale * jax.random.normal(k1, (flow_in_dim, feat_dim), jnp.float32)
    wr = scale * jax.random.normal(k2, (rgb_in_dim, feat_dim), jnp.float32)

    # fc2: Linear(512*2, num_classes), stored pre-transposed, lane-padded to
    # 128 classes and pre-split into the rows acting on flow feats (wcf) and
    # rgb feats (wcr) -- same order as torch.cat((flowFeats, rgbFeats), 1).
    wc = jnp.zeros((2 * feat_dim, n_pad), jnp.float32)
    wc = wc.at[:, :num_classes].set(
        scale * jax.random.normal(k3, (2 * feat_dim, num_classes),
                                  jnp.float32))
    b = jnp.zeros((1, n_pad), jnp.float32)
    b = b.at[:, :num_classes].set(
        scale * jax.random.normal(k4, (1, num_classes), jnp.float32))

    return {
        "wf": wf.astype(jnp.bfloat16),
        "wr": wr.astype(jnp.bfloat16),
        "wcf": wc[:feat_dim].astype(jnp.bfloat16),
        "wcr": wc[feat_dim:].astype(jnp.bfloat16),
        "b": b,                       # bias kept f32 (f32 epilogue add)
        "num_classes": num_classes,
    }


if __name__ == "__main__":
    key = jax.random.PRNGKey(0)
    kf, kr, kp = jax.random.split(key, 3)

    B, stackSize, H, W = 2, 5, 16, 16      # flow: 2*stackSize channels
    T = 4                                   # frame clip length
    num_classes = 61

    input_flow = jax.random.normal(kf, (B, 2 * stackSize, H, W), jnp.float32)
    input_frame = jax.random.normal(kr, (T, B, 3, H, W), jnp.float32)

    params = init_params(kp,
                         flow_in_dim=2 * stackSize * H * W,   # 2560
                         rgb_in_dim=3 * H * W,                # 768
                         feat_dim=512,
                         num_classes=num_classes)

    out = two_stream_attention_forward(input_flow, input_frame, params)
    out = jax.block_until_ready(out)
    assert out.shape == (B, num_classes), out.shape
    assert bool(jnp.all(jnp.isfinite(out)))

    # Reference check against plain-JAX math (same stand-in backbones,
    # classifier written in the torch cat-then-Linear form).
    flow_flat = input_flow.reshape(B, -1).astype(jnp.bfloat16)
    frame_flat = jnp.mean(input_frame.astype(jnp.float32),
                          axis=0).reshape(B, -1).astype(jnp.bfloat16)
    flow_feats = jnp.dot(flow_flat, params["wf"],
                         preferred_element_type=jnp.float32)
    rgb_feats = jnp.dot(frame_flat, params["wr"],
                        preferred_element_type=jnp.float32)
    feats = jnp.concatenate([flow_feats, rgb_feats],
                            axis=1).astype(jnp.bfloat16)
    wc_full = jnp.concatenate([params["wcf"], params["wcr"]], axis=0)
    ref = (jnp.dot(feats, wc_full, preferred_element_type=jnp.float32)
           + params["b"])[:, :num_classes]
    assert jnp.allclose(out, ref, atol=5e-2, rtol=5e-2), \
        float(jnp.max(jnp.abs(out - ref)))

    print("KERNEL_OK")
</pallas_src>

<mosaic_0001>
module attributes {stable_mosaic.version = 11 : i64} {
  func.func @_two_stream_kernel(%arg0: i32, %arg1: memref<16x2560xbf16, #tpu.memory_space<vmem>>, %arg2: memref<16x768xbf16, #tpu.memory_space<vmem>>, %arg3: memref<2560x512xbf16, #tpu.memory_space<vmem>>, %arg4: memref<768x512xbf16, #tpu.memory_space<vmem>>, %arg5: memref<512x128xbf16, #tpu.memory_space<vmem>>, %arg6: memref<512x128xbf16, #tpu.memory_space<vmem>>, %arg7: memref<1x128xf32, #tpu.memory_space<vmem>>, %arg8: memref<16x128xf32, #tpu.memory_space<vmem>>) attributes {dimension_semantics = [#tpu.dimension_semantics<parallel>], iteration_bounds = array<i64: 1>, scalar_prefetch = 0 : i64, scratch_operands = 0 : i64, tpu.core_type = #tpu.core_type<tc>, window_params = [{transform_indices = @transform_0, window_bounds = array<i64: 16, 2560>}, {transform_indices = @transform_1, window_bounds = array<i64: 16, 768>}, {pipeline_mode = #tpu.pipeline_mode<synchronous>, transform_indices = @transform_2, window_bounds = array<i64: 2560, 512>}, {pipeline_mode = #tpu.pipeline_mode<synchronous>, transform_indices = @transform_3, window_bounds = array<i64: 768, 512>}, {pipeline_mode = #tpu.pipeline_mode<synchronous>, transform_indices = @transform_4, window_bounds = array<i64: 512, 128>}, {pipeline_mode = #tpu.pipeline_mode<synchronous>, transform_indices = @transform_5, window_bounds = array<i64: 512, 128>}, {pipeline_mode = #tpu.pipeline_mode<synchronous>, transform_indices = @transform_6, window_bounds = array<i64: 1, 128>}, {transform_indices = @transform_7, window_bounds = array<i64: 16, 128>}]} {
    %c0 = arith.constant 0 : index
    %c0_0 = arith.constant 0 : index
    %0 = vector.load %arg1[%c0, %c0_0] : memref<16x2560xbf16, #tpu.memory_space<vmem>>, vector<16x2560xbf16>
    %c0_1 = arith.constant 0 : index
    %c0_2 = arith.constant 0 : index
    %1 = vector.load %arg3[%c0_1, %c0_2] : memref<2560x512xbf16, #tpu.memory_space<vmem>>, vector<2560x512xbf16>
    %cst = arith.constant dense<0.000000e+00> : vector<16x512xf32>
    %2 = tpu.matmul %0, %1, %cst {dimension_numbers = #tpu.dot_dimension_numbers<[1], [0], [0], [1], [0, 0, 1, 1], [], []>} : vector<16x2560xbf16>, vector<2560x512xbf16>, vector<16x512xf32> -> vector<16x512xf32>
    %c0_3 = arith.constant 0 : index
    %c0_4 = arith.constant 0 : index
    %3 = vector.load %arg2[%c0_3, %c0_4] : memref<16x768xbf16, #tpu.memory_space<vmem>>, vector<16x768xbf16>
    %c0_5 = arith.constant 0 : index
    %c0_6 = arith.constant 0 : index
    %4 = vector.load %arg4[%c0_5, %c0_6] : memref<768x512xbf16, #tpu.memory_space<vmem>>, vector<768x512xbf16>
    %cst_7 = arith.constant dense<0.000000e+00> : vector<16x512xf32>
    %5 = tpu.matmul %3, %4, %cst_7 {dimension_numbers = #tpu.dot_dimension_numbers<[1], [0], [0], [1], [0, 0, 1, 1], [], []>} : vector<16x768xbf16>, vector<768x512xbf16>, vector<16x512xf32> -> vector<16x512xf32>
    %6 = arith.truncf %2 : vector<16x512xf32> to vector<16x512xbf16>
    %c0_8 = arith.constant 0 : index
    %c0_9 = arith.constant 0 : index
    %7 = vector.load %arg5[%c0_8, %c0_9] : memref<512x128xbf16, #tpu.memory_space<vmem>>, vector<512x128xbf16>
    %cst_10 = arith.constant dense<0.000000e+00> : vector<16x128xf32>
    %8 = tpu.matmul %6, %7, %cst_10 {dimension_numbers = #tpu.dot_dimension_numbers<[1], [0], [0], [1], [0, 0, 1, 1], [], []>} : vector<16x512xbf16>, vector<512x128xbf16>, vector<16x128xf32> -> vector<16x128xf32>
    %9 = arith.truncf %5 : vector<16x512xf32> to vector<16x512xbf16>
    %c0_11 = arith.constant 0 : index
    %c0_12 = arith.constant 0 : index
    %10 = vector.load %arg6[%c0_11, %c0_12] : memref<512x128xbf16, #tpu.memory_space<vmem>>, vector<512x128xbf16>
    %cst_13 = arith.constant dense<0.000000e+00> : vector<16x128xf32>
    %11 = tpu.matmul %9, %10, %cst_13 {dimension_numbers = #tpu.dot_dimension_numbers<[1], [0], [0], [1], [0, 0, 1, 1], [], []>} : vector<16x512xbf16>, vector<512x128xbf16>, vector<16x128xf32> -> vector<16x128xf32>
    %12 = arith.addf %8, %11 : vector<16x128xf32>
    %c0_14 = arith.constant 0 : index
    %c0_15 = arith.constant 0 : index
    %13 = vector.load %arg7[%c0_14, %c0_15] : memref<1x128xf32, #tpu.memory_space<vmem>>, vector<1x128xf32>
    %14 = vector.broadcast %13 : vector<1x128xf32> to vector<16x128xf32>
    %15 = arith.addf %12, %14 : vector<16x128xf32>
    %c0_16 = arith.constant 0 : index
    %c0_17 = arith.constant 0 : index
    %16 = vector.load %arg8[%c0_16, %c0_17] : memref<16x128xf32, #tpu.memory_space<vmem>>, vector<16x128xf32>
    tpu.vector_store %arg8[%c0_16, %c0_17], %15 {strides = array<i32>} : memref<16x128xf32, #tpu.memory_space<vmem>>, vector<16x128xf32>,
    return
  }
  func.func @transform_0(%arg0: i32) -> (i32, i32) {
    %c0_i32 = arith.constant 0 : i32
    %c0_i32_0 = arith.constant 0 : i32
    return %arg0, %c0_i32 : i32, i32
  }
  func.func @transform_1(%arg0: i32) -> (i32, i32) {
    %c0_i32 = arith.constant 0 : i32
    %c0_i32_0 = arith.constant 0 : i32
    return %arg0, %c0_i32 : i32, i32
  }
  func.func @transform_2(%arg0: i32) -> (i32, i32) {
    %c0_i32 = arith.constant 0 : i32
    %c0_i32_0 = arith.constant 0 : i32
    %c0_i32_1 = arith.constant 0 : i32
    return %c0_i32, %c0_i32_0 : i32, i32
  }
  func.func @transform_3(%arg0: i32) -> (i32, i32) {
    %c0_i32 = arith.constant 0 : i32
    %c0_i32_0 = arith.constant 0 : i32
    %c0_i32_1 = arith.constant 0 : i32
    return %c0_i32, %c0_i32_0 : i32, i32
  }
  func.func @transform_4(%arg0: i32) -> (i32, i32) {
    %c0_i32 = arith.constant 0 : i32
    %c0_i32_0 = arith.constant 0 : i32
    %c0_i32_1 = arith.constant 0 : i32
    return %c0_i32, %c0_i32_0 : i32, i32
  }
  func.func @transform_5(%arg0: i32) -> (i32, i32) {
    %c0_i32 = arith.constant 0 : i32
    %c0_i32_0 = arith.constant 0 : i32
    %c0_i32_1 = arith.constant 0 : i32
    return %c0_i32, %c0_i32_0 : i32, i32
  }
  func.func @transform_6(%arg0: i32) -> (i32, i32) {
    %c0_i32 = arith.constant 0 : i32
    %c0_i32_0 = arith.constant 0 : i32
    %c0_i32_1 = arith.constant 0 : i32
    return %c0_i32, %c0_i32_0 : i32, i32
  }
  func.func @transform_7(%arg0: i32) -> (i32, i32) {
    %c0_i32 = arith.constant 0 : i32
    %c0_i32_0 = arith.constant 0 : i32
    return %arg0, %c0_i32 : i32, i32
  }
}

</mosaic_0001>

<llo_original>
// kernel: tpu_custom_call.1
$region0: #{tpu_custom_call.1}
  #allocation0 [shape = 'u32[]', space=smem, size = 0x4, offset = 0x4, fixed_abs, tag = 'smem constant byte address 0x4 - core index']
  #allocation1 [shape = 'u32[72,128]{1,0:T(1,128)}', space=vmem, size = 0x9000, scoped, tag = 'internal scratch']
  %s0 = inlined_call_operand.hbm [shape: bf16[16,2560], index: 0, kind: input, shape index: {}]
  %s1 = inlined_call_operand.hbm [shape: bf16[16,768], index: 1, kind: input, shape index: {}]
  %s2 = inlined_call_operand.hbm [shape: bf16[2560,512], index: 2, kind: input, shape index: {}]
  %s3 = inlined_call_operand.hbm [shape: bf16[768,512], index: 3, kind: input, shape index: {}]
  %s4 = inlined_call_operand.hbm [shape: bf16[512,128], index: 4, kind: input, shape index: {}]
  %s5 = inlined_call_operand.hbm [shape: bf16[512,128], index: 5, kind: input, shape index: {}]
  %s6 = inlined_call_operand.hbm [shape: f32[1,128], index: 6, kind: input, shape index: {}]
  %s7 = inlined_call_operand.hbm [shape: f32[16,128], index: 7, kind: output, shape index: {}]
  %s8 = sld [smem:[#allocation0]]
  $region66: #{tpu_custom_call.1} parent=0
    _
  %s10 = ssub.s32 1, %s8
  %s11 = scalar_select 0, %s10, %s8
  $region1: #{tpu_custom_call.1} parent=0
    #allocation2 [shape = 'u8[81920]{0}', space=vmem, size = 0x14000, scoped, tag = 'input window, operand 0, single buffered']
    #allocation3 [shape = 's32[1]{0}', space=sflag, size = 0x4, scoped, tag = 'scoped memory for tpu_custom_call.1']
    #allocation4 [shape = 's32[1]{0}', space=sflag, size = 0x4, scoped, tag = 'scoped memory for tpu_custom_call.1']
    #allocation5 [shape = 'u8[24576]{0}', space=vmem, size = 0x6000, scoped, tag = 'input window, operand 1, single buffered']
    #allocation6 [shape = 's32[1]{0}', space=sflag, size = 0x4, scoped, tag = 'scoped memory for tpu_custom_call.1']
    #allocation7 [shape = 'u8[2621440]{0}', space=vmem, size = 0x280000, scoped, tag = 'input window, operand 2, single buffered']
    #allocation8 [shape = 'u8[786432]{0}', space=vmem, size = 0xc0000, scoped, tag = 'input window, operand 3, single buffered']
    #allocation9 [shape = 's32[1]{0}', space=sflag, size = 0x4, scoped, tag = 'scoped memory for tpu_custom_call.1']
    #allocation10 [shape = 'u8[131072]{0}', space=vmem, size = 0x20000, scoped, tag = 'input window, operand 4, single buffered']
    #allocation11 [shape = 'u8[131072]{0}', space=vmem, size = 0x20000, scoped, tag = 'input window, operand 5, single buffered']
    #allocation12 [shape = 's32[1]{0}', space=sflag, size = 0x4, scoped, tag = 'scoped memory for tpu_custom_call.1']
    #allocation13 [shape = 'u8[512]{0}', space=vmem, size = 0x400, scoped, tag = 'input window, operand 6, single buffered']
    #allocation14 [shape = 'u8[8192]{0}', space=vmem, size = 0x2000, scoped, tag = 'output window, operand 0, single buffered']
    %12 = vsyncpa [#allocation3], 0
    %13 = vsyncpa [#allocation6], 0
    %14 = vsyncpa [#allocation9], 0
    %15 = vsyncpa [#allocation12], 0
    %16 = vsyncpa [#allocation4], 0
    // Predicated region
    $region2: #{tpu_custom_call.1} parent=1 // pred_check
      _
    $region3: #{tpu_custom_call.1} parent=1 // pred_check_branch
      %18 = sbr.rel (0) target = $region5
    $region4: #{tpu_custom_call.1} parent=1 // pred_region
      %20 = vsyncadd [#allocation3], 0
      %s21 = sshll.u32 %s0, 4
      %s22 = int_to_ptr.hbm [resolvable:$true] %s21
      %s23 = sshll.u32 [#allocation2], 4
      %s24 = int_to_ptr.vmem [resolvable:$true] %s23
      %29 = dma.hbm_to_vmem [thread:$0]  %s22, 2560, %s24, [#allocation3], 1280, 1280, 80
    $region5: #{tpu_custom_call.1} parent=1 // pred_fallthru
      _
    // Predicated region
    $region6: #{tpu_custom_call.1} parent=1 // pred_check
      _
    $region7: #{tpu_custom_call.1} parent=1 // pred_check_branch
      %31 = sbr.rel (0) target = $region9
    $region8: #{tpu_custom_call.1} parent=1 // pred_region
      %33 = vsyncadd [#allocation6], 0
      %s34 = sshll.u32 %s1, 4
      %s35 = int_to_ptr.hbm [resolvable:$true] %s34
      %s36 = sshll.u32 [#allocation5], 4
      %s37 = int_to_ptr.vmem [resolvable:$true] %s36
      %42 = dma.hbm_to_vmem [thread:$0]  %s35, 768, %s37, [#allocation6], 384, 384, 24
    $region9: #{tpu_custom_call.1} parent=1 // pred_fallthru
      _
    // Predicated region
    $region10: #{tpu_custom_call.1} parent=1 // pred_check
      _
    $region11: #{tpu_custom_call.1} parent=1 // pred_check_branch
      %44 = sbr.rel (0) target = $region13
    $region12: #{tpu_custom_call.1} parent=1 // pred_region
      %46 = vsyncadd [#allocation6], 0
      %s47 = sshll.u32 %s2, 4
      %s48 = int_to_ptr.hbm [resolvable:$true] %s47
      %s49 = sshll.u32 [#allocation7], 4
      %s50 = int_to_ptr.vmem [resolvable:$true] %s49
      %55 = dma.hbm_to_vmem [thread:$0]  %s48, 81920, %s50, [#allocation6], 256, 256, 16
    $region13: #{tpu_custom_call.1} parent=1 // pred_fallthru
      _
    // Predicated region
    $region14: #{tpu_custom_call.1} parent=1 // pred_check
      _
    $region15: #{tpu_custom_call.1} parent=1 // pred_check_branch
      %57 = sbr.rel (0) target = $region17
    $region16: #{tpu_custom_call.1} parent=1 // pred_region
      %59 = vsyncadd [#allocation9], 0
      %s60 = sshll.u32 %s3, 4
      %s61 = int_to_ptr.hbm [resolvable:$true] %s60
      %s62 = sshll.u32 [#allocation8], 4
      %s63 = int_to_ptr.vmem [resolvable:$true] %s62
      %68 = dma.hbm_to_vmem [thread:$0]  %s61, 24576, %s63, [#allocation9], 256, 256, 16
    $region17: #{tpu_custom_call.1} parent=1 // pred_fallthru
      _
    // Predicated region
    $region18: #{tpu_custom_call.1} parent=1 // pred_check
      _
    $region19: #{tpu_custom_call.1} parent=1 // pred_check_branch
      %70 = sbr.rel (0) target = $region21
    $region20: #{tpu_custom_call.1} parent=1 // pred_region
      %72 = vsyncadd [#allocation9], 0
      %s73 = sshll.u32 %s4, 4
      %s74 = int_to_ptr.hbm [resolvable:$true] %s73
      %s75 = sshll.u32 [#allocation10], 4
      %s76 = int_to_ptr.vmem [resolvable:$true] %s75
      %81 = dma.hbm_to_vmem [thread:$0]  %s74, 4096, %s76, [#allocation9], 64, 64, 4
    $region21: #{tpu_custom_call.1} parent=1 // pred_fallthru
      _
    // Predicated region
    $region22: #{tpu_custom_call.1} parent=1 // pred_check
      _
    $region23: #{tpu_custom_call.1} parent=1 // pred_check_branch
      %83 = sbr.rel (0) target = $region25
    $region24: #{tpu_custom_call.1} parent=1 // pred_region
      %85 = vsyncadd [#allocation12], 0
      %s86 = sshll.u32 %s5, 4
      %s87 = int_to_ptr.hbm [resolvable:$true] %s86
      %s88 = sshll.u32 [#allocation11], 4
      %s89 = int_to_ptr.vmem [resolvable:$true] %s88
      %94 = dma.hbm_to_vmem [thread:$0]  %s87, 4096, %s89, [#allocation12], 64, 64, 4
    $region25: #{tpu_custom_call.1} parent=1 // pred_fallthru
      _
    // Predicated region
    $region26: #{tpu_custom_call.1} parent=1 // pred_check
      _
    $region27: #{tpu_custom_call.1} parent=1 // pred_check_branch
      %96 = sbr.rel (0) target = $region29
    $region28: #{tpu_custom_call.1} parent=1 // pred_region
      %98 = vsyncadd [#allocation12], 0
      %s100 = sshll.u32 %s6, 4
      %s101 = int_to_ptr.hbm [resolvable:$true] %s100
      %s102 = sshll.u32 [#allocation13], 4
      %s103 = int_to_ptr.vmem [resolvable:$true] %s102
      %105 = dma.hbm_to_vmem [thread:$0]  %s101, 16, %s103, [#allocation12]
    $region29: #{tpu_custom_call.1} parent=1 // pred_fallthru
      _
    // Predicated region
    $region30: #{tpu_custom_call.1} parent=1 // pred_check
      _
    $region31: #{tpu_custom_call.1} parent=1 // pred_check_branch
      %107 = sbr.rel (0) target = $region33
    $region32: #{tpu_custom_call.1} parent=1 // pred_region
      %109 = dma.done [#allocation3], 2560
    $region33: #{tpu_custom_call.1} parent=1 // pred_fallthru
      _
    // Predicated region
    $region34: #{tpu_custom_call.1} parent=1 // pred_check
      _
    $region35: #{tpu_custom_call.1} parent=1 // pred_check_branch
      %111 = sbr.rel (0) target = $region37
    $region36: #{tpu_custom_call.1} parent=1 // pred_region
      %113 = dma.done [#allocation6], 768
    $region37: #{tpu_custom_call.1} parent=1 // pred_fallthru
      _
    // Predicated region
    $region38: #{tpu_custom_call.1} parent=1 // pred_check
      _
    $region39: #{tpu_custom_call.1} parent=1 // pred_check_branch
      %115 = sbr.rel (0) target = $region41
    $region40: #{tpu_custom_call.1} parent=1 // pred_region
      %117 = dma.done [#allocation6], 81920
    $region41: #{tpu_custom_call.1} parent=1 // pred_fallthru
      _
    // Predicated region
    $region42: #{tpu_custom_call.1} parent=1 // pred_check
      _
    $region43: #{tpu_custom_call.1} parent=1 // pred_check_branch
      %119 = sbr.rel (0) target = $region45
    $region44: #{tpu_custom_call.1} parent=1 // pred_region
      %121 = dma.done [#allocation9], 24576
    $region45: #{tpu_custom_call.1} parent=1 // pred_fallthru
      _
    // Predicated region
    $region46: #{tpu_custom_call.1} parent=1 // pred_check
      _
    $region47: #{tpu_custom_call.1} parent=1 // pred_check_branch
      %123 = sbr.rel (0) target = $region49
    $region48: #{tpu_custom_call.1} parent=1 // pred_region
      %125 = dma.done [#allocation9], 4096
    $region49: #{tpu_custom_call.1} parent=1 // pred_fallthru
      _
    // Predicated region
    $region50: #{tpu_custom_call.1} parent=1 // pred_check
      _
    $region51: #{tpu_custom_call.1} parent=1 // pred_check_branch
      %127 = sbr.rel (0) target = $region53
    $region52: #{tpu_custom_call.1} parent=1 // pred_region
      %129 = dma.done [#allocation12], 4096
    $region53: #{tpu_custom_call.1} parent=1 // pred_fallthru
      _
    // Predicated region
    $region54: #{tpu_custom_call.1} parent=1 // pred_check
      _
    $region55: #{tpu_custom_call.1} parent=1 // pred_check_branch
      %131 = sbr.rel (0) target = $region57
    $region56: #{tpu_custom_call.1} parent=1 // pred_region
      %133 = dma.done [#allocation12], 16
    $region57: #{tpu_custom_call.1} parent=1 // pred_fallthru
      _
    %v134 = vld [vmem:[#allocation2] sm:$0xff]
    %v135 = vld [vmem:[#allocation2 + $0x8] sm:$0xff]
    %v136 = vld [vmem:[#allocation2 + $0x10] sm:$0xff]
    %v137 = vld [vmem:[#allocation2 + $0x18] sm:$0xff]
    %v138 = vld [vmem:[#allocation2 + $0x20] sm:$0xff]
    %v139 = vld [vmem:[#allocation2 + $0x28] sm:$0xff]
    %v140 = vld [vmem:[#allocation2 + $0x30] sm:$0xff]
    %v141 = vld [vmem:[#allocation2 + $0x38] sm:$0xff]
    %v142 = vld [vmem:[#allocation2 + $0x40] sm:$0xff]
    %v143 = vld [vmem:[#allocation2 + $0x48] sm:$0xff]
    %v144 = vld [vmem:[#allocation2 + $0x50] sm:$0xff]
    %v145 = vld [vmem:[#allocation2 + $0x58] sm:$0xff]
    %v146 = vld [vmem:[#allocation2 + $0x60] sm:$0xff]
    %v147 = vld [vmem:[#allocation2 + $0x68] sm:$0xff]
    %v148 = vld [vmem:[#allocation2 + $0x70] sm:$0xff]
    %v149 = vld [vmem:[#allocation2 + $0x78] sm:$0xff]
    %v150 = vld [vmem:[#allocation2 + $0x80] sm:$0xff]
    %v151 = vld [vmem:[#allocation2 + $0x88] sm:$0xff]
    %v152 = vld [vmem:[#allocation2 + $0x90] sm:$0xff]
    %v153 = vld [vmem:[#allocation2 + $0x98] sm:$0xff]
    %v154 = vld [vmem:[#allocation7] sm:$0xff]
    %v155 = vld [vmem:[#allocation7 + $0x8] sm:$0xff]
    %v156 = vld [vmem:[#allocation7 + $0x10] sm:$0xff]
    %v157 = vld [vmem:[#allocation7 + $0x18] sm:$0xff]
    %v158 = vld [vmem:[#allocation7 + $0x20] sm:$0xff]
    %v159 = vld [vmem:[#allocation7 + $0x28] sm:$0xff]
    %v160 = vld [vmem:[#allocation7 + $0x30] sm:$0xff]
    %v161 = vld [vmem:[#allocation7 + $0x38] sm:$0xff]
    %v162 = vld [vmem:[#allocation7 + $0x40] sm:$0xff]
    %v163 = vld [vmem:[#allocation7 + $0x48] sm:$0xff]
    %v164 = vld [vmem:[#allocation7 + $0x50] sm:$0xff]
    %v165 = vld [vmem:[#allocation7 + $0x58] sm:$0xff]
    %v166 = vld [vmem:[#allocation7 + $0x60] sm:$0xff]
    %v167 = vld [vmem:[#allocation7 + $0x68] sm:$0xff]
    %v168 = vld [vmem:[#allocation7 + $0x70] sm:$0xff]
    %v169 = vld [vmem:[#allocation7 + $0x78] sm:$0xff]
    %v170 = vld [vmem:[#allocation7 + $0x80] sm:$0xff]
    %v171 = vld [vmem:[#allocation7 + $0x88] sm:$0xff]
    %v172 = vld [vmem:[#allocation7 + $0x90] sm:$0xff]
    %v173 = vld [vmem:[#allocation7 + $0x98] sm:$0xff]
    %v174 = vld [vmem:[#allocation7 + $0xa0] sm:$0xff]
    %v175 = vld [vmem:[#allocation7 + $0xa8] sm:$0xff]
    %v176 = vld [vmem:[#allocation7 + $0xb0] sm:$0xff]
    %v177 = vld [vmem:[#allocation7 + $0xb8] sm:$0xff]
    %v178 = vld [vmem:[#allocation7 + $0xc0] sm:$0xff]
    %v179 = vld [vmem:[#allocation7 + $0xc8] sm:$0xff]
    %v180 = vld [vmem:[#allocation7 + $0xd0] sm:$0xff]
    %v181 = vld [vmem:[#allocation7 + $0xd8] sm:$0xff]
    %v182 = vld [vmem:[#allocation7 + $0xe0] sm:$0xff]
    %v183 = vld [vmem:[#allocation7 + $0xe8] sm:$0xff]
    %v184 = vld [vmem:[#allocation7 + $0xf0] sm:$0xff]
    %v185 = vld [vmem:[#allocation7 + $0xf8] sm:$0xff]
    %v186 = vld [vmem:[#allocation7 + $0x100] sm:$0xff]
    %v187 = vld [vmem:[#allocation7 + $0x108] sm:$0xff]
    %v188 = vld [vmem:[#allocation7 + $0x110] sm:$0xff]
    %v189 = vld [vmem:[#allocation7 + $0x118] sm:$0xff]
    %v190 = vld [vmem:[#allocation7 + $0x120] sm:$0xff]
    %v191 = vld [vmem:[#allocation7 + $0x128] sm:$0xff]
    %v192 = vld [vmem:[#allocation7 + $0x130] sm:$0xff]
    %v193 = vld [vmem:[#allocation7 + $0x138] sm:$0xff]
    %v194 = vld [vmem:[#allocation7 + $0x140] sm:$0xff]
    %v195 = vld [vmem:[#allocation7 + $0x148] sm:$0xff]
    %v196 = vld [vmem:[#allocation7 + $0x150] sm:$0xff]
    %v197 = vld [vmem:[#allocation7 + $0x158] sm:$0xff]
    %v198 = vld [vmem:[#allocation7 + $0x160] sm:$0xff]
    %v199 = vld [vmem:[#allocation7 + $0x168] sm:$0xff]
    %v200 = vld [vmem:[#allocation7 + $0x170] sm:$0xff]
    %v201 = vld [vmem:[#allocation7 + $0x178] sm:$0xff]
    %v202 = vld [vmem:[#allocation7 + $0x180] sm:$0xff]
    %v203 = vld [vmem:[#allocation7 + $0x188] sm:$0xff]
    %v204 = vld [vmem:[#allocation7 + $0x190] sm:$0xff]
    %v205 = vld [vmem:[#allocation7 + $0x198] sm:$0xff]
    %v206 = vld [vmem:[#allocation7 + $0x1a0] sm:$0xff]
    %v207 = vld [vmem:[#allocation7 + $0x1a8] sm:$0xff]
    %v208 = vld [vmem:[#allocation7 + $0x1b0] sm:$0xff]
    %v209 = vld [vmem:[#allocation7 + $0x1b8] sm:$0xff]
    %v210 = vld [vmem:[#allocation7 + $0x1c0] sm:$0xff]
    %v211 = vld [vmem:[#allocation7 + $0x1c8] sm:$0xff]
    %v212 = vld [vmem:[#allocation7 + $0x1d0] sm:$0xff]
    %v213 = vld [vmem:[#allocation7 + $0x1d8] sm:$0xff]
    %v214 = vld [vmem:[#allocation7 + $0x1e0] sm:$0xff]
    %v215 = vld [vmem:[#allocation7 + $0x1e8] sm:$0xff]
    %v216 = vld [vmem:[#allocation7 + $0x1f0] sm:$0xff]
    %v217 = vld [vmem:[#allocation7 + $0x1f8] sm:$0xff]
    %v218 = vld [vmem:[#allocation7 + $0x200] sm:$0xff]
    %v219 = vld [vmem:[#allocation7 + $0x208] sm:$0xff]
    %v220 = vld [vmem:[#allocation7 + $0x210] sm:$0xff]
    %v221 = vld [vmem:[#allocation7 + $0x218] sm:$0xff]
    %v222 = vld [vmem:[#allocation7 + $0x220] sm:$0xff]
    %v223 = vld [vmem:[#allocation7 + $0x228] sm:$0xff]
    %v224 = vld [vmem:[#allocation7 + $0x230] sm:$0xff]
    %v225 = vld [vmem:[#allocation7 + $0x238] sm:$0xff]
    %v226 = vld [vmem:[#allocation7 + $0x240] sm:$0xff]
    %v227 = vld [vmem:[#allocation7 + $0x248] sm:$0xff]
    %v228 = vld [vmem:[#allocation7 + $0x250] sm:$0xff]
    %v229 = vld [vmem:[#allocation7 + $0x258] sm:$0xff]
    %v230 = vld [vmem:[#allocation7 + $0x260] sm:$0xff]
    %v231 = vld [vmem:[#allocation7 + $0x268] sm:$0xff]
    %v232 = vld [vmem:[#allocation7 + $0x270] sm:$0xff]
    %v233 = vld [vmem:[#allocation7 + $0x278] sm:$0xff]
    %v234 = vld [vmem:[#allocation7 + $0x280] sm:$0xff]
    %v235 = vld [vmem:[#allocation7 + $0x288] sm:$0xff]
    %v236 = vld [vmem:[#allocation7 + $0x290] sm:$0xff]
    %v237 = vld [vmem:[#allocation7 + $0x298] sm:$0xff]
    %v238 = vld [vmem:[#allocation7 + $0x2a0] sm:$0xff]
    %v239 = vld [vmem:[#allocation7 + $0x2a8] sm:$0xff]
    %v240 = vld [vmem:[#allocation7 + $0x2b0] sm:$0xff]
    %v241 = vld [vmem:[#allocation7 + $0x2b8] sm:$0xff]
    %v242 = vld [vmem:[#allocation7 + $0x2c0] sm:$0xff]
    %v243 = vld [vmem:[#allocation7 + $0x2c8] sm:$0xff]
    %v244 = vld [vmem:[#allocation7 + $0x2d0] sm:$0xff]
    %v245 = vld [vmem:[#allocation7 + $0x2d8] sm:$0xff]
    %v246 = vld [vmem:[#allocation7 + $0x2e0] sm:$0xff]
    %v247 = vld [vmem:[#allocation7 + $0x2e8] sm:$0xff]
    %v248 = vld [vmem:[#allocation7 + $0x2f0] sm:$0xff]
    %v249 = vld [vmem:[#allocation7 + $0x2f8] sm:$0xff]
    %v250 = vld [vmem:[#allocation7 + $0x300] sm:$0xff]
    %v251 = vld [vmem:[#allocation7 + $0x308] sm:$0xff]
    %v252 = vld [vmem:[#allocation7 + $0x310] sm:$0xff]
    %v253 = vld [vmem:[#allocation7 + $0x318] sm:$0xff]
    %v254 = vld [vmem:[#allocation7 + $0x320] sm:$0xff]
    %v255 = vld [vmem:[#allocation7 + $0x328] sm:$0xff]
    %v256 = vld [vmem:[#allocation7 + $0x330] sm:$0xff]
    %v257 = vld [vmem:[#allocation7 + $0x338] sm:$0xff]
    %v258 = vld [vmem:[#allocation7 + $0x340] sm:$0xff]
    %v259 = vld [vmem:[#allocation7 + $0x348] sm:$0xff]
    %v260 = vld [vmem:[#allocation7 + $0x350] sm:$0xff]
    %v261 = vld [vmem:[#allocation7 + $0x358] sm:$0xff]
    %v262 = vld [vmem:[#allocation7 + $0x360] sm:$0xff]
    %v263 = vld [vmem:[#allocation7 + $0x368] sm:$0xff]
    %v264 = vld [vmem:[#allocation7 + $0x370] sm:$0xff]
    %v265 = vld [vmem:[#allocation7 + $0x378] sm:$0xff]
    %v266 = vld [vmem:[#allocation7 + $0x380] sm:$0xff]
    %v267 = vld [vmem:[#allocation7 + $0x388] sm:$0xff]
    %v268 = vld [vmem:[#allocation7 + $0x390] sm:$0xff]
    %v269 = vld [vmem:[#allocation7 + $0x398] sm:$0xff]
    %v270 = vld [vmem:[#allocation7 + $0x3a0] sm:$0xff]
    %v271 = vld [vmem:[#allocation7 + $0x3a8] sm:$0xff]
    %v272 = vld [vmem:[#allocation7 + $0x3b0] sm:$0xff]
    %v273 = vld [vmem:[#allocation7 + $0x3b8] sm:$0xff]
    %v274 = vld [vmem:[#allocation7 + $0x3c0] sm:$0xff]
    %v275 = vld [vmem:[#allocation7 + $0x3c8] sm:$0xff]
    %v276 = vld [vmem:[#allocation7 + $0x3d0] sm:$0xff]
    %v277 = vld [vmem:[#allocation7 + $0x3d8] sm:$0xff]
    %v278 = vld [vmem:[#allocation7 + $0x3e0] sm:$0xff]
    %v279 = vld [vmem:[#allocation7 + $0x3e8] sm:$0xff]
    %v280 = vld [vmem:[#allocation7 + $0x3f0] sm:$0xff]
    %v281 = vld [vmem:[#allocation7 + $0x3f8] sm:$0xff]
    %v282 = vld [vmem:[#allocation7 + $0x400] sm:$0xff]
    %v283 = vld [vmem:[#allocation7 + $0x408] sm:$0xff]
    %v284 = vld [vmem:[#allocation7 + $0x410] sm:$0xff]
    %v285 = vld [vmem:[#allocation7 + $0x418] sm:$0xff]
    %v286 = vld [vmem:[#allocation7 + $0x420] sm:$0xff]
    %v287 = vld [vmem:[#allocation7 + $0x428] sm:$0xff]
    %v288 = vld [vmem:[#allocation7 + $0x430] sm:$0xff]
    %v289 = vld [vmem:[#allocation7 + $0x438] sm:$0xff]
    %v290 = vld [vmem:[#allocation7 + $0x440] sm:$0xff]
    %v291 = vld [vmem:[#allocation7 + $0x448] sm:$0xff]
    %v292 = vld [vmem:[#allocation7 + $0x450] sm:$0xff]
    %v293 = vld [vmem:[#allocation7 + $0x458] sm:$0xff]
    %v294 = vld [vmem:[#allocation7 + $0x460] sm:$0xff]
    %v295 = vld [vmem:[#allocation7 + $0x468] sm:$0xff]
    %v296 = vld [vmem:[#allocation7 + $0x470] sm:$0xff]
    %v297 = vld [vmem:[#allocation7 + $0x478] sm:$0xff]
    %v298 = vld [vmem:[#allocation7 + $0x480] sm:$0xff]
    %v299 = vld [vmem:[#allocation7 + $0x488] sm:$0xff]
    %v300 = vld [vmem:[#allocation7 + $0x490] sm:$0xff]
    %v301 = vld [vmem:[#allocation7 + $0x498] sm:$0xff]
    %v302 = vld [vmem:[#allocation7 + $0x4a0] sm:$0xff]
    %v303 = vld [vmem:[#allocation7 + $0x4a8] sm:$0xff]
    %v304 = vld [vmem:[#allocation7 + $0x4b0] sm:$0xff]
    %v305 = vld [vmem:[#allocation7 + $0x4b8] sm:$0xff]
    %v306 = vld [vmem:[#allocation7 + $0x4c0] sm:$0xff]
    %v307 = vld [vmem:[#allocation7 + $0x4c8] sm:$0xff]
    %v308 = vld [vmem:[#allocation7 + $0x4d0] sm:$0xff]
    %v309 = vld [vmem:[#allocation7 + $0x4d8] sm:$0xff]
    %v310 = vld [vmem:[#allocation7 + $0x4e0] sm:$0xff]
    %v311 = vld [vmem:[#allocation7 + $0x4e8] sm:$0xff]
    %v312 = vld [vmem:[#allocation7 + $0x4f0] sm:$0xff]
    %v313 = vld [vmem:[#allocation7 + $0x4f8] sm:$0xff]
    %v314 = vld [vmem:[#allocation7 + $0x500] sm:$0xff]
    %v315 = vld [vmem:[#allocation7 + $0x508] sm:$0xff]
    %v316 = vld [vmem:[#allocation7 + $0x510] sm:$0xff]
    %v317 = vld [vmem:[#allocation7 + $0x518] sm:$0xff]
    %v318 = vld [vmem:[#allocation7 + $0x520] sm:$0xff]
    %v319 = vld [vmem:[#allocation7 + $0x528] sm:$0xff]
    %v320 = vld [vmem:[#allocation7 + $0x530] sm:$0xff]
    %v321 = vld [vmem:[#allocation7 + $0x538] sm:$0xff]
    %v322 = vld [vmem:[#allocation7 + $0x540] sm:$0xff]
    %v323 = vld [vmem:[#allocation7 + $0x548] sm:$0xff]
    %v324 = vld [vmem:[#allocation7 + $0x550] sm:$0xff]
    %v325 = vld [vmem:[#allocation7 + $0x558] sm:$0xff]
    %v326 = vld [vmem:[#allocation7 + $0x560] sm:$0xff]
    %v327 = vld [vmem:[#allocation7 + $0x568] sm:$0xff]
    %v328 = vld [vmem:[#allocation7 + $0x570] sm:$0xff]
    %v329 = vld [vmem:[#allocation7 + $0x578] sm:$0xff]
    %v330 = vld [vmem:[#allocation7 + $0x580] sm:$0xff]
    %v331 = vld [vmem:[#allocation7 + $0x588] sm:$0xff]
    %v332 = vld [vmem:[#allocation7 + $0x590] sm:$0xff]
    %v333 = vld [vmem:[#allocation7 + $0x598] sm:$0xff]
    %v334 = vld [vmem:[#allocation7 + $0x5a0] sm:$0xff]
    %v335 = vld [vmem:[#allocation7 + $0x5a8] sm:$0xff]
    %v336 = vld [vmem:[#allocation7 + $0x5b0] sm:$0xff]
    %v337 = vld [vmem:[#allocation7 + $0x5b8] sm:$0xff]
    %v338 = vld [vmem:[#allocation7 + $0x5c0] sm:$0xff]
    %v339 = vld [vmem:[#allocation7 + $0x5c8] sm:$0xff]
    %v340 = vld [vmem:[#allocation7 + $0x5d0] sm:$0xff]
    %v341 = vld [vmem:[#allocation7 + $0x5d8] sm:$0xff]
    %v342 = vld [vmem:[#allocation7 + $0x5e0] sm:$0xff]
    %v343 = vld [vmem:[#allocation7 + $0x5e8] sm:$0xff]
    %v344 = vld [vmem:[#allocation7 + $0x5f0] sm:$0xff]
    %v345 = vld [vmem:[#allocation7 + $0x5f8] sm:$0xff]
    %v346 = vld [vmem:[#allocation7 + $0x600] sm:$0xff]
    %v347 = vld [vmem:[#allocation7 + $0x608] sm:$0xff]
    %v348 = vld [vmem:[#allocation7 + $0x610] sm:$0xff]
    %v349 = vld [vmem:[#allocation7 + $0x618] sm:$0xff]
    %v350 = vld [vmem:[#allocation7 + $0x620] sm:$0xff]
    %v351 = vld [vmem:[#allocation7 + $0x628] sm:$0xff]
    %v352 = vld [vmem:[#allocation7 + $0x630] sm:$0xff]
    %v353 = vld [vmem:[#allocation7 + $0x638] sm:$0xff]
    %v354 = vld [vmem:[#allocation7 + $0x640] sm:$0xff]
    %v355 = vld [vmem:[#allocation7 + $0x648] sm:$0xff]
    %v356 = vld [vmem:[#allocation7 + $0x650] sm:$0xff]
    %v357 = vld [vmem:[#allocation7 + $0x658] sm:$0xff]
    %v358 = vld [vmem:[#allocation7 + $0x660] sm:$0xff]
    %v359 = vld [vmem:[#allocation7 + $0x668] sm:$0xff]
    %v360 = vld [vmem:[#allocation7 + $0x670] sm:$0xff]
    %v361 = vld [vmem:[#allocation7 + $0x678] sm:$0xff]
    %v362 = vld [vmem:[#allocation7 + $0x680] sm:$0xff]
    %v363 = vld [vmem:[#allocation7 + $0x688] sm:$0xff]
    %v364 = vld [vmem:[#allocation7 + $0x690] sm:$0xff]
    %v365 = vld [vmem:[#allocation7 + $0x698] sm:$0xff]
    %v366 = vld [vmem:[#allocation7 + $0x6a0] sm:$0xff]
    %v367 = vld [vmem:[#allocation7 + $0x6a8] sm:$0xff]
    %v368 = vld [vmem:[#allocation7 + $0x6b0] sm:$0xff]
    %v369 = vld [vmem:[#allocation7 + $0x6b8] sm:$0xff]
    %v370 = vld [vmem:[#allocation7 + $0x6c0] sm:$0xff]
    %v371 = vld [vmem:[#allocation7 + $0x6c8] sm:$0xff]
    %v372 = vld [vmem:[#allocation7 + $0x6d0] sm:$0xff]
    %v373 = vld [vmem:[#allocation7 + $0x6d8] sm:$0xff]
    %v374 = vld [vmem:[#allocation7 + $0x6e0] sm:$0xff]
    %v375 = vld [vmem:[#allocation7 + $0x6e8] sm:$0xff]
    %v376 = vld [vmem:[#allocation7 + $0x6f0] sm:$0xff]
    %v377 = vld [vmem:[#allocation7 + $0x6f8] sm:$0xff]
    %v378 = vld [vmem:[#allocation7 + $0x700] sm:$0xff]
    %v379 = vld [vmem:[#allocation7 + $0x708] sm:$0xff]
    %v380 = vld [vmem:[#allocation7 + $0x710] sm:$0xff]
    %v381 = vld [vmem:[#allocation7 + $0x718] sm:$0xff]
    %v382 = vld [vmem:[#allocation7 + $0x720] sm:$0xff]
    %v383 = vld [vmem:[#allocation7 + $0x728] sm:$0xff]
    %v384 = vld [vmem:[#allocation7 + $0x730] sm:$0xff]
    %v385 = vld [vmem:[#allocation7 + $0x738] sm:$0xff]
    %v386 = vld [vmem:[#allocation7 + $0x740] sm:$0xff]
    %v387 = vld [vmem:[#allocation7 + $0x748] sm:$0xff]
    %v388 = vld [vmem:[#allocation7 + $0x750] sm:$0xff]
    %v389 = vld [vmem:[#allocation7 + $0x758] sm:$0xff]
    %v390 = vld [vmem:[#allocation7 + $0x760] sm:$0xff]
    %v391 = vld [vmem:[#allocation7 + $0x768] sm:$0xff]
    %v392 = vld [vmem:[#allocation7 + $0x770] sm:$0xff]
    %v393 = vld [vmem:[#allocation7 + $0x778] sm:$0xff]
    %v394 = vld [vmem:[#allocation7 + $0x780] sm:$0xff]
    %v395 = vld [vmem:[#allocation7 + $0x788] sm:$0xff]
    %v396 = vld [vmem:[#allocation7 + $0x790] sm:$0xff]
    %v397 = vld [vmem:[#allocation7 + $0x798] sm:$0xff]
    %v398 = vld [vmem:[#allocation7 + $0x7a0] sm:$0xff]
    %v399 = vld [vmem:[#allocation7 + $0x7a8] sm:$0xff]
    %v400 = vld [vmem:[#allocation7 + $0x7b0] sm:$0xff]
    %v401 = vld [vmem:[#allocation7 + $0x7b8] sm:$0xff]
    %v402 = vld [vmem:[#allocation7 + $0x7c0] sm:$0xff]
    %v403 = vld [vmem:[#allocation7 + $0x7c8] sm:$0xff]
    %v404 = vld [vmem:[#allocation7 + $0x7d0] sm:$0xff]
    %v405 = vld [vmem:[#allocation7 + $0x7d8] sm:$0xff]
    %v406 = vld [vmem:[#allocation7 + $0x7e0] sm:$0xff]
    %v407 = vld [vmem:[#allocation7 + $0x7e8] sm:$0xff]
    %v408 = vld [vmem:[#allocation7 + $0x7f0] sm:$0xff]
    %v409 = vld [vmem:[#allocation7 + $0x7f8] sm:$0xff]
    %v410 = vld [vmem:[#allocation7 + $0x800] sm:$0xff]
    %v411 = vld [vmem:[#allocation7 + $0x808] sm:$0xff]
    %v412 = vld [vmem:[#allocation7 + $0x810] sm:$0xff]
    %v413 = vld [vmem:[#allocation7 + $0x818] sm:$0xff]
    %v414 = vld [vmem:[#allocation7 + $0x820] sm:$0xff]
    %v415 = vld [vmem:[#allocation7 + $0x828] sm:$0xff]
    %v416 = vld [vmem:[#allocation7 + $0x830] sm:$0xff]
    %v417 = vld [vmem:[#allocation7 + $0x838] sm:$0xff]
    %v418 = vld [vmem:[#allocation7 + $0x840] sm:$0xff]
    %v419 = vld [vmem:[#allocation7 + $0x848] sm:$0xff]
    %v420 = vld [vmem:[#allocation7 + $0x850] sm:$0xff]
    %v421 = vld [vmem:[#allocation7 + $0x858] sm:$0xff]
    %v422 = vld [vmem:[#allocation7 + $0x860] sm:$0xff]
    %v423 = vld [vmem:[#allocation7 + $0x868] sm:$0xff]
    %v424 = vld [vmem:[#allocation7 + $0x870] sm:$0xff]
    %v425 = vld [vmem:[#allocation7 + $0x878] sm:$0xff]
    %v426 = vld [vmem:[#allocation7 + $0x880] sm:$0xff]
    %v427 = vld [vmem:[#allocation7 + $0x888] sm:$0xff]
    %v428 = vld [vmem:[#allocation7 + $0x890] sm:$0xff]
    %v429 = vld [vmem:[#allocation7 + $0x898] sm:$0xff]
    %v430 = vld [vmem:[#allocation7 + $0x8a0] sm:$0xff]
    %v431 = vld [vmem:[#allocation7 + $0x8a8] sm:$0xff]
    %v432 = vld [vmem:[#allocation7 + $0x8b0] sm:$0xff]
    %v433 = vld [vmem:[#allocation7 + $0x8b8] sm:$0xff]
    %v434 = vld [vmem:[#allocation7 + $0x8c0] sm:$0xff]
    %v435 = vld [vmem:[#allocation7 + $0x8c8] sm:$0xff]
    %v436 = vld [vmem:[#allocation7 + $0x8d0] sm:$0xff]
    %v437 = vld [vmem:[#allocation7 + $0x8d8] sm:$0xff]
    %v438 = vld [vmem:[#allocation7 + $0x8e0] sm:$0xff]
    %v439 = vld [vmem:[#allocation7 + $0x8e8] sm:$0xff]
    %v440 = vld [vmem:[#allocation7 + $0x8f0] sm:$0xff]
    %v441 = vld [vmem:[#allocation7 + $0x8f8] sm:$0xff]
    %v442 = vld [vmem:[#allocation7 + $0x900] sm:$0xff]
    %v443 = vld [vmem:[#allocation7 + $0x908] sm:$0xff]
    %v444 = vld [vmem:[#allocation7 + $0x910] sm:$0xff]
    %v445 = vld [vmem:[#allocation7 + $0x918] sm:$0xff]
    %v446 = vld [vmem:[#allocation7 + $0x920] sm:$0xff]
    %v447 = vld [vmem:[#allocation7 + $0x928] sm:$0xff]
    %v448 = vld [vmem:[#allocation7 + $0x930] sm:$0xff]
    %v449 = vld [vmem:[#allocation7 + $0x938] sm:$0xff]
    %v450 = vld [vmem:[#allocation7 + $0x940] sm:$0xff]
    %v451 = vld [vmem:[#allocation7 + $0x948] sm:$0xff]
    %v452 = vld [vmem:[#allocation7 + $0x950] sm:$0xff]
    %v453 = vld [vmem:[#allocation7 + $0x958] sm:$0xff]
    %v454 = vld [vmem:[#allocation7 + $0x960] sm:$0xff]
    %v455 = vld [vmem:[#allocation7 + $0x968] sm:$0xff]
    %v456 = vld [vmem:[#allocation7 + $0x970] sm:$0xff]
    %v457 = vld [vmem:[#allocation7 + $0x978] sm:$0xff]
    %v458 = vld [vmem:[#allocation7 + $0x980] sm:$0xff]
    %v459 = vld [vmem:[#allocation7 + $0x988] sm:$0xff]
    %v460 = vld [vmem:[#allocation7 + $0x990] sm:$0xff]
    %v461 = vld [vmem:[#allocation7 + $0x998] sm:$0xff]
    %v462 = vld [vmem:[#allocation7 + $0x9a0] sm:$0xff]
    %v463 = vld [vmem:[#allocation7 + $0x9a8] sm:$0xff]
    %v464 = vld [vmem:[#allocation7 + $0x9b0] sm:$0xff]
    %v465 = vld [vmem:[#allocation7 + $0x9b8] sm:$0xff]
    %v466 = vld [vmem:[#allocation7 + $0x9c0] sm:$0xff]
    %v467 = vld [vmem:[#allocation7 + $0x9c8] sm:$0xff]
    %v468 = vld [vmem:[#allocation7 + $0x9d0] sm:$0xff]
    %v469 = vld [vmem:[#allocation7 + $0x9d8] sm:$0xff]
    %v470 = vld [vmem:[#allocation7 + $0x9e0] sm:$0xff]
    %v471 = vld [vmem:[#allocation7 + $0x9e8] sm:$0xff]
    %v472 = vld [vmem:[#allocation7 + $0x9f0] sm:$0xff]
    %v473 = vld [vmem:[#allocation7 + $0x9f8] sm:$0xff]
    %v474 = vld [vmem:[#allocation7 + $0xa00] sm:$0xff]
    %v475 = vld [vmem:[#allocation7 + $0xa08] sm:$0xff]
    %v476 = vld [vmem:[#allocation7 + $0xa10] sm:$0xff]
    %v477 = vld [vmem:[#allocation7 + $0xa18] sm:$0xff]
    %v478 = vld [vmem:[#allocation7 + $0xa20] sm:$0xff]
    %v479 = vld [vmem:[#allocation7 + $0xa28] sm:$0xff]
    %v480 = vld [vmem:[#allocation7 + $0xa30] sm:$0xff]
    %v481 = vld [vmem:[#allocation7 + $0xa38] sm:$0xff]
    %v482 = vld [vmem:[#allocation7 + $0xa40] sm:$0xff]
    %v483 = vld [vmem:[#allocation7 + $0xa48] sm:$0xff]
    %v484 = vld [vmem:[#allocation7 + $0xa50] sm:$0xff]
    %v485 = vld [vmem:[#allocation7 + $0xa58] sm:$0xff]
    %v486 = vld [vmem:[#allocation7 + $0xa60] sm:$0xff]
    %v487 = vld [vmem:[#allocation7 + $0xa68] sm:$0xff]
    %v488 = vld [vmem:[#allocation7 + $0xa70] sm:$0xff]
    %v489 = vld [vmem:[#allocation7 + $0xa78] sm:$0xff]
    %v490 = vld [vmem:[#allocation7 + $0xa80] sm:$0xff]
    %v491 = vld [vmem:[#allocation7 + $0xa88] sm:$0xff]
    %v492 = vld [vmem:[#allocation7 + $0xa90] sm:$0xff]
    %v493 = vld [vmem:[#allocation7 + $0xa98] sm:$0xff]
    %v494 = vld [vmem:[#allocation7 + $0xaa0] sm:$0xff]
    %v495 = vld [vmem:[#allocation7 + $0xaa8] sm:$0xff]
    %v496 = vld [vmem:[#allocation7 + $0xab0] sm:$0xff]
    %v497 = vld [vmem:[#allocation7 + $0xab8] sm:$0xff]
    %v498 = vld [vmem:[#allocation7 + $0xac0] sm:$0xff]
    %v499 = vld [vmem:[#allocation7 + $0xac8] sm:$0xff]
    %v500 = vld [vmem:[#allocation7 + $0xad0] sm:$0xff]
    %v501 = vld [vmem:[#allocation7 + $0xad8] sm:$0xff]
    %v502 = vld [vmem:[#allocation7 + $0xae0] sm:$0xff]
    %v503 = vld [vmem:[#allocation7 + $0xae8] sm:$0xff]
    %v504 = vld [vmem:[#allocation7 + $0xaf0] sm:$0xff]
    %v505 = vld [vmem:[#allocation7 + $0xaf8] sm:$0xff]
    %v506 = vld [vmem:[#allocation7 + $0xb00] sm:$0xff]
    %v507 = vld [vmem:[#allocation7 + $0xb08] sm:$0xff]
    %v508 = vld [vmem:[#allocation7 + $0xb10] sm:$0xff]
    %v509 = vld [vmem:[#allocation7 + $0xb18] sm:$0xff]
    %v510 = vld [vmem:[#allocation7 + $0xb20] sm:$0xff]
    %v511 = vld [vmem:[#allocation7 + $0xb28] sm:$0xff]
    %v512 = vld [vmem:[#allocation7 + $0xb30] sm:$0xff]
    %v513 = vld [vmem:[#allocation7 + $0xb38] sm:$0xff]
    %v514 = vld [vmem:[#allocation7 + $0xb40] sm:$0xff]
    %v515 = vld [vmem:[#allocation7 + $0xb48] sm:$0xff]
    %v516 = vld [vmem:[#allocation7 + $0xb50] sm:$0xff]
    %v517 = vld [vmem:[#allocation7 + $0xb58] sm:$0xff]
    %v518 = vld [vmem:[#allocation7 + $0xb60] sm:$0xff]
    %v519 = vld [vmem:[#allocation7 + $0xb68] sm:$0xff]
    %v520 = vld [vmem:[#allocation7 + $0xb70] sm:$0xff]
    %v521 = vld [vmem:[#allocation7 + $0xb78] sm:$0xff]
    %v522 = vld [vmem:[#allocation7 + $0xb80] sm:$0xff]
    %v523 = vld [vmem:[#allocation7 + $0xb88] sm:$0xff]
    %v524 = vld [vmem:[#allocation7 + $0xb90] sm:$0xff]
    %v525 = vld [vmem:[#allocation7 + $0xb98] sm:$0xff]
    %v526 = vld [vmem:[#allocation7 + $0xba0] sm:$0xff]
    %v527 = vld [vmem:[#allocation7 + $0xba8] sm:$0xff]
    %v528 = vld [vmem:[#allocation7 + $0xbb0] sm:$0xff]
    %v529 = vld [vmem:[#allocation7 + $0xbb8] sm:$0xff]
    %v530 = vld [vmem:[#allocation7 + $0xbc0] sm:$0xff]
    %v531 = vld [vmem:[#allocation7 + $0xbc8] sm:$0xff]
    %v532 = vld [vmem:[#allocation7 + $0xbd0] sm:$0xff]
    %v533 = vld [vmem:[#allocation7 + $0xbd8] sm:$0xff]
    %v534 = vld [vmem:[#allocation7 + $0xbe0] sm:$0xff]
    %v535 = vld [vmem:[#allocation7 + $0xbe8] sm:$0xff]
    %v536 = vld [vmem:[#allocation7 + $0xbf0] sm:$0xff]
    %v537 = vld [vmem:[#allocation7 + $0xbf8] sm:$0xff]
    %v538 = vld [vmem:[#allocation7 + $0xc00] sm:$0xff]
    %v539 = vld [vmem:[#allocation7 + $0xc08] sm:$0xff]
    %v540 = vld [vmem:[#allocation7 + $0xc10] sm:$0xff]
    %v541 = vld [vmem:[#allocation7 + $0xc18] sm:$0xff]
    %v542 = vld [vmem:[#allocation7 + $0xc20] sm:$0xff]
    %v543 = vld [vmem:[#allocation7 + $0xc28] sm:$0xff]
    %v544 = vld [vmem:[#allocation7 + $0xc30] sm:$0xff]
    %v545 = vld [vmem:[#allocation7 + $0xc38] sm:$0xff]
    %v546 = vld [vmem:[#allocation7 + $0xc40] sm:$0xff]
    %v547 = vld [vmem:[#allocation7 + $0xc48] sm:$0xff]
    %v548 = vld [vmem:[#allocation7 + $0xc50] sm:$0xff]
    %v549 = vld [vmem:[#allocation7 + $0xc58] sm:$0xff]
    %v550 = vld [vmem:[#allocation7 + $0xc60] sm:$0xff]
    %v551 = vld [vmem:[#allocation7 + $0xc68] sm:$0xff]
    %v552 = vld [vmem:[#allocation7 + $0xc70] sm:$0xff]
    %v553 = vld [vmem:[#allocation7 + $0xc78] sm:$0xff]
    %v554 = vld [vmem:[#allocation7 + $0xc80] sm:$0xff]
    %v555 = vld [vmem:[#allocation7 + $0xc88] sm:$0xff]
    %v556 = vld [vmem:[#allocation7 + $0xc90] sm:$0xff]
    %v557 = vld [vmem:[#allocation7 + $0xc98] sm:$0xff]
    %v558 = vld [vmem:[#allocation7 + $0xca0] sm:$0xff]
    %v559 = vld [vmem:[#allocation7 + $0xca8] sm:$0xff]
    %v560 = vld [vmem:[#allocation7 + $0xcb0] sm:$0xff]
    %v561 = vld [vmem:[#allocation7 + $0xcb8] sm:$0xff]
    %v562 = vld [vmem:[#allocation7 + $0xcc0] sm:$0xff]
    %v563 = vld [vmem:[#allocation7 + $0xcc8] sm:$0xff]
    %v564 = vld [vmem:[#allocation7 + $0xcd0] sm:$0xff]
    %v565 = vld [vmem:[#allocation7 + $0xcd8] sm:$0xff]
    %v566 = vld [vmem:[#allocation7 + $0xce0] sm:$0xff]
    %v567 = vld [vmem:[#allocation7 + $0xce8] sm:$0xff]
    %v568 = vld [vmem:[#allocation7 + $0xcf0] sm:$0xff]
    %v569 = vld [vmem:[#allocation7 + $0xcf8] sm:$0xff]
    %v570 = vld [vmem:[#allocation7 + $0xd00] sm:$0xff]
    %v571 = vld [vmem:[#allocation7 + $0xd08] sm:$0xff]
    %v572 = vld [vmem:[#allocation7 + $0xd10] sm:$0xff]
    %v573 = vld [vmem:[#allocation7 + $0xd18] sm:$0xff]
    %v574 = vld [vmem:[#allocation7 + $0xd20] sm:$0xff]
    %v575 = vld [vmem:[#allocation7 + $0xd28] sm:$0xff]
    %v576 = vld [vmem:[#allocation7 + $0xd30] sm:$0xff]
    %v577 = vld [vmem:[#allocation7 + $0xd38] sm:$0xff]
    %v578 = vld [vmem:[#allocation7 + $0xd40] sm:$0xff]
    %v579 = vld [vmem:[#allocation7 + $0xd48] sm:$0xff]
    %v580 = vld [vmem:[#allocation7 + $0xd50] sm:$0xff]
    %v581 = vld [vmem:[#allocation7 + $0xd58] sm:$0xff]
    %v582 = vld [vmem:[#allocation7 + $0xd60] sm:$0xff]
    %v583 = vld [vmem:[#allocation7 + $0xd68] sm:$0xff]
    %v584 = vld [vmem:[#allocation7 + $0xd70] sm:$0xff]
    %v585 = vld [vmem:[#allocation7 + $0xd78] sm:$0xff]
    %v586 = vld [vmem:[#allocation7 + $0xd80] sm:$0xff]
    %v587 = vld [vmem:[#allocation7 + $0xd88] sm:$0xff]
    %v588 = vld [vmem:[#allocation7 + $0xd90] sm:$0xff]
    %v589 = vld [vmem:[#allocation7 + $0xd98] sm:$0xff]
    %v590 = vld [vmem:[#allocation7 + $0xda0] sm:$0xff]
    %v591 = vld [vmem:[#allocation7 + $0xda8] sm:$0xff]
    %v592 = vld [vmem:[#allocation7 + $0xdb0] sm:$0xff]
    %v593 = vld [vmem:[#allocation7 + $0xdb8] sm:$0xff]
    %v594 = vld [vmem:[#allocation7 + $0xdc0] sm:$0xff]
    %v595 = vld [vmem:[#allocation7 + $0xdc8] sm:$0xff]
    %v596 = vld [vmem:[#allocation7 + $0xdd0] sm:$0xff]
    %v597 = vld [vmem:[#allocation7 + $0xdd8] sm:$0xff]
    %v598 = vld [vmem:[#allocation7 + $0xde0] sm:$0xff]
    %v599 = vld [vmem:[#allocation7 + $0xde8] sm:$0xff]
    %v600 = vld [vmem:[#allocation7 + $0xdf0] sm:$0xff]
    %v601 = vld [vmem:[#allocation7 + $0xdf8] sm:$0xff]
    %v602 = vld [vmem:[#allocation7 + $0xe00] sm:$0xff]
    %v603 = vld [vmem:[#allocation7 + $0xe08] sm:$0xff]
    %v604 = vld [vmem:[#allocation7 + $0xe10] sm:$0xff]
    %v605 = vld [vmem:[#allocation7 + $0xe18] sm:$0xff]
    %v606 = vld [vmem:[#allocation7 + $0xe20] sm:$0xff]
    %v607 = vld [vmem:[#allocation7 + $0xe28] sm:$0xff]
    %v608 = vld [vmem:[#allocation7 + $0xe30] sm:$0xff]
    %v609 = vld [vmem:[#allocation7 + $0xe38] sm:$0xff]
    %v610 = vld [vmem:[#allocation7 + $0xe40] sm:$0xff]
    %v611 = vld [vmem:[#allocation7 + $0xe48] sm:$0xff]
    %v612 = vld [vmem:[#allocation7 + $0xe50] sm:$0xff]
    %v613 = vld [vmem:[#allocation7 + $0xe58] sm:$0xff]
    %v614 = vld [vmem:[#allocation7 + $0xe60] sm:$0xff]
    %v615 = vld [vmem:[#allocation7 + $0xe68] sm:$0xff]
    %v616 = vld [vmem:[#allocation7 + $0xe70] sm:$0xff]
    %v617 = vld [vmem:[#allocation7 + $0xe78] sm:$0xff]
    %v618 = vld [vmem:[#allocation7 + $0xe80] sm:$0xff]
    %v619 = vld [vmem:[#allocation7 + $0xe88] sm:$0xff]
    %v620 = vld [vmem:[#allocation7 + $0xe90] sm:$0xff]
    %v621 = vld [vmem:[#allocation7 + $0xe98] sm:$0xff]
    %v622 = vld [vmem:[#allocation7 + $0xea0] sm:$0xff]
    %v623 = vld [vmem:[#allocation7 + $0xea8] sm:$0xff]
    %v624 = vld [vmem:[#allocation7 + $0xeb0] sm:$0xff]
    %v625 = vld [vmem:[#allocation7 + $0xeb8] sm:$0xff]
    %v626 = vld [vmem:[#allocation7 + $0xec0] sm:$0xff]
    %v627 = vld [vmem:[#allocation7 + $0xec8] sm:$0xff]
    %v628 = vld [vmem:[#allocation7 + $0xed0] sm:$0xff]
    %v629 = vld [vmem:[#allocation7 + $0xed8] sm:$0xff]
    %v630 = vld [vmem:[#allocation7 + $0xee0] sm:$0xff]
    %v631 = vld [vmem:[#allocation7 + $0xee8] sm:$0xff]
    %v632 = vld [vmem:[#allocation7 + $0xef0] sm:$0xff]
    %v633 = vld [vmem:[#allocation7 + $0xef8] sm:$0xff]
    %v634 = vld [vmem:[#allocation7 + $0xf00] sm:$0xff]
    %v635 = vld [vmem:[#allocation7 + $0xf08] sm:$0xff]
    %v636 = vld [vmem:[#allocation7 + $0xf10] sm:$0xff]
    %v637 = vld [vmem:[#allocation7 + $0xf18] sm:$0xff]
    %v638 = vld [vmem:[#allocation7 + $0xf20] sm:$0xff]
    %v639 = vld [vmem:[#allocation7 + $0xf28] sm:$0xff]
    %v640 = vld [vmem:[#allocation7 + $0xf30] sm:$0xff]
    %v641 = vld [vmem:[#allocation7 + $0xf38] sm:$0xff]
    %v642 = vld [vmem:[#allocation7 + $0xf40] sm:$0xff]
    %v643 = vld [vmem:[#allocation7 + $0xf48] sm:$0xff]
    %v644 = vld [vmem:[#allocation7 + $0xf50] sm:$0xff]
    %v645 = vld [vmem:[#allocation7 + $0xf58] sm:$0xff]
    %v646 = vld [vmem:[#allocation7 + $0xf60] sm:$0xff]
    %v647 = vld [vmem:[#allocation7 + $0xf68] sm:$0xff]
    %v648 = vld [vmem:[#allocation7 + $0xf70] sm:$0xff]
    %v649 = vld [vmem:[#allocation7 + $0xf78] sm:$0xff]
    %v650 = vld [vmem:[#allocation7 + $0xf80] sm:$0xff]
    %v651 = vld [vmem:[#allocation7 + $0xf88] sm:$0xff]
    %v652 = vld [vmem:[#allocation7 + $0xf90] sm:$0xff]
    %v653 = vld [vmem:[#allocation7 + $0xf98] sm:$0xff]
    %v654 = vld [vmem:[#allocation7 + $0xfa0] sm:$0xff]
    %v655 = vld [vmem:[#allocation7 + $0xfa8] sm:$0xff]
    %v656 = vld [vmem:[#allocation7 + $0xfb0] sm:$0xff]
    %v657 = vld [vmem:[#allocation7 + $0xfb8] sm:$0xff]
    %v658 = vld [vmem:[#allocation7 + $0xfc0] sm:$0xff]
    %v659 = vld [vmem:[#allocation7 + $0xfc8] sm:$0xff]
    %v660 = vld [vmem:[#allocation7 + $0xfd0] sm:$0xff]
    %v661 = vld [vmem:[#allocation7 + $0xfd8] sm:$0xff]
    %v662 = vld [vmem:[#allocation7 + $0xfe0] sm:$0xff]
    %v663 = vld [vmem:[#allocation7 + $0xfe8] sm:$0xff]
    %v664 = vld [vmem:[#allocation7 + $0xff0] sm:$0xff]
    %v665 = vld [vmem:[#allocation7 + $0xff8] sm:$0xff]
    %v666 = vld [vmem:[#allocation7 + $0x1000] sm:$0xff]
    %v667 = vld [vmem:[#allocation7 + $0x1008] sm:$0xff]
    %v668 = vld [vmem:[#allocation7 + $0x1010] sm:$0xff]
    %v669 = vld [vmem:[#allocation7 + $0x1018] sm:$0xff]
    %v670 = vld [vmem:[#allocation7 + $0x1020] sm:$0xff]
    %v671 = vld [vmem:[#allocation7 + $0x1028] sm:$0xff]
    %v672 = vld [vmem:[#allocation7 + $0x1030] sm:$0xff]
    %v673 = vld [vmem:[#allocation7 + $0x1038] sm:$0xff]
    %v674 = vld [vmem:[#allocation7 + $0x1040] sm:$0xff]
    %v675 = vld [vmem:[#allocation7 + $0x1048] sm:$0xff]
    %v676 = vld [vmem:[#allocation7 + $0x1050] sm:$0xff]
    %v677 = vld [vmem:[#allocation7 + $0x1058] sm:$0xff]
    %v678 = vld [vmem:[#allocation7 + $0x1060] sm:$0xff]
    %v679 = vld [vmem:[#allocation7 + $0x1068] sm:$0xff]
    %v680 = vld [vmem:[#allocation7 + $0x1070] sm:$0xff]
    %v681 = vld [vmem:[#allocation7 + $0x1078] sm:$0xff]
    %v682 = vld [vmem:[#allocation7 + $0x1080] sm:$0xff]
    %v683 = vld [vmem:[#allocation7 + $0x1088] sm:$0xff]
    %v684 = vld [vmem:[#allocation7 + $0x1090] sm:$0xff]
    %v685 = vld [vmem:[#allocation7 + $0x1098] sm:$0xff]
    %v686 = vld [vmem:[#allocation7 + $0x10a0] sm:$0xff]
    %v687 = vld [vmem:[#allocation7 + $0x10a8] sm:$0xff]
    %v688 = vld [vmem:[#allocation7 + $0x10b0] sm:$0xff]
    %v689 = vld [vmem:[#allocation7 + $0x10b8] sm:$0xff]
    %v690 = vld [vmem:[#allocation7 + $0x10c0] sm:$0xff]
    %v691 = vld [vmem:[#allocation7 + $0x10c8] sm:$0xff]
    %v692 = vld [vmem:[#allocation7 + $0x10d0] sm:$0xff]
    %v693 = vld [vmem:[#allocation7 + $0x10d8] sm:$0xff]
    %v694 = vld [vmem:[#allocation7 + $0x10e0] sm:$0xff]
    %v695 = vld [vmem:[#allocation7 + $0x10e8] sm:$0xff]
    %v696 = vld [vmem:[#allocation7 + $0x10f0] sm:$0xff]
    %v697 = vld [vmem:[#allocation7 + $0x10f8] sm:$0xff]
    %v698 = vld [vmem:[#allocation7 + $0x1100] sm:$0xff]
    %v699 = vld [vmem:[#allocation7 + $0x1108] sm:$0xff]
    %v700 = vld [vmem:[#allocation7 + $0x1110] sm:$0xff]
    %v701 = vld [vmem:[#allocation7 + $0x1118] sm:$0xff]
    %v702 = vld [vmem:[#allocation7 + $0x1120] sm:$0xff]
    %v703 = vld [vmem:[#allocation7 + $0x1128] sm:$0xff]
    %v704 = vld [vmem:[#allocation7 + $0x1130] sm:$0xff]
    %v705 = vld [vmem:[#allocation7 + $0x1138] sm:$0xff]
    %v706 = vld [vmem:[#allocation7 + $0x1140] sm:$0xff]
    %v707 = vld [vmem:[#allocation7 + $0x1148] sm:$0xff]
    %v708 = vld [vmem:[#allocation7 + $0x1150] sm:$0xff]
    %v709 = vld [vmem:[#allocation7 + $0x1158] sm:$0xff]
    %v710 = vld [vmem:[#allocation7 + $0x1160] sm:$0xff]
    %v711 = vld [vmem:[#allocation7 + $0x1168] sm:$0xff]
    %v712 = vld [vmem:[#allocation7 + $0x1170] sm:$0xff]
    %v713 = vld [vmem:[#allocation7 + $0x1178] sm:$0xff]
    %v714 = vld [vmem:[#allocation7 + $0x1180] sm:$0xff]
    %v715 = vld [vmem:[#allocation7 + $0x1188] sm:$0xff]
    %v716 = vld [vmem:[#allocation7 + $0x1190] sm:$0xff]
    %v717 = vld [vmem:[#allocation7 + $0x1198] sm:$0xff]
    %v718 = vld [vmem:[#allocation7 + $0x11a0] sm:$0xff]
    %v719 = vld [vmem:[#allocation7 + $0x11a8] sm:$0xff]
    %v720 = vld [vmem:[#allocation7 + $0x11b0] sm:$0xff]
    %v721 = vld [vmem:[#allocation7 + $0x11b8] sm:$0xff]
    %v722 = vld [vmem:[#allocation7 + $0x11c0] sm:$0xff]
    %v723 = vld [vmem:[#allocation7 + $0x11c8] sm:$0xff]
    %v724 = vld [vmem:[#allocation7 + $0x11d0] sm:$0xff]
    %v725 = vld [vmem:[#allocation7 + $0x11d8] sm:$0xff]
    %v726 = vld [vmem:[#allocation7 + $0x11e0] sm:$0xff]
    %v727 = vld [vmem:[#allocation7 + $0x11e8] sm:$0xff]
    %v728 = vld [vmem:[#allocation7 + $0x11f0] sm:$0xff]
    %v729 = vld [vmem:[#allocation7 + $0x11f8] sm:$0xff]
    %v730 = vld [vmem:[#allocation7 + $0x1200] sm:$0xff]
    %v731 = vld [vmem:[#allocation7 + $0x1208] sm:$0xff]
    %v732 = vld [vmem:[#allocation7 + $0x1210] sm:$0xff]
    %v733 = vld [vmem:[#allocation7 + $0x1218] sm:$0xff]
    %v734 = vld [vmem:[#allocation7 + $0x1220] sm:$0xff]
    %v735 = vld [vmem:[#allocation7 + $0x1228] sm:$0xff]
    %v736 = vld [vmem:[#allocation7 + $0x1230] sm:$0xff]
    %v737 = vld [vmem:[#allocation7 + $0x1238] sm:$0xff]
    %v738 = vld [vmem:[#allocation7 + $0x1240] sm:$0xff]
    %v739 = vld [vmem:[#allocation7 + $0x1248] sm:$0xff]
    %v740 = vld [vmem:[#allocation7 + $0x1250] sm:$0xff]
    %v741 = vld [vmem:[#allocation7 + $0x1258] sm:$0xff]
    %v742 = vld [vmem:[#allocation7 + $0x1260] sm:$0xff]
    %v743 = vld [vmem:[#allocation7 + $0x1268] sm:$0xff]
    %v744 = vld [vmem:[#allocation7 + $0x1270] sm:$0xff]
    %v745 = vld [vmem:[#allocation7 + $0x1278] sm:$0xff]
    %v746 = vld [vmem:[#allocation7 + $0x1280] sm:$0xff]
    %v747 = vld [vmem:[#allocation7 + $0x1288] sm:$0xff]
    %v748 = vld [vmem:[#allocation7 + $0x1290] sm:$0xff]
    %v749 = vld [vmem:[#allocation7 + $0x1298] sm:$0xff]
    %v750 = vld [vmem:[#allocation7 + $0x12a0] sm:$0xff]
    %v751 = vld [vmem:[#allocation7 + $0x12a8] sm:$0xff]
    %v752 = vld [vmem:[#allocation7 + $0x12b0] sm:$0xff]
    %v753 = vld [vmem:[#allocation7 + $0x12b8] sm:$0xff]
    %v754 = vld [vmem:[#allocation7 + $0x12c0] sm:$0xff]
    %v755 = vld [vmem:[#allocation7 + $0x12c8] sm:$0xff]
    %v756 = vld [vmem:[#allocation7 + $0x12d0] sm:$0xff]
    %v757 = vld [vmem:[#allocation7 + $0x12d8] sm:$0xff]
    %v758 = vld [vmem:[#allocation7 + $0x12e0] sm:$0xff]
    %v759 = vld [vmem:[#allocation7 + $0x12e8] sm:$0xff]
    %v760 = vld [vmem:[#allocation7 + $0x12f0] sm:$0xff]
    %v761 = vld [vmem:[#allocation7 + $0x12f8] sm:$0xff]
    %v762 = vld [vmem:[#allocation7 + $0x1300] sm:$0xff]
    %v763 = vld [vmem:[#allocation7 + $0x1308] sm:$0xff]
    %v764 = vld [vmem:[#allocation7 + $0x1310] sm:$0xff]
    %v765 = vld [vmem:[#allocation7 + $0x1318] sm:$0xff]
    %v766 = vld [vmem:[#allocation7 + $0x1320] sm:$0xff]
    %v767 = vld [vmem:[#allocation7 + $0x1328] sm:$0xff]
    %v768 = vld [vmem:[#allocation7 + $0x1330] sm:$0xff]
    %v769 = vld [vmem:[#allocation7 + $0x1338] sm:$0xff]
    %v770 = vld [vmem:[#allocation7 + $0x1340] sm:$0xff]
    %v771 = vld [vmem:[#allocation7 + $0x1348] sm:$0xff]
    %v772 = vld [vmem:[#allocation7 + $0x1350] sm:$0xff]
    %v773 = vld [vmem:[#allocation7 + $0x1358] sm:$0xff]
    %v774 = vld [vmem:[#allocation7 + $0x1360] sm:$0xff]
    %v775 = vld [vmem:[#allocation7 + $0x1368] sm:$0xff]
    %v776 = vld [vmem:[#allocation7 + $0x1370] sm:$0xff]
    %v777 = vld [vmem:[#allocation7 + $0x1378] sm:$0xff]
    %v778 = vld [vmem:[#allocation7 + $0x1380] sm:$0xff]
    %v779 = vld [vmem:[#allocation7 + $0x1388] sm:$0xff]
    %v780 = vld [vmem:[#allocation7 + $0x1390] sm:$0xff]
    %v781 = vld [vmem:[#allocation7 + $0x1398] sm:$0xff]
    %v782 = vld [vmem:[#allocation7 + $0x13a0] sm:$0xff]
    %v783 = vld [vmem:[#allocation7 + $0x13a8] sm:$0xff]
    %v784 = vld [vmem:[#allocation7 + $0x13b0] sm:$0xff]
    %v785 = vld [vmem:[#allocation7 + $0x13b8] sm:$0xff]
    %v786 = vld [vmem:[#allocation7 + $0x13c0] sm:$0xff]
    %v787 = vld [vmem:[#allocation7 + $0x13c8] sm:$0xff]
    %v788 = vld [vmem:[#allocation7 + $0x13d0] sm:$0xff]
    %v789 = vld [vmem:[#allocation7 + $0x13d8] sm:$0xff]
    %v790 = vld [vmem:[#allocation7 + $0x13e0] sm:$0xff]
    %v791 = vld [vmem:[#allocation7 + $0x13e8] sm:$0xff]
    %v792 = vld [vmem:[#allocation7 + $0x13f0] sm:$0xff]
    %v793 = vld [vmem:[#allocation7 + $0x13f8] sm:$0xff]
    %v814 = vunpack.c.l.b16 %v134
    %v815 = vunpack.c.h.b16 %v134
    %v816 = vunpack.c.l.b16 %v135
    %v817 = vunpack.c.h.b16 %v135
    %v818 = vunpack.c.l.b16 %v136
    %v819 = vunpack.c.h.b16 %v136
    %v820 = vunpack.c.l.b16 %v137
    %v821 = vunpack.c.h.b16 %v137
    %v822 = vunpack.c.l.b16 %v138
    %v823 = vunpack.c.h.b16 %v138
    %v824 = vunpack.c.l.b16 %v139
    %v825 = vunpack.c.h.b16 %v139
    %v826 = vunpack.c.l.b16 %v140
    %v827 = vunpack.c.h.b16 %v140
    %v828 = vunpack.c.l.b16 %v141
    %v829 = vunpack.c.h.b16 %v141
    %v830 = vunpack.c.l.b16 %v142
    %v831 = vunpack.c.h.b16 %v142
    %v832 = vunpack.c.l.b16 %v143
    %v833 = vunpack.c.h.b16 %v143
    %v834 = vunpack.c.l.b16 %v144
    %v835 = vunpack.c.h.b16 %v144
    %v836 = vunpack.c.l.b16 %v145
    %v837 = vunpack.c.h.b16 %v145
    %v838 = vunpack.c.l.b16 %v146
    %v839 = vunpack.c.h.b16 %v146
    %v840 = vunpack.c.l.b16 %v147
    %v841 = vunpack.c.h.b16 %v147
    %v842 = vunpack.c.l.b16 %v148
    %v843 = vunpack.c.h.b16 %v148
    %v844 = vunpack.c.l.b16 %v149
    %v845 = vunpack.c.h.b16 %v149
    %v846 = vunpack.c.l.b16 %v150
    %v847 = vunpack.c.h.b16 %v150
    %v848 = vunpack.c.l.b16 %v151
    %v849 = vunpack.c.h.b16 %v151
    %v850 = vunpack.c.l.b16 %v152
    %v851 = vunpack.c.h.b16 %v152
    %v852 = vunpack.c.l.b16 %v153
    %v853 = vunpack.c.h.b16 %v153
    %v854 = vpack.c.b16 %v834, %v814
    %v855 = vpack.c.b16 %v835, %v815
    %v856 = vpack.c.b16 %v836, %v816
    %v857 = vpack.c.b16 %v837, %v817
    %v858 = vpack.c.b16 %v838, %v818
    %v859 = vpack.c.b16 %v839, %v819
    %v860 = vpack.c.b16 %v840, %v820
    %v861 = vpack.c.b16 %v841, %v821
    %v862 = vpack.c.b16 %v842, %v822
    %v863 = vpack.c.b16 %v843, %v823
    %v864 = vpack.c.b16 %v844, %v824
    %v865 = vpack.c.b16 %v845, %v825
    %v866 = vpack.c.b16 %v846, %v826
    %v867 = vpack.c.b16 %v847, %v827
    %v868 = vpack.c.b16 %v848, %v828
    %v869 = vpack.c.b16 %v849, %v829
    %v870 = vpack.c.b16 %v850, %v830
    %v871 = vpack.c.b16 %v851, %v831
    %v872 = vpack.c.b16 %v852, %v832
    %v873 = vpack.c.b16 %v853, %v833
    %v1534 = vunpack.c.l.b16 %v154
    %v1535 = vunpack.c.h.b16 %v154
    %v1536 = vunpack.c.l.b16 %v155
    %v1537 = vunpack.c.h.b16 %v155
    %v1538 = vunpack.c.l.b16 %v156
    %v1539 = vunpack.c.h.b16 %v156
    %v1540 = vunpack.c.l.b16 %v157
    %v1541 = vunpack.c.h.b16 %v157
    %v1542 = vunpack.c.l.b16 %v158
    %v1543 = vunpack.c.h.b16 %v158
    %v1544 = vunpack.c.l.b16 %v159
    %v1545 = vunpack.c.h.b16 %v159
    %v1546 = vunpack.c.l.b16 %v160
    %v1547 = vunpack.c.h.b16 %v160
    %v1548 = vunpack.c.l.b16 %v161
    %v1549 = vunpack.c.h.b16 %v161
    %v1550 = vunpack.c.l.b16 %v162
    %v1551 = vunpack.c.h.b16 %v162
    %v1552 = vunpack.c.l.b16 %v163
    %v1553 = vunpack.c.h.b16 %v163
    %v1554 = vunpack.c.l.b16 %v164
    %v1555 = vunpack.c.h.b16 %v164
    %v1556 = vunpack.c.l.b16 %v165
    %v1557 = vunpack.c.h.b16 %v165
    %v1558 = vunpack.c.l.b16 %v166
    %v1559 = vunpack.c.h.b16 %v166
    %v1560 = vunpack.c.l.b16 %v167
    %v1561 = vunpack.c.h.b16 %v167
    %v1562 = vunpack.c.l.b16 %v168
    %v1563 = vunpack.c.h.b16 %v168
    %v1564 = vunpack.c.l.b16 %v169
    %v1565 = vunpack.c.h.b16 %v169
    %v1566 = vunpack.c.l.b16 %v170
    %v1567 = vunpack.c.h.b16 %v170
    %v1568 = vunpack.c.l.b16 %v171
    %v1569 = vunpack.c.h.b16 %v171
    %v1570 = vunpack.c.l.b16 %v172
    %v1571 = vunpack.c.h.b16 %v172
    %v1572 = vunpack.c.l.b16 %v173
    %v1573 = vunpack.c.h.b16 %v173
    %v1574 = vunpack.c.l.b16 %v174
    %v1575 = vunpack.c.h.b16 %v174
    %v1576 = vunpack.c.l.b16 %v175
    %v1577 = vunpack.c.h.b16 %v175
    %v1578 = vunpack.c.l.b16 %v176
    %v1579 = vunpack.c.h.b16 %v176
    %v1580 = vunpack.c.l.b16 %v177
    %v1581 = vunpack.c.h.b16 %v177
    %v1582 = vunpack.c.l.b16 %v178
    %v1583 = vunpack.c.h.b16 %v178
    %v1584 = vunpack.c.l.b16 %v179
    %v1585 = vunpack.c.h.b16 %v179
    %v1586 = vunpack.c.l.b16 %v180
    %v1587 = vunpack.c.h.b16 %v180
    %v1588 = vunpack.c.l.b16 %v181
    %v1589 = vunpack.c.h.b16 %v181
    %v1590 = vunpack.c.l.b16 %v182
    %v1591 = vunpack.c.h.b16 %v182
    %v1592 = vunpack.c.l.b16 %v183
    %v1593 = vunpack.c.h.b16 %v183
    %v1594 = vunpack.c.l.b16 %v184
    %v1595 = vunpack.c.h.b16 %v184
    %v1596 = vunpack.c.l.b16 %v185
    %v1597 = vunpack.c.h.b16 %v185
    %v1598 = vunpack.c.l.b16 %v186
    %v1599 = vunpack.c.h.b16 %v186
    %v1600 = vunpack.c.l.b16 %v187
    %v1601 = vunpack.c.h.b16 %v187
    %v1602 = vunpack.c.l.b16 %v188
    %v1603 = vunpack.c.h.b16 %v188
    %v1604 = vunpack.c.l.b16 %v189
    %v1605 = vunpack.c.h.b16 %v189
    %v1606 = vunpack.c.l.b16 %v190
    %v1607 = vunpack.c.h.b16 %v190
    %v1608 = vunpack.c.l.b16 %v191
    %v1609 = vunpack.c.h.b16 %v191
    %v1610 = vunpack.c.l.b16 %v192
    %v1611 = vunpack.c.h.b16 %v192
    %v1612 = vunpack.c.l.b16 %v193
    %v1613 = vunpack.c.h.b16 %v193
    %v1614 = vunpack.c.l.b16 %v194
    %v1615 = vunpack.c.h.b16 %v194
    %v1616 = vunpack.c.l.b16 %v195
    %v1617 = vunpack.c.h.b16 %v195
    %v1618 = vunpack.c.l.b16 %v196
    %v1619 = vunpack.c.h.b16 %v196
    %v1620 = vunpack.c.l.b16 %v197
    %v1621 = vunpack.c.h.b16 %v197
    %v1622 = vunpack.c.l.b16 %v198
    %v1623 = vunpack.c.h.b16 %v198
    %v1624 = vunpack.c.l.b16 %v199
    %v1625 = vunpack.c.h.b16 %v199
    %v1626 = vunpack.c.l.b16 %v200
    %v1627 = vunpack.c.h.b16 %v200
    %v1628 = vunpack.c.l.b16 %v201
    %v1629 = vunpack.c.h.b16 %v201
    %v1630 = vunpack.c.l.b16 %v202
    %v1631 = vunpack.c.h.b16 %v202
    %v1632 = vunpack.c.l.b16 %v203
    %v1633 = vunpack.c.h.b16 %v203
    %v1634 = vunpack.c.l.b16 %v204
    %v1635 = vunpack.c.h.b16 %v204
    %v1636 = vunpack.c.l.b16 %v205
    %v1637 = vunpack.c.h.b16 %v205
    %v1638 = vunpack.c.l.b16 %v206
    %v1639 = vunpack.c.h.b16 %v206
    %v1640 = vunpack.c.l.b16 %v207
    %v1641 = vunpack.c.h.b16 %v207
    %v1642 = vunpack.c.l.b16 %v208
    %v1643 = vunpack.c.h.b16 %v208
    %v1644 = vunpack.c.l.b16 %v209
    %v1645 = vunpack.c.h.b16 %v209
    %v1646 = vunpack.c.l.b16 %v210
    %v1647 = vunpack.c.h.b16 %v210
    %v1648 = vunpack.c.l.b16 %v211
    %v1649 = vunpack.c.h.b16 %v211
    %v1650 = vunpack.c.l.b16 %v212
    %v1651 = vunpack.c.h.b16 %v212
    %v1652 = vunpack.c.l.b16 %v213
    %v1653 = vunpack.c.h.b16 %v213
    %v1654 = vunpack.c.l.b16 %v214
    %v1655 = vunpack.c.h.b16 %v214
    %v1656 = vunpack.c.l.b16 %v215
    %v1657 = vunpack.c.h.b16 %v215
    %v1658 = vunpack.c.l.b16 %v216
    %v1659 = vunpack.c.h.b16 %v216
    %v1660 = vunpack.c.l.b16 %v217
    %v1661 = vunpack.c.h.b16 %v217
    %v1662 = vunpack.c.l.b16 %v218
    %v1663 = vunpack.c.h.b16 %v218
    %v1664 = vunpack.c.l.b16 %v219
    %v1665 = vunpack.c.h.b16 %v219
    %v1666 = vunpack.c.l.b16 %v220
    %v1667 = vunpack.c.h.b16 %v220
    %v1668 = vunpack.c.l.b16 %v221
    %v1669 = vunpack.c.h.b16 %v221
    %v1670 = vunpack.c.l.b16 %v222
    %v1671 = vunpack.c.h.b16 %v222
    %v1672 = vunpack.c.l.b16 %v223
    %v1673 = vunpack.c.h.b16 %v223
    %v1674 = vunpack.c.l.b16 %v224
    %v1675 = vunpack.c.h.b16 %v224
    %v1676 = vunpack.c.l.b16 %v225
    %v1677 = vunpack.c.h.b16 %v225
    %v1678 = vunpack.c.l.b16 %v226
    %v1679 = vunpack.c.h.b16 %v226
    %v1680 = vunpack.c.l.b16 %v227
    %v1681 = vunpack.c.h.b16 %v227
    %v1682 = vunpack.c.l.b16 %v228
    %v1683 = vunpack.c.h.b16 %v228
    %v1684 = vunpack.c.l.b16 %v229
    %v1685 = vunpack.c.h.b16 %v229
    %v1686 = vunpack.c.l.b16 %v230
    %v1687 = vunpack.c.h.b16 %v230
    %v1688 = vunpack.c.l.b16 %v231
    %v1689 = vunpack.c.h.b16 %v231
    %v1690 = vunpack.c.l.b16 %v232
    %v1691 = vunpack.c.h.b16 %v232
    %v1692 = vunpack.c.l.b16 %v233
    %v1693 = vunpack.c.h.b16 %v233
    %v1694 = vunpack.c.l.b16 %v234
    %v1695 = vunpack.c.h.b16 %v234
    %v1696 = vunpack.c.l.b16 %v235
    %v1697 = vunpack.c.h.b16 %v235
    %v1698 = vunpack.c.l.b16 %v236
    %v1699 = vunpack.c.h.b16 %v236
    %v1700 = vunpack.c.l.b16 %v237
    %v1701 = vunpack.c.h.b16 %v237
    %v1702 = vunpack.c.l.b16 %v238
    %v1703 = vunpack.c.h.b16 %v238
    %v1704 = vunpack.c.l.b16 %v239
    %v1705 = vunpack.c.h.b16 %v239
    %v1706 = vunpack.c.l.b16 %v240
    %v1707 = vunpack.c.h.b16 %v240
    %v1708 = vunpack.c.l.b16 %v241
    %v1709 = vunpack.c.h.b16 %v241
    %v1710 = vunpack.c.l.b16 %v242
    %v1711 = vunpack.c.h.b16 %v242
    %v1712 = vunpack.c.l.b16 %v243
    %v1713 = vunpack.c.h.b16 %v243
    %v1714 = vunpack.c.l.b16 %v244
    %v1715 = vunpack.c.h.b16 %v244
    %v1716 = vunpack.c.l.b16 %v245
    %v1717 = vunpack.c.h.b16 %v245
    %v1718 = vunpack.c.l.b16 %v246
    %v1719 = vunpack.c.h.b16 %v246
    %v1720 = vunpack.c.l.b16 %v247
    %v1721 = vunpack.c.h.b16 %v247
    %v1722 = vunpack.c.l.b16 %v248
    %v1723 = vunpack.c.h.b16 %v248
    %v1724 = vunpack.c.l.b16 %v249
    %v1725 = vunpack.c.h.b16 %v249
    %v1726 = vunpack.c.l.b16 %v250
    %v1727 = vunpack.c.h.b16 %v250
    %v1728 = vunpack.c.l.b16 %v251
    %v1729 = vunpack.c.h.b16 %v251
    %v1730 = vunpack.c.l.b16 %v252
    %v1731 = vunpack.c.h.b16 %v252
    %v1732 = vunpack.c.l.b16 %v253
    %v1733 = vunpack.c.h.b16 %v253
    %v1734 = vunpack.c.l.b16 %v254
    %v1735 = vunpack.c.h.b16 %v254
    %v1736 = vunpack.c.l.b16 %v255
    %v1737 = vunpack.c.h.b16 %v255
    %v1738 = vunpack.c.l.b16 %v256
    %v1739 = vunpack.c.h.b16 %v256
    %v1740 = vunpack.c.l.b16 %v257
    %v1741 = vunpack.c.h.b16 %v257
    %v1742 = vunpack.c.l.b16 %v258
    %v1743 = vunpack.c.h.b16 %v258
    %v1744 = vunpack.c.l.b16 %v259
    %v1745 = vunpack.c.h.b16 %v259
    %v1746 = vunpack.c.l.b16 %v260
    %v1747 = vunpack.c.h.b16 %v260
    %v1748 = vunpack.c.l.b16 %v261
    %v1749 = vunpack.c.h.b16 %v261
    %v1750 = vunpack.c.l.b16 %v262
    %v1751 = vunpack.c.h.b16 %v262
    %v1752 = vunpack.c.l.b16 %v263
    %v1753 = vunpack.c.h.b16 %v263
    %v1754 = vunpack.c.l.b16 %v264
    %v1755 = vunpack.c.h.b16 %v264
    %v1756 = vunpack.c.l.b16 %v265
    %v1757 = vunpack.c.h.b16 %v265
    %v1758 = vunpack.c.l.b16 %v266
    %v1759 = vunpack.c.h.b16 %v266
    %v1760 = vunpack.c.l.b16 %v267
    %v1761 = vunpack.c.h.b16 %v267
    %v1762 = vunpack.c.l.b16 %v268
    %v1763 = vunpack.c.h.b16 %v268
    %v1764 = vunpack.c.l.b16 %v269
    %v1765 = vunpack.c.h.b16 %v269
    %v1766 = vunpack.c.l.b16 %v270
    %v1767 = vunpack.c.h.b16 %v270
    %v1768 = vunpack.c.l.b16 %v271
    %v1769 = vunpack.c.h.b16 %v271
    %v1770 = vunpack.c.l.b16 %v272
    %v1771 = vunpack.c.h.b16 %v272
    %v1772 = vunpack.c.l.b16 %v273
    %v1773 = vunpack.c.h.b16 %v273
    %v1774 = vunpack.c.l.b16 %v274
    %v1775 = vunpack.c.h.b16 %v274
    %v1776 = vunpack.c.l.b16 %v275
    %v1777 = vunpack.c.h.b16 %v275
    %v1778 = vunpack.c.l.b16 %v276
    %v1779 = vunpack.c.h.b16 %v276
    %v1780 = vunpack.c.l.b16 %v277
    %v1781 = vunpack.c.h.b16 %v277
    %v1782 = vunpack.c.l.b16 %v278
    %v1783 = vunpack.c.h.b16 %v278
    %v1784 = vunpack.c.l.b16 %v279
    %v1785 = vunpack.c.h.b16 %v279
    %v1786 = vunpack.c.l.b16 %v280
    %v1787 = vunpack.c.h.b16 %v280
    %v1788 = vunpack.c.l.b16 %v281
    %v1789 = vunpack.c.h.b16 %v281
    %v1790 = vunpack.c.l.b16 %v282
    %v1791 = vunpack.c.h.b16 %v282
    %v1792 = vunpack.c.l.b16 %v283
    %v1793 = vunpack.c.h.b16 %v283
    %v1794 = vunpack.c.l.b16 %v284
    %v1795 = vunpack.c.h.b16 %v284
    %v1796 = vunpack.c.l.b16 %v285
    %v1797 = vunpack.c.h.b16 %v285
    %v1798 = vunpack.c.l.b16 %v286
    %v1799 = vunpack.c.h.b16 %v286
    %v1800 = vunpack.c.l.b16 %v287
    %v1801 = vunpack.c.h.b16 %v287
    %v1802 = vunpack.c.l.b16 %v288
    %v1803 = vunpack.c.h.b16 %v288
    %v1804 = vunpack.c.l.b16 %v289
    %v1805 = vunpack.c.h.b16 %v289
    %v1806 = vunpack.c.l.b16 %v290
    %v1807 = vunpack.c.h.b16 %v290
    %v1808 = vunpack.c.l.b16 %v291
    %v1809 = vunpack.c.h.b16 %v291
    %v1810 = vunpack.c.l.b16 %v292
    %v1811 = vunpack.c.h.b16 %v292
    %v1812 = vunpack.c.l.b16 %v293
    %v1813 = vunpack.c.h.b16 %v293
    %v1814 = vunpack.c.l.b16 %v294
    %v1815 = vunpack.c.h.b16 %v294
    %v1816 = vunpack.c.l.b16 %v295
    %v1817 = vunpack.c.h.b16 %v295
    %v1818 = vunpack.c.l.b16 %v296
    %v1819 = vunpack.c.h.b16 %v296
    %v1820 = vunpack.c.l.b16 %v297
    %v1821 = vunpack.c.h.b16 %v297
    %v1822 = vunpack.c.l.b16 %v298
    %v1823 = vunpack.c.h.b16 %v298
    %v1824 = vunpack.c.l.b16 %v299
    %v1825 = vunpack.c.h.b16 %v299
    %v1826 = vunpack.c.l.b16 %v300
    %v1827 = vunpack.c.h.b16 %v300
    %v1828 = vunpack.c.l.b16 %v301
    %v1829 = vunpack.c.h.b16 %v301
    %v1830 = vunpack.c.l.b16 %v302
    %v1831 = vunpack.c.h.b16 %v302
    %v1832 = vunpack.c.l.b16 %v303
    %v1833 = vunpack.c.h.b16 %v303
    %v1834 = vunpack.c.l.b16 %v304
    %v1835 = vunpack.c.h.b16 %v304
    %v1836 = vunpack.c.l.b16 %v305
    %v1837 = vunpack.c.h.b16 %v305
    %v1838 = vunpack.c.l.b16 %v306
    %v1839 = vunpack.c.h.b16 %v306
    %v1840 = vunpack.c.l.b16 %v307
    %v1841 = vunpack.c.h.b16 %v307
    %v1842 = vunpack.c.l.b16 %v308
    %v1843 = vunpack.c.h.b16 %v308
    %v1844 = vunpack.c.l.b16 %v309
    %v1845 = vunpack.c.h.b16 %v309
    %v1846 = vunpack.c.l.b16 %v310
    %v1847 = vunpack.c.h.b16 %v310
    %v1848 = vunpack.c.l.b16 %v311
    %v1849 = vunpack.c.h.b16 %v311
    %v1850 = vunpack.c.l.b16 %v312
    %v1851 = vunpack.c.h.b16 %v312
    %v1852 = vunpack.c.l.b16 %v313
    %v1853 = vunpack.c.h.b16 %v313
    %v1854 = vunpack.c.l.b16 %v314
    %v1855 = vunpack.c.h.b16 %v314
    %v1856 = vunpack.c.l.b16 %v315
    %v1857 = vunpack.c.h.b16 %v315
    %v1858 = vunpack.c.l.b16 %v316
    %v1859 = vunpack.c.h.b16 %v316
    %v1860 = vunpack.c.l.b16 %v317
    %v1861 = vunpack.c.h.b16 %v317
    %v1862 = vunpack.c.l.b16 %v318
    %v1863 = vunpack.c.h.b16 %v318
    %v1864 = vunpack.c.l.b16 %v319
    %v1865 = vunpack.c.h.b16 %v319
    %v1866 = vunpack.c.l.b16 %v320
    %v1867 = vunpack.c.h.b16 %v320
    %v1868 = vunpack.c.l.b16 %v321
    %v1869 = vunpack.c.h.b16 %v321
    %v1870 = vunpack.c.l.b16 %v322
    %v1871 = vunpack.c.h.b16 %v322
    %v1872 = vunpack.c.l.b16 %v323
    %v1873 = vunpack.c.h.b16 %v323
    %v1874 = vunpack.c.l.b16 %v324
    %v1875 = vunpack.c.h.b16 %v324
    %v1876 = vunpack.c.l.b16 %v325
    %v1877 = vunpack.c.h.b16 %v325
    %v1878 = vunpack.c.l.b16 %v326
    %v1879 = vunpack.c.h.b16 %v326
    %v1880 = vunpack.c.l.b16 %v327
    %v1881 = vunpack.c.h.b16 %v327
    %v1882 = vunpack.c.l.b16 %v328
    %v1883 = vunpack.c.h.b16 %v328
    %v1884 = vunpack.c.l.b16 %v329
    %v1885 = vunpack.c.h.b16 %v329
    %v1886 = vunpack.c.l.b16 %v330
    %v1887 = vunpack.c.h.b16 %v330
    %v1888 = vunpack.c.l.b16 %v331
    %v1889 = vunpack.c.h.b16 %v331
    %v1890 = vunpack.c.l.b16 %v332
    %v1891 = vunpack.c.h.b16 %v332
    %v1892 = vunpack.c.l.b16 %v333
    %v1893 = vunpack.c.h.b16 %v333
    %v1894 = vunpack.c.l.b16 %v334
    %v1895 = vunpack.c.h.b16 %v334
    %v1896 = vunpack.c.l.b16 %v335
    %v1897 = vunpack.c.h.b16 %v335
    %v1898 = vunpack.c.l.b16 %v336
    %v1899 = vunpack.c.h.b16 %v336
    %v1900 = vunpack.c.l.b16 %v337
    %v1901 = vunpack.c.h.b16 %v337
    %v1902 = vunpack.c.l.b16 %v338
    %v1903 = vunpack.c.h.b16 %v338
    %v1904 = vunpack.c.l.b16 %v339
    %v1905 = vunpack.c.h.b16 %v339
    %v1906 = vunpack.c.l.b16 %v340
    %v1907 = vunpack.c.h.b16 %v340
    %v1908 = vunpack.c.l.b16 %v341
    %v1909 = vunpack.c.h.b16 %v341
    %v1910 = vunpack.c.l.b16 %v342
    %v1911 = vunpack.c.h.b16 %v342
    %v1912 = vunpack.c.l.b16 %v343
    %v1913 = vunpack.c.h.b16 %v343
    %v1914 = vunpack.c.l.b16 %v344
    %v1915 = vunpack.c.h.b16 %v344
    %v1916 = vunpack.c.l.b16 %v345
    %v1917 = vunpack.c.h.b16 %v345
    %v1918 = vunpack.c.l.b16 %v346
    %v1919 = vunpack.c.h.b16 %v346
    %v1920 = vunpack.c.l.b16 %v347
    %v1921 = vunpack.c.h.b16 %v347
    %v1922 = vunpack.c.l.b16 %v348
    %v1923 = vunpack.c.h.b16 %v348
    %v1924 = vunpack.c.l.b16 %v349
    %v1925 = vunpack.c.h.b16 %v349
    %v1926 = vunpack.c.l.b16 %v350
    %v1927 = vunpack.c.h.b16 %v350
    %v1928 = vunpack.c.l.b16 %v351
    %v1929 = vunpack.c.h.b16 %v351
    %v1930 = vunpack.c.l.b16 %v352
    %v1931 = vunpack.c.h.b16 %v352
    %v1932 = vunpack.c.l.b16 %v353
    %v1933 = vunpack.c.h.b16 %v353
    %v1934 = vunpack.c.l.b16 %v354
    %v1935 = vunpack.c.h.b16 %v354
    %v1936 = vunpack.c.l.b16 %v355
    %v1937 = vunpack.c.h.b16 %v355
    %v1938 = vunpack.c.l.b16 %v356
    %v1939 = vunpack.c.h.b16 %v356
    %v1940 = vunpack.c.l.b16 %v357
    %v1941 = vunpack.c.h.b16 %v357
    %v1942 = vunpack.c.l.b16 %v358
    %v1943 = vunpack.c.h.b16 %v358
    %v1944 = vunpack.c.l.b16 %v359
    %v1945 = vunpack.c.h.b16 %v359
    %v1946 = vunpack.c.l.b16 %v360
    %v1947 = vunpack.c.h.b16 %v360
    %v1948 = vunpack.c.l.b16 %v361
    %v1949 = vunpack.c.h.b16 %v361
    %v1950 = vunpack.c.l.b16 %v362
    %v1951 = vunpack.c.h.b16 %v362
    %v1952 = vunpack.c.l.b16 %v363
    %v1953 = vunpack.c.h.b16 %v363
    %v1954 = vunpack.c.l.b16 %v364
    %v1955 = vunpack.c.h.b16 %v364
    %v1956 = vunpack.c.l.b16 %v365
    %v1957 = vunpack.c.h.b16 %v365
    %v1958 = vunpack.c.l.b16 %v366
    %v1959 = vunpack.c.h.b16 %v366
    %v1960 = vunpack.c.l.b16 %v367
    %v1961 = vunpack.c.h.b16 %v367
    %v1962 = vunpack.c.l.b16 %v368
    %v1963 = vunpack.c.h.b16 %v368
    %v1964 = vunpack.c.l.b16 %v369
    %v1965 = vunpack.c.h.b16 %v369
    %v1966 = vunpack.c.l.b16 %v370
    %v1967 = vunpack.c.h.b16 %v370
    %v1968 = vunpack.c.l.b16 %v371
    %v1969 = vunpack.c.h.b16 %v371
    %v1970 = vunpack.c.l.b16 %v372
    %v1971 = vunpack.c.h.b16 %v372
    %v1972 = vunpack.c.l.b16 %v373
    %v1973 = vunpack.c.h.b16 %v373
    %v1974 = vunpack.c.l.b16 %v374
    %v1975 = vunpack.c.h.b16 %v374
    %v1976 = vunpack.c.l.b16 %v375
    %v1977 = vunpack.c.h.b16 %v375
    %v1978 = vunpack.c.l.b16 %v376
    %v1979 = vunpack.c.h.b16 %v376
    %v1980 = vunpack.c.l.b16 %v377
    %v1981 = vunpack.c.h.b16 %v377
    %v1982 = vunpack.c.l.b16 %v378
    %v1983 = vunpack.c.h.b16 %v378
    %v1984 = vunpack.c.l.b16 %v379
    %v1985 = vunpack.c.h.b16 %v379
    %v1986 = vunpack.c.l.b16 %v380
    %v1987 = vunpack.c.h.b16 %v380
    %v1988 = vunpack.c.l.b16 %v381
    %v1989 = vunpack.c.h.b16 %v381
    %v1990 = vunpack.c.l.b16 %v382
    %v1991 = vunpack.c.h.b16 %v382
    %v1992 = vunpack.c.l.b16 %v383
    %v1993 = vunpack.c.h.b16 %v383
    %v1994 = vunpack.c.l.b16 %v384
    %v1995 = vunpack.c.h.b16 %v384
    %v1996 = vunpack.c.l.b16 %v385
    %v1997 = vunpack.c.h.b16 %v385
    %v1998 = vunpack.c.l.b16 %v386
    %v1999 = vunpack.c.h.b16 %v386
    %v2000 = vunpack.c.l.b16 %v387
    %v2001 = vunpack.c.h.b16 %v387
    %v2002 = vunpack.c.l.b16 %v388
    %v2003 = vunpack.c.h.b16 %v388
    %v2004 = vunpack.c.l.b16 %v389
    %v2005 = vunpack.c.h.b16 %v389
    %v2006 = vunpack.c.l.b16 %v390
    %v2007 = vunpack.c.h.b16 %v390
    %v2008 = vunpack.c.l.b16 %v391
    %v2009 = vunpack.c.h.b16 %v391
    %v2010 = vunpack.c.l.b16 %v392
    %v2011 = vunpack.c.h.b16 %v392
    %v2012 = vunpack.c.l.b16 %v393
    %v2013 = vunpack.c.h.b16 %v393
    %v2014 = vunpack.c.l.b16 %v394
    %v2015 = vunpack.c.h.b16 %v394
    %v2016 = vunpack.c.l.b16 %v395
    %v2017 = vunpack.c.h.b16 %v395
    %v2018 = vunpack.c.l.b16 %v396
    %v2019 = vunpack.c.h.b16 %v396
    %v2020 = vunpack.c.l.b16 %v397
    %v2021 = vunpack.c.h.b16 %v397
    %v2022 = vunpack.c.l.b16 %v398
    %v2023 = vunpack.c.h.b16 %v398
    %v2024 = vunpack.c.l.b16 %v399
    %v2025 = vunpack.c.h.b16 %v399
    %v2026 = vunpack.c.l.b16 %v400
    %v2027 = vunpack.c.h.b16 %v400
    %v2028 = vunpack.c.l.b16 %v401
    %v2029 = vunpack.c.h.b16 %v401
    %v2030 = vunpack.c.l.b16 %v402
    %v2031 = vunpack.c.h.b16 %v402
    %v2032 = vunpack.c.l.b16 %v403
    %v2033 = vunpack.c.h.b16 %v403
    %v2034 = vunpack.c.l.b16 %v404
    %v2035 = vunpack.c.h.b16 %v404
    %v2036 = vunpack.c.l.b16 %v405
    %v2037 = vunpack.c.h.b16 %v405
    %v2038 = vunpack.c.l.b16 %v406
    %v2039 = vunpack.c.h.b16 %v406
    %v2040 = vunpack.c.l.b16 %v407
    %v2041 = vunpack.c.h.b16 %v407
    %v2042 = vunpack.c.l.b16 %v408
    %v2043 = vunpack.c.h.b16 %v408
    %v2044 = vunpack.c.l.b16 %v409
    %v2045 = vunpack.c.h.b16 %v409
    %v2046 = vunpack.c.l.b16 %v410
    %v2047 = vunpack.c.h.b16 %v410
    %v2048 = vunpack.c.l.b16 %v411
    %v2049 = vunpack.c.h.b16 %v411
    %v2050 = vunpack.c.l.b16 %v412
    %v2051 = vunpack.c.h.b16 %v412
    %v2052 = vunpack.c.l.b16 %v413
    %v2053 = vunpack.c.h.b16 %v413
    %v2054 = vunpack.c.l.b16 %v414
    %v2055 = vunpack.c.h.b16 %v414
    %v2056 = vunpack.c.l.b16 %v415
    %v2057 = vunpack.c.h.b16 %v415
    %v2058 = vunpack.c.l.b16 %v416
    %v2059 = vunpack.c.h.b16 %v416
    %v2060 = vunpack.c.l.b16 %v417
    %v2061 = vunpack.c.h.b16 %v417
    %v2062 = vunpack.c.l.b16 %v418
    %v2063 = vunpack.c.h.b16 %v418
    %v2064 = vunpack.c.l.b16 %v419
    %v2065 = vunpack.c.h.b16 %v419
    %v2066 = vunpack.c.l.b16 %v420
    %v2067 = vunpack.c.h.b16 %v420
    %v2068 = vunpack.c.l.b16 %v421
    %v2069 = vunpack.c.h.b16 %v421
    %v2070 = vunpack.c.l.b16 %v422
    %v2071 = vunpack.c.h.b16 %v422
    %v2072 = vunpack.c.l.b16 %v423
    %v2073 = vunpack.c.h.b16 %v423
    %v2074 = vunpack.c.l.b16 %v424
    %v2075 = vunpack.c.h.b16 %v424
    %v2076 = vunpack.c.l.b16 %v425
    %v2077 = vunpack.c.h.b16 %v425
    %v2078 = vunpack.c.l.b16 %v426
    %v2079 = vunpack.c.h.b16 %v426
    %v2080 = vunpack.c.l.b16 %v427
    %v2081 = vunpack.c.h.b16 %v427
    %v2082 = vunpack.c.l.b16 %v428
    %v2083 = vunpack.c.h.b16 %v428
    %v2084 = vunpack.c.l.b16 %v429
    %v2085 = vunpack.c.h.b16 %v429
    %v2086 = vunpack.c.l.b16 %v430
    %v2087 = vunpack.c.h.b16 %v430
    %v2088 = vunpack.c.l.b16 %v431
    %v2089 = vunpack.c.h.b16 %v431
    %v2090 = vunpack.c.l.b16 %v432
    %v2091 = vunpack.c.h.b16 %v432
    %v2092 = vunpack.c.l.b16 %v433
    %v2093 = vunpack.c.h.b16 %v433
    %v2094 = vunpack.c.l.b16 %v434
    %v2095 = vunpack.c.h.b16 %v434
    %v2096 = vunpack.c.l.b16 %v435
    %v2097 = vunpack.c.h.b16 %v435
    %v2098 = vunpack.c.l.b16 %v436
    %v2099 = vunpack.c.h.b16 %v436
    %v2100 = vunpack.c.l.b16 %v437
    %v2101 = vunpack.c.h.b16 %v437
    %v2102 = vunpack.c.l.b16 %v438
    %v2103 = vunpack.c.h.b16 %v438
    %v2104 = vunpack.c.l.b16 %v439
    %v2105 = vunpack.c.h.b16 %v439
    %v2106 = vunpack.c.l.b16 %v440
    %v2107 = vunpack.c.h.b16 %v440
    %v2108 = vunpack.c.l.b16 %v441
    %v2109 = vunpack.c.h.b16 %v441
    %v2110 = vunpack.c.l.b16 %v442
    %v2111 = vunpack.c.h.b16 %v442
    %v2112 = vunpack.c.l.b16 %v443
    %v2113 = vunpack.c.h.b16 %v443
    %v2114 = vunpack.c.l.b16 %v444
    %v2115 = vunpack.c.h.b16 %v444
    %v2116 = vunpack.c.l.b16 %v445
    %v2117 = vunpack.c.h.b16 %v445
    %v2118 = vunpack.c.l.b16 %v446
    %v2119 = vunpack.c.h.b16 %v446
    %v2120 = vunpack.c.l.b16 %v447
    %v2121 = vunpack.c.h.b16 %v447
    %v2122 = vunpack.c.l.b16 %v448
    %v2123 = vunpack.c.h.b16 %v448
    %v2124 = vunpack.c.l.b16 %v449
    %v2125 = vunpack.c.h.b16 %v449
    %v2126 = vunpack.c.l.b16 %v450
    %v2127 = vunpack.c.h.b16 %v450
    %v2128 = vunpack.c.l.b16 %v451
    %v2129 = vunpack.c.h.b16 %v451
    %v2130 = vunpack.c.l.b16 %v452
    %v2131 = vunpack.c.h.b16 %v452
    %v2132 = vunpack.c.l.b16 %v453
    %v2133 = vunpack.c.h.b16 %v453
    %v2134 = vunpack.c.l.b16 %v454
    %v2135 = vunpack.c.h.b16 %v454
    %v2136 = vunpack.c.l.b16 %v455
    %v2137 = vunpack.c.h.b16 %v455
    %v2138 = vunpack.c.l.b16 %v456
    %v2139 = vunpack.c.h.b16 %v456
    %v2140 = vunpack.c.l.b16 %v457
    %v2141 = vunpack.c.h.b16 %v457
    %v2142 = vunpack.c.l.b16 %v458
    %v2143 = vunpack.c.h.b16 %v458
    %v2144 = vunpack.c.l.b16 %v459
    %v2145 = vunpack.c.h.b16 %v459
    %v2146 = vunpack.c.l.b16 %v460
    %v2147 = vunpack.c.h.b16 %v460
    %v2148 = vunpack.c.l.b16 %v461
    %v2149 = vunpack.c.h.b16 %v461
    %v2150 = vunpack.c.l.b16 %v462
    %v2151 = vunpack.c.h.b16 %v462
    %v2152 = vunpack.c.l.b16 %v463
    %v2153 = vunpack.c.h.b16 %v463
    %v2154 = vunpack.c.l.b16 %v464
    %v2155 = vunpack.c.h.b16 %v464
    %v2156 = vunpack.c.l.b16 %v465
    %v2157 = vunpack.c.h.b16 %v465
    %v2158 = vunpack.c.l.b16 %v466
    %v2159 = vunpack.c.h.b16 %v466
    %v2160 = vunpack.c.l.b16 %v467
    %v2161 = vunpack.c.h.b16 %v467
    %v2162 = vunpack.c.l.b16 %v468
    %v2163 = vunpack.c.h.b16 %v468
    %v2164 = vunpack.c.l.b16 %v469
    %v2165 = vunpack.c.h.b16 %v469
    %v2166 = vunpack.c.l.b16 %v470
    %v2167 = vunpack.c.h.b16 %v470
    %v2168 = vunpack.c.l.b16 %v471
    %v2169 = vunpack.c.h.b16 %v471
    %v2170 = vunpack.c.l.b16 %v472
    %v2171 = vunpack.c.h.b16 %v472
    %v2172 = vunpack.c.l.b16 %v473
    %v2173 = vunpack.c.h.b16 %v473
    %v2174 = vunpack.c.l.b16 %v474
    %v2175 = vunpack.c.h.b16 %v474
    %v2176 = vunpack.c.l.b16 %v475
    %v2177 = vunpack.c.h.b16 %v475
    %v2178 = vunpack.c.l.b16 %v476
    %v2179 = vunpack.c.h.b16 %v476
    %v2180 = vunpack.c.l.b16 %v477
    %v2181 = vunpack.c.h.b16 %v477
    %v2182 = vunpack.c.l.b16 %v478
    %v2183 = vunpack.c.h.b16 %v478
    %v2184 = vunpack.c.l.b16 %v479
    %v2185 = vunpack.c.h.b16 %v479
    %v2186 = vunpack.c.l.b16 %v480
    %v2187 = vunpack.c.h.b16 %v480
    %v2188 = vunpack.c.l.b16 %v481
    %v2189 = vunpack.c.h.b16 %v481
    %v2190 = vunpack.c.l.b16 %v482
    %v2191 = vunpack.c.h.b16 %v482
    %v2192 = vunpack.c.l.b16 %v483
    %v2193 = vunpack.c.h.b16 %v483
    %v2194 = vunpack.c.l.b16 %v484
    %v2195 = vunpack.c.h.b16 %v484
    %v2196 = vunpack.c.l.b16 %v485
    %v2197 = vunpack.c.h.b16 %v485
    %v2198 = vunpack.c.l.b16 %v486
    %v2199 = vunpack.c.h.b16 %v486
    %v2200 = vunpack.c.l.b16 %v487
    %v2201 = vunpack.c.h.b16 %v487
    %v2202 = vunpack.c.l.b16 %v488
    %v2203 = vunpack.c.h.b16 %v488
    %v2204 = vunpack.c.l.b16 %v489
    %v2205 = vunpack.c.h.b16 %v489
    %v2206 = vunpack.c.l.b16 %v490
    %v2207 = vunpack.c.h.b16 %v490
    %v2208 = vunpack.c.l.b16 %v491
    %v2209 = vunpack.c.h.b16 %v491
    %v2210 = vunpack.c.l.b16 %v492
    %v2211 = vunpack.c.h.b16 %v492
    %v2212 = vunpack.c.l.b16 %v493
    %v2213 = vunpack.c.h.b16 %v493
    %v2214 = vunpack.c.l.b16 %v494
    %v2215 = vunpack.c.h.b16 %v494
    %v2216 = vunpack.c.l.b16 %v495
    %v2217 = vunpack.c.h.b16 %v495
    %v2218 = vunpack.c.l.b16 %v496
    %v2219 = vunpack.c.h.b16 %v496
    %v2220 = vunpack.c.l.b16 %v497
    %v2221 = vunpack.c.h.b16 %v497
    %v2222 = vunpack.c.l.b16 %v498
    %v2223 = vunpack.c.h.b16 %v498
    %v2224 = vunpack.c.l.b16 %v499
    %v2225 = vunpack.c.h.b16 %v499
    %v2226 = vunpack.c.l.b16 %v500
    %v2227 = vunpack.c.h.b16 %v500
    %v2228 = vunpack.c.l.b16 %v501
    %v2229 = vunpack.c.h.b16 %v501
    %v2230 = vunpack.c.l.b16 %v502
    %v2231 = vunpack.c.h.b16 %v502
    %v2232 = vunpack.c.l.b16 %v503
    %v2233 = vunpack.c.h.b16 %v503
    %v2234 = vunpack.c.l.b16 %v504
    %v2235 = vunpack.c.h.b16 %v504
    %v2236 = vunpack.c.l.b16 %v505
    %v2237 = vunpack.c.h.b16 %v505
    %v2238 = vunpack.c.l.b16 %v506
    %v2239 = vunpack.c.h.b16 %v506
    %v2240 = vunpack.c.l.b16 %v507
    %v2241 = vunpack.c.h.b16 %v507
    %v2242 = vunpack.c.l.b16 %v508
    %v2243 = vunpack.c.h.b16 %v508
    %v2244 = vunpack.c.l.b16 %v509
    %v2245 = vunpack.c.h.b16 %v509
    %v2246 = vunpack.c.l.b16 %v510
    %v2247 = vunpack.c.h.b16 %v510
    %v2248 = vunpack.c.l.b16 %v511
    %v2249 = vunpack.c.h.b16 %v511
    %v2250 = vunpack.c.l.b16 %v512
    %v2251 = vunpack.c.h.b16 %v512
    %v2252 = vunpack.c.l.b16 %v513
    %v2253 = vunpack.c.h.b16 %v513
    %v2254 = vunpack.c.l.b16 %v514
    %v2255 = vunpack.c.h.b16 %v514
    %v2256 = vunpack.c.l.b16 %v515
    %v2257 = vunpack.c.h.b16 %v515
    %v2258 = vunpack.c.l.b16 %v516
    %v2259 = vunpack.c.h.b16 %v516
    %v2260 = vunpack.c.l.b16 %v517
    %v2261 = vunpack.c.h.b16 %v517
    %v2262 = vunpack.c.l.b16 %v518
    %v2263 = vunpack.c.h.b16 %v518
    %v2264 = vunpack.c.l.b16 %v519
    %v2265 = vunpack.c.h.b16 %v519
    %v2266 = vunpack.c.l.b16 %v520
    %v2267 = vunpack.c.h.b16 %v520
    %v2268 = vunpack.c.l.b16 %v521
    %v2269 = vunpack.c.h.b16 %v521
    %v2270 = vunpack.c.l.b16 %v522
    %v2271 = vunpack.c.h.b16 %v522
    %v2272 = vunpack.c.l.b16 %v523
    %v2273 = vunpack.c.h.b16 %v523
    %v2274 = vunpack.c.l.b16 %v524
    %v2275 = vunpack.c.h.b16 %v524
    %v2276 = vunpack.c.l.b16 %v525
    %v2277 = vunpack.c.h.b16 %v525
    %v2278 = vunpack.c.l.b16 %v526
    %v2279 = vunpack.c.h.b16 %v526
    %v2280 = vunpack.c.l.b16 %v527
    %v2281 = vunpack.c.h.b16 %v527
    %v2282 = vunpack.c.l.b16 %v528
    %v2283 = vunpack.c.h.b16 %v528
    %v2284 = vunpack.c.l.b16 %v529
    %v2285 = vunpack.c.h.b16 %v529
    %v2286 = vunpack.c.l.b16 %v530
    %v2287 = vunpack.c.h.b16 %v530
    %v2288 = vunpack.c.l.b16 %v531
    %v2289 = vunpack.c.h.b16 %v531
    %v2290 = vunpack.c.l.b16 %v532
    %v2291 = vunpack.c.h.b16 %v532
    %v2292 = vunpack.c.l.b16 %v533
    %v2293 = vunpack.c.h.b16 %v533
    %v2294 = vunpack.c.l.b16 %v534
    %v2295 = vunpack.c.h.b16 %v534
    %v2296 = vunpack.c.l.b16 %v535
    %v2297 = vunpack.c.h.b16 %v535
    %v2298 = vunpack.c.l.b16 %v536
    %v2299 = vunpack.c.h.b16 %v536
    %v2300 = vunpack.c.l.b16 %v537
    %v2301 = vunpack.c.h.b16 %v537
    %v2302 = vunpack.c.l.b16 %v538
    %v2303 = vunpack.c.h.b16 %v538
    %v2304 = vunpack.c.l.b16 %v539
    %v2305 = vunpack.c.h.b16 %v539
    %v2306 = vunpack.c.l.b16 %v540
    %v2307 = vunpack.c.h.b16 %v540
    %v2308 = vunpack.c.l.b16 %v541
    %v2309 = vunpack.c.h.b16 %v541
    %v2310 = vunpack.c.l.b16 %v542
    %v2311 = vunpack.c.h.b16 %v542
    %v2312 = vunpack.c.l.b16 %v543
    %v2313 = vunpack.c.h.b16 %v543
    %v2314 = vunpack.c.l.b16 %v544
    %v2315 = vunpack.c.h.b16 %v544
    %v2316 = vunpack.c.l.b16 %v545
    %v2317 = vunpack.c.h.b16 %v545
    %v2318 = vunpack.c.l.b16 %v546
    %v2319 = vunpack.c.h.b16 %v546
    %v2320 = vunpack.c.l.b16 %v547
    %v2321 = vunpack.c.h.b16 %v547
    %v2322 = vunpack.c.l.b16 %v548
    %v2323 = vunpack.c.h.b16 %v548
    %v2324 = vunpack.c.l.b16 %v549
    %v2325 = vunpack.c.h.b16 %v549
    %v2326 = vunpack.c.l.b16 %v550
    %v2327 = vunpack.c.h.b16 %v550
    %v2328 = vunpack.c.l.b16 %v551
    %v2329 = vunpack.c.h.b16 %v551
    %v2330 = vunpack.c.l.b16 %v552
    %v2331 = vunpack.c.h.b16 %v552
    %v2332 = vunpack.c.l.b16 %v553
    %v2333 = vunpack.c.h.b16 %v553
    %v2334 = vunpack.c.l.b16 %v554
    %v2335 = vunpack.c.h.b16 %v554
    %v2336 = vunpack.c.l.b16 %v555
    %v2337 = vunpack.c.h.b16 %v555
    %v2338 = vunpack.c.l.b16 %v556
    %v2339 = vunpack.c.h.b16 %v556
    %v2340 = vunpack.c.l.b16 %v557
    %v2341 = vunpack.c.h.b16 %v557
    %v2342 = vunpack.c.l.b16 %v558
    %v2343 = vunpack.c.h.b16 %v558
    %v2344 = vunpack.c.l.b16 %v559
    %v2345 = vunpack.c.h.b16 %v559
    %v2346 = vunpack.c.l.b16 %v560
    %v2347 = vunpack.c.h.b16 %v560
    %v2348 = vunpack.c.l.b16 %v561
    %v2349 = vunpack.c.h.b16 %v561
    %v2350 = vunpack.c.l.b16 %v562
    %v2351 = vunpack.c.h.b16 %v562
    %v2352 = vunpack.c.l.b16 %v563
    %v2353 = vunpack.c.h.b16 %v563
    %v2354 = vunpack.c.l.b16 %v564
    %v2355 = vunpack.c.h.b16 %v564
    %v2356 = vunpack.c.l.b16 %v565
    %v2357 = vunpack.c.h.b16 %v565
    %v2358 = vunpack.c.l.b16 %v566
    %v2359 = vunpack.c.h.b16 %v566
    %v2360 = vunpack.c.l.b16 %v567
    %v2361 = vunpack.c.h.b16 %v567
    %v2362 = vunpack.c.l.b16 %v568
    %v2363 = vunpack.c.h.b16 %v568
    %v2364 = vunpack.c.l.b16 %v569
    %v2365 = vunpack.c.h.b16 %v569
    %v2366 = vunpack.c.l.b16 %v570
    %v2367 = vunpack.c.h.b16 %v570
    %v2368 = vunpack.c.l.b16 %v571
    %v2369 = vunpack.c.h.b16 %v571
    %v2370 = vunpack.c.l.b16 %v572
    %v2371 = vunpack.c.h.b16 %v572
    %v2372 = vunpack.c.l.b16 %v573
    %v2373 = vunpack.c.h.b16 %v573
    %v2374 = vunpack.c.l.b16 %v574
    %v2375 = vunpack.c.h.b16 %v574
    %v2376 = vunpack.c.l.b16 %v575
    %v2377 = vunpack.c.h.b16 %v575
    %v2378 = vunpack.c.l.b16 %v576
    %v2379 = vunpack.c.h.b16 %v576
    %v2380 = vunpack.c.l.b16 %v577
    %v2381 = vunpack.c.h.b16 %v577
    %v2382 = vunpack.c.l.b16 %v578
    %v2383 = vunpack.c.h.b16 %v578
    %v2384 = vunpack.c.l.b16 %v579
    %v2385 = vunpack.c.h.b16 %v579
    %v2386 = vunpack.c.l.b16 %v580
    %v2387 = vunpack.c.h.b16 %v580
    %v2388 = vunpack.c.l.b16 %v581
    %v2389 = vunpack.c.h.b16 %v581
    %v2390 = vunpack.c.l.b16 %v582
    %v2391 = vunpack.c.h.b16 %v582
    %v2392 = vunpack.c.l.b16 %v583
    %v2393 = vunpack.c.h.b16 %v583
    %v2394 = vunpack.c.l.b16 %v584
    %v2395 = vunpack.c.h.b16 %v584
    %v2396 = vunpack.c.l.b16 %v585
    %v2397 = vunpack.c.h.b16 %v585
    %v2398 = vunpack.c.l.b16 %v586
    %v2399 = vunpack.c.h.b16 %v586
    %v2400 = vunpack.c.l.b16 %v587
    %v2401 = vunpack.c.h.b16 %v587
    %v2402 = vunpack.c.l.b16 %v588
    %v2403 = vunpack.c.h.b16 %v588
    %v2404 = vunpack.c.l.b16 %v589
    %v2405 = vunpack.c.h.b16 %v589
    %v2406 = vunpack.c.l.b16 %v590
    %v2407 = vunpack.c.h.b16 %v590
    %v2408 = vunpack.c.l.b16 %v591
    %v2409 = vunpack.c.h.b16 %v591
    %v2410 = vunpack.c.l.b16 %v592
    %v2411 = vunpack.c.h.b16 %v592
    %v2412 = vunpack.c.l.b16 %v593
    %v2413 = vunpack.c.h.b16 %v593
    %v2414 = vunpack.c.l.b16 %v594
    %v2415 = vunpack.c.h.b16 %v594
    %v2416 = vunpack.c.l.b16 %v595
    %v2417 = vunpack.c.h.b16 %v595
    %v2418 = vunpack.c.l.b16 %v596
    %v2419 = vunpack.c.h.b16 %v596
    %v2420 = vunpack.c.l.b16 %v597
    %v2421 = vunpack.c.h.b16 %v597
    %v2422 = vunpack.c.l.b16 %v598
    %v2423 = vunpack.c.h.b16 %v598
    %v2424 = vunpack.c.l.b16 %v599
    %v2425 = vunpack.c.h.b16 %v599
    %v2426 = vunpack.c.l.b16 %v600
    %v2427 = vunpack.c.h.b16 %v600
    %v2428 = vunpack.c.l.b16 %v601
    %v2429 = vunpack.c.h.b16 %v601
    %v2430 = vunpack.c.l.b16 %v602
    %v2431 = vunpack.c.h.b16 %v602
    %v2432 = vunpack.c.l.b16 %v603
    %v2433 = vunpack.c.h.b16 %v603
    %v2434 = vunpack.c.l.b16 %v604
    %v2435 = vunpack.c.h.b16 %v604
    %v2436 = vunpack.c.l.b16 %v605
    %v2437 = vunpack.c.h.b16 %v605
    %v2438 = vunpack.c.l.b16 %v606
    %v2439 = vunpack.c.h.b16 %v606
    %v2440 = vunpack.c.l.b16 %v607
    %v2441 = vunpack.c.h.b16 %v607
    %v2442 = vunpack.c.l.b16 %v608
    %v2443 = vunpack.c.h.b16 %v608
    %v2444 = vunpack.c.l.b16 %v609
    %v2445 = vunpack.c.h.b16 %v609
    %v2446 = vunpack.c.l.b16 %v610
    %v2447 = vunpack.c.h.b16 %v610
    %v2448 = vunpack.c.l.b16 %v611
    %v2449 = vunpack.c.h.b16 %v611
    %v2450 = vunpack.c.l.b16 %v612
    %v2451 = vunpack.c.h.b16 %v612
    %v2452 = vunpack.c.l.b16 %v613
    %v2453 = vunpack.c.h.b16 %v613
    %v2454 = vunpack.c.l.b16 %v614
    %v2455 = vunpack.c.h.b16 %v614
    %v2456 = vunpack.c.l.b16 %v615
    %v2457 = vunpack.c.h.b16 %v615
    %v2458 = vunpack.c.l.b16 %v616
    %v2459 = vunpack.c.h.b16 %v616
    %v2460 = vunpack.c.l.b16 %v617
    %v2461 = vunpack.c.h.b16 %v617
    %v2462 = vunpack.c.l.b16 %v618
    %v2463 = vunpack.c.h.b16 %v618
    %v2464 = vunpack.c.l.b16 %v619
    %v2465 = vunpack.c.h.b16 %v619
    %v2466 = vunpack.c.l.b16 %v620
    %v2467 = vunpack.c.h.b16 %v620
    %v2468 = vunpack.c.l.b16 %v621
    %v2469 = vunpack.c.h.b16 %v621
    %v2470 = vunpack.c.l.b16 %v622
    %v2471 = vunpack.c.h.b16 %v622
    %v2472 = vunpack.c.l.b16 %v623
    %v2473 = vunpack.c.h.b16 %v623
    %v2474 = vunpack.c.l.b16 %v624
    %v2475 = vunpack.c.h.b16 %v624
    %v2476 = vunpack.c.l.b16 %v625
    %v2477 = vunpack.c.h.b16 %v625
    %v2478 = vunpack.c.l.b16 %v626
    %v2479 = vunpack.c.h.b16 %v626
    %v2480 = vunpack.c.l.b16 %v627
    %v2481 = vunpack.c.h.b16 %v627
    %v2482 = vunpack.c.l.b16 %v628
    %v2483 = vunpack.c.h.b16 %v628
    %v2484 = vunpack.c.l.b16 %v629
    %v2485 = vunpack.c.h.b16 %v629
    %v2486 = vunpack.c.l.b16 %v630
    %v2487 = vunpack.c.h.b16 %v630
    %v2488 = vunpack.c.l.b16 %v631
    %v2489 = vunpack.c.h.b16 %v631
    %v2490 = vunpack.c.l.b16 %v632
    %v2491 = vunpack.c.h.b16 %v632
    %v2492 = vunpack.c.l.b16 %v633
    %v2493 = vunpack.c.h.b16 %v633
    %v2494 = vunpack.c.l.b16 %v634
    %v2495 = vunpack.c.h.b16 %v634
    %v2496 = vunpack.c.l.b16 %v635
    %v2497 = vunpack.c.h.b16 %v635
    %v2498 = vunpack.c.l.b16 %v636
    %v2499 = vunpack.c.h.b16 %v636
    %v2500 = vunpack.c.l.b16 %v637
    %v2501 = vunpack.c.h.b16 %v637
    %v2502 = vunpack.c.l.b16 %v638
    %v2503 = vunpack.c.h.b16 %v638
    %v2504 = vunpack.c.l.b16 %v639
    %v2505 = vunpack.c.h.b16 %v639
    %v2506 = vunpack.c.l.b16 %v640
    %v2507 = vunpack.c.h.b16 %v640
    %v2508 = vunpack.c.l.b16 %v641
    %v2509 = vunpack.c.h.b16 %v641
    %v2510 = vunpack.c.l.b16 %v642
    %v2511 = vunpack.c.h.b16 %v642
    %v2512 = vunpack.c.l.b16 %v643
    %v2513 = vunpack.c.h.b16 %v643
    %v2514 = vunpack.c.l.b16 %v644
    %v2515 = vunpack.c.h.b16 %v644
    %v2516 = vunpack.c.l.b16 %v645
    %v2517 = vunpack.c.h.b16 %v645
    %v2518 = vunpack.c.l.b16 %v646
    %v2519 = vunpack.c.h.b16 %v646
    %v2520 = vunpack.c.l.b16 %v647
    %v2521 = vunpack.c.h.b16 %v647
    %v2522 = vunpack.c.l.b16 %v648
    %v2523 = vunpack.c.h.b16 %v648
    %v2524 = vunpack.c.l.b16 %v649
    %v2525 = vunpack.c.h.b16 %v649
    %v2526 = vunpack.c.l.b16 %v650
    %v2527 = vunpack.c.h.b16 %v650
    %v2528 = vunpack.c.l.b16 %v651
    %v2529 = vunpack.c.h.b16 %v651
    %v2530 = vunpack.c.l.b16 %v652
    %v2531 = vunpack.c.h.b16 %v652
    %v2532 = vunpack.c.l.b16 %v653
    %v2533 = vunpack.c.h.b16 %v653
    %v2534 = vunpack.c.l.b16 %v654
    %v2535 = vunpack.c.h.b16 %v654
    %v2536 = vunpack.c.l.b16 %v655
    %v2537 = vunpack.c.h.b16 %v655
    %v2538 = vunpack.c.l.b16 %v656
    %v2539 = vunpack.c.h.b16 %v656
    %v2540 = vunpack.c.l.b16 %v657
    %v2541 = vunpack.c.h.b16 %v657
    %v2542 = vunpack.c.l.b16 %v658
    %v2543 = vunpack.c.h.b16 %v658
    %v2544 = vunpack.c.l.b16 %v659
    %v2545 = vunpack.c.h.b16 %v659
    %v2546 = vunpack.c.l.b16 %v660
    %v2547 = vunpack.c.h.b16 %v660
    %v2548 = vunpack.c.l.b16 %v661
    %v2549 = vunpack.c.h.b16 %v661
    %v2550 = vunpack.c.l.b16 %v662
    %v2551 = vunpack.c.h.b16 %v662
    %v2552 = vunpack.c.l.b16 %v663
    %v2553 = vunpack.c.h.b16 %v663
    %v2554 = vunpack.c.l.b16 %v664
    %v2555 = vunpack.c.h.b16 %v664
    %v2556 = vunpack.c.l.b16 %v665
    %v2557 = vunpack.c.h.b16 %v665
    %v2558 = vunpack.c.l.b16 %v666
    %v2559 = vunpack.c.h.b16 %v666
    %v2560 = vunpack.c.l.b16 %v667
    %v2561 = vunpack.c.h.b16 %v667
    %v2562 = vunpack.c.l.b16 %v668
    %v2563 = vunpack.c.h.b16 %v668
    %v2564 = vunpack.c.l.b16 %v669
    %v2565 = vunpack.c.h.b16 %v669
    %v2566 = vunpack.c.l.b16 %v670
    %v2567 = vunpack.c.h.b16 %v670
    %v2568 = vunpack.c.l.b16 %v671
    %v2569 = vunpack.c.h.b16 %v671
    %v2570 = vunpack.c.l.b16 %v672
    %v2571 = vunpack.c.h.b16 %v672
    %v2572 = vunpack.c.l.b16 %v673
    %v2573 = vunpack.c.h.b16 %v673
    %v2574 = vunpack.c.l.b16 %v674
    %v2575 = vunpack.c.h.b16 %v674
    %v2576 = vunpack.c.l.b16 %v675
    %v2577 = vunpack.c.h.b16 %v675
    %v2578 = vunpack.c.l.b16 %v676
    %v2579 = vunpack.c.h.b16 %v676
    %v2580 = vunpack.c.l.b16 %v677
    %v2581 = vunpack.c.h.b16 %v677
    %v2582 = vunpack.c.l.b16 %v678
    %v2583 = vunpack.c.h.b16 %v678
    %v2584 = vunpack.c.l.b16 %v679
    %v2585 = vunpack.c.h.b16 %v679
    %v2586 = vunpack.c.l.b16 %v680
    %v2587 = vunpack.c.h.b16 %v680
    %v2588 = vunpack.c.l.b16 %v681
    %v2589 = vunpack.c.h.b16 %v681
    %v2590 = vunpack.c.l.b16 %v682
    %v2591 = vunpack.c.h.b16 %v682
    %v2592 = vunpack.c.l.b16 %v683
    %v2593 = vunpack.c.h.b16 %v683
    %v2594 = vunpack.c.l.b16 %v684
    %v2595 = vunpack.c.h.b16 %v684
    %v2596 = vunpack.c.l.b16 %v685
    %v2597 = vunpack.c.h.b16 %v685
    %v2598 = vunpack.c.l.b16 %v686
    %v2599 = vunpack.c.h.b16 %v686
    %v2600 = vunpack.c.l.b16 %v687
    %v2601 = vunpack.c.h.b16 %v687
    %v2602 = vunpack.c.l.b16 %v688
    %v2603 = vunpack.c.h.b16 %v688
    %v2604 = vunpack.c.l.b16 %v689
    %v2605 = vunpack.c.h.b16 %v689
    %v2606 = vunpack.c.l.b16 %v690
    %v2607 = vunpack.c.h.b16 %v690
    %v2608 = vunpack.c.l.b16 %v691
    %v2609 = vunpack.c.h.b16 %v691
    %v2610 = vunpack.c.l.b16 %v692
    %v2611 = vunpack.c.h.b16 %v692
    %v2612 = vunpack.c.l.b16 %v693
    %v2613 = vunpack.c.h.b16 %v693
    %v2614 = vunpack.c.l.b16 %v694
    %v2615 = vunpack.c.h.b16 %v694
    %v2616 = vunpack.c.l.b16 %v695
    %v2617 = vunpack.c.h.b16 %v695
    %v2618 = vunpack.c.l.b16 %v696
    %v2619 = vunpack.c.h.b16 %v696
    %v2620 = vunpack.c.l.b16 %v697
    %v2621 = vunpack.c.h.b16 %v697
    %v2622 = vunpack.c.l.b16 %v698
    %v2623 = vunpack.c.h.b16 %v698
    %v2624 = vunpack.c.l.b16 %v699
    %v2625 = vunpack.c.h.b16 %v699
    %v2626 = vunpack.c.l.b16 %v700
    %v2627 = vunpack.c.h.b16 %v700
    %v2628 = vunpack.c.l.b16 %v701
    %v2629 = vunpack.c.h.b16 %v701
    %v2630 = vunpack.c.l.b16 %v702
    %v2631 = vunpack.c.h.b16 %v702
    %v2632 = vunpack.c.l.b16 %v703
    %v2633 = vunpack.c.h.b16 %v703
    %v2634 = vunpack.c.l.b16 %v704
    %v2635 = vunpack.c.h.b16 %v704
    %v2636 = vunpack.c.l.b16 %v705
    %v2637 = vunpack.c.h.b16 %v705
    %v2638 = vunpack.c.l.b16 %v706
    %v2639 = vunpack.c.h.b16 %v706
    %v2640 = vunpack.c.l.b16 %v707
    %v2641 = vunpack.c.h.b16 %v707
    %v2642 = vunpack.c.l.b16 %v708
    %v2643 = vunpack.c.h.b16 %v708
    %v2644 = vunpack.c.l.b16 %v709
    %v2645 = vunpack.c.h.b16 %v709
    %v2646 = vunpack.c.l.b16 %v710
    %v2647 = vunpack.c.h.b16 %v710
    %v2648 = vunpack.c.l.b16 %v711
    %v2649 = vunpack.c.h.b16 %v711
    %v2650 = vunpack.c.l.b16 %v712
    %v2651 = vunpack.c.h.b16 %v712
    %v2652 = vunpack.c.l.b16 %v713
    %v2653 = vunpack.c.h.b16 %v713
    %v2654 = vunpack.c.l.b16 %v714
    %v2655 = vunpack.c.h.b16 %v714
    %v2656 = vunpack.c.l.b16 %v715
    %v2657 = vunpack.c.h.b16 %v715
    %v2658 = vunpack.c.l.b16 %v716
    %v2659 = vunpack.c.h.b16 %v716
    %v2660 = vunpack.c.l.b16 %v717
    %v2661 = vunpack.c.h.b16 %v717
    %v2662 = vunpack.c.l.b16 %v718
    %v2663 = vunpack.c.h.b16 %v718
    %v2664 = vunpack.c.l.b16 %v719
    %v2665 = vunpack.c.h.b16 %v719
    %v2666 = vunpack.c.l.b16 %v720
    %v2667 = vunpack.c.h.b16 %v720
    %v2668 = vunpack.c.l.b16 %v721
    %v2669 = vunpack.c.h.b16 %v721
    %v2670 = vunpack.c.l.b16 %v722
    %v2671 = vunpack.c.h.b16 %v722
    %v2672 = vunpack.c.l.b16 %v723
    %v2673 = vunpack.c.h.b16 %v723
    %v2674 = vunpack.c.l.b16 %v724
    %v2675 = vunpack.c.h.b16 %v724
    %v2676 = vunpack.c.l.b16 %v725
    %v2677 = vunpack.c.h.b16 %v725
    %v2678 = vunpack.c.l.b16 %v726
    %v2679 = vunpack.c.h.b16 %v726
    %v2680 = vunpack.c.l.b16 %v727
    %v2681 = vunpack.c.h.b16 %v727
    %v2682 = vunpack.c.l.b16 %v728
    %v2683 = vunpack.c.h.b16 %v728
    %v2684 = vunpack.c.l.b16 %v729
    %v2685 = vunpack.c.h.b16 %v729
    %v2686 = vunpack.c.l.b16 %v730
    %v2687 = vunpack.c.h.b16 %v730
    %v2688 = vunpack.c.l.b16 %v731
    %v2689 = vunpack.c.h.b16 %v731
    %v2690 = vunpack.c.l.b16 %v732
    %v2691 = vunpack.c.h.b16 %v732
    %v2692 = vunpack.c.l.b16 %v733
    %v2693 = vunpack.c.h.b16 %v733
    %v2694 = vunpack.c.l.b16 %v734
    %v2695 = vunpack.c.h.b16 %v734
    %v2696 = vunpack.c.l.b16 %v735
    %v2697 = vunpack.c.h.b16 %v735
    %v2698 = vunpack.c.l.b16 %v736
    %v2699 = vunpack.c.h.b16 %v736
    %v2700 = vunpack.c.l.b16 %v737
    %v2701 = vunpack.c.h.b16 %v737
    %v2702 = vunpack.c.l.b16 %v738
    %v2703 = vunpack.c.h.b16 %v738
    %v2704 = vunpack.c.l.b16 %v739
    %v2705 = vunpack.c.h.b16 %v739
    %v2706 = vunpack.c.l.b16 %v740
    %v2707 = vunpack.c.h.b16 %v740
    %v2708 = vunpack.c.l.b16 %v741
    %v2709 = vunpack.c.h.b16 %v741
    %v2710 = vunpack.c.l.b16 %v742
    %v2711 = vunpack.c.h.b16 %v742
    %v2712 = vunpack.c.l.b16 %v743
    %v2713 = vunpack.c.h.b16 %v743
    %v2714 = vunpack.c.l.b16 %v744
    %v2715 = vunpack.c.h.b16 %v744
    %v2716 = vunpack.c.l.b16 %v745
    %v2717 = vunpack.c.h.b16 %v745
    %v2718 = vunpack.c.l.b16 %v746
    %v2719 = vunpack.c.h.b16 %v746
    %v2720 = vunpack.c.l.b16 %v747
    %v2721 = vunpack.c.h.b16 %v747
    %v2722 = vunpack.c.l.b16 %v748
    %v2723 = vunpack.c.h.b16 %v748
    %v2724 = vunpack.c.l.b16 %v749
    %v2725 = vunpack.c.h.b16 %v749
    %v2726 = vunpack.c.l.b16 %v750
    %v2727 = vunpack.c.h.b16 %v750
    %v2728 = vunpack.c.l.b16 %v751
    %v2729 = vunpack.c.h.b16 %v751
    %v2730 = vunpack.c.l.b16 %v752
    %v2731 = vunpack.c.h.b16 %v752
    %v2732 = vunpack.c.l.b16 %v753
    %v2733 = vunpack.c.h.b16 %v753
    %v2734 = vunpack.c.l.b16 %v754
    %v2735 = vunpack.c.h.b16 %v754
    %v2736 = vunpack.c.l.b16 %v755
    %v2737 = vunpack.c.h.b16 %v755
    %v2738 = vunpack.c.l.b16 %v756
    %v2739 = vunpack.c.h.b16 %v756
    %v2740 = vunpack.c.l.b16 %v757
    %v2741 = vunpack.c.h.b16 %v757
    %v2742 = vunpack.c.l.b16 %v758
    %v2743 = vunpack.c.h.b16 %v758
    %v2744 = vunpack.c.l.b16 %v759
    %v2745 = vunpack.c.h.b16 %v759
    %v2746 = vunpack.c.l.b16 %v760
    %v2747 = vunpack.c.h.b16 %v760
    %v2748 = vunpack.c.l.b16 %v761
    %v2749 = vunpack.c.h.b16 %v761
    %v2750 = vunpack.c.l.b16 %v762
    %v2751 = vunpack.c.h.b16 %v762
    %v2752 = vunpack.c.l.b16 %v763
    %v2753 = vunpack.c.h.b16 %v763
    %v2754 = vunpack.c.l.b16 %v764
    %v2755 = vunpack.c.h.b16 %v764
    %v2756 = vunpack.c.l.b16 %v765
    %v2757 = vunpack.c.h.b16 %v765
    %v2758 = vunpack.c.l.b16 %v766
    %v2759 = vunpack.c.h.b16 %v766
    %v2760 = vunpack.c.l.b16 %v767
    %v2761 = vunpack.c.h.b16 %v767
    %v2762 = vunpack.c.l.b16 %v768
    %v2763 = vunpack.c.h.b16 %v768
    %v2764 = vunpack.c.l.b16 %v769
    %v2765 = vunpack.c.h.b16 %v769
    %v2766 = vunpack.c.l.b16 %v770
    %v2767 = vunpack.c.h.b16 %v770
    %v2768 = vunpack.c.l.b16 %v771
    %v2769 = vunpack.c.h.b16 %v771
    %v2770 = vunpack.c.l.b16 %v772
    %v2771 = vunpack.c.h.b16 %v772
    %v2772 = vunpack.c.l.b16 %v773
    %v2773 = vunpack.c.h.b16 %v773
    %v2774 = vunpack.c.l.b16 %v774
    %v2775 = vunpack.c.h.b16 %v774
    %v2776 = vunpack.c.l.b16 %v775
    %v2777 = vunpack.c.h.b16 %v775
    %v2778 = vunpack.c.l.b16 %v776
    %v2779 = vunpack.c.h.b16 %v776
    %v2780 = vunpack.c.l.b16 %v777
    %v2781 = vunpack.c.h.b16 %v777
    %v2782 = vunpack.c.l.b16 %v778
    %v2783 = vunpack.c.h.b16 %v778
    %v2784 = vunpack.c.l.b16 %v779
    %v2785 = vunpack.c.h.b16 %v779
    %v2786 = vunpack.c.l.b16 %v780
    %v2787 = vunpack.c.h.b16 %v780
    %v2788 = vunpack.c.l.b16 %v781
    %v2789 = vunpack.c.h.b16 %v781
    %v2790 = vunpack.c.l.b16 %v782
    %v2791 = vunpack.c.h.b16 %v782
    %v2792 = vunpack.c.l.b16 %v783
    %v2793 = vunpack.c.h.b16 %v783
    %v2794 = vunpack.c.l.b16 %v784
    %v2795 = vunpack.c.h.b16 %v784
    %v2796 = vunpack.c.l.b16 %v785
    %v2797 = vunpack.c.h.b16 %v785
    %v2798 = vunpack.c.l.b16 %v786
    %v2799 = vunpack.c.h.b16 %v786
    %v2800 = vunpack.c.l.b16 %v787
    %v2801 = vunpack.c.h.b16 %v787
    %v2802 = vunpack.c.l.b16 %v788
    %v2803 = vunpack.c.h.b16 %v788
    %v2804 = vunpack.c.l.b16 %v789
    %v2805 = vunpack.c.h.b16 %v789
    %v2806 = vunpack.c.l.b16 %v790
    %v2807 = vunpack.c.h.b16 %v790
    %v2808 = vunpack.c.l.b16 %v791
    %v2809 = vunpack.c.h.b16 %v791
    %v2810 = vunpack.c.l.b16 %v792
    %v2811 = vunpack.c.h.b16 %v792
    %v2812 = vunpack.c.l.b16 %v793
    %v2813 = vunpack.c.h.b16 %v793
    %v2814 = vpack.c.b16 %v1538, %v1534
    %v2815 = vpack.c.b16 %v1539, %v1535
    %v2816 = vpack.c.b16 %v1540, %v1536
    %v2817 = vpack.c.b16 %v1541, %v1537
    %v2818 = vpack.c.b16 %v1546, %v1542
    %v2819 = vpack.c.b16 %v1547, %v1543
    %v2820 = vpack.c.b16 %v1548, %v1544
    %v2821 = vpack.c.b16 %v1549, %v1545
    %v2822 = vpack.c.b16 %v1554, %v1550
    %v2823 = vpack.c.b16 %v1555, %v1551
    %v2824 = vpack.c.b16 %v1556, %v1552
    %v2825 = vpack.c.b16 %v1557, %v1553
    %v2826 = vpack.c.b16 %v1562, %v1558
    %v2827 = vpack.c.b16 %v1563, %v1559
    %v2828 = vpack.c.b16 %v1564, %v1560
    %v2829 = vpack.c.b16 %v1565, %v1561
    %v2830 = vpack.c.b16 %v1570, %v1566
    %v2831 = vpack.c.b16 %v1571, %v1567
    %v2832 = vpack.c.b16 %v1572, %v1568
    %v2833 = vpack.c.b16 %v1573, %v1569
    %v2834 = vpack.c.b16 %v1578, %v1574
    %v2835 = vpack.c.b16 %v1579, %v1575
    %v2836 = vpack.c.b16 %v1580, %v1576
    %v2837 = vpack.c.b16 %v1581, %v1577
    %v2838 = vpack.c.b16 %v1586, %v1582
    %v2839 = vpack.c.b16 %v1587, %v1583
    %v2840 = vpack.c.b16 %v1588, %v1584
    %v2841 = vpack.c.b16 %v1589, %v1585
    %v2842 = vpack.c.b16 %v1594, %v1590
    %v2843 = vpack.c.b16 %v1595, %v1591
    %v2844 = vpack.c.b16 %v1596, %v1592
    %v2845 = vpack.c.b16 %v1597, %v1593
    %v2846 = vpack.c.b16 %v1602, %v1598
    %v2847 = vpack.c.b16 %v1603, %v1599
    %v2848 = vpack.c.b16 %v1604, %v1600
    %v2849 = vpack.c.b16 %v1605, %v1601
    %v2850 = vpack.c.b16 %v1610, %v1606
    %v2851 = vpack.c.b16 %v1611, %v1607
    %v2852 = vpack.c.b16 %v1612, %v1608
    %v2853 = vpack.c.b16 %v1613, %v1609
    %v2854 = vpack.c.b16 %v1618, %v1614
    %v2855 = vpack.c.b16 %v1619, %v1615
    %v2856 = vpack.c.b16 %v1620, %v1616
    %v2857 = vpack.c.b16 %v1621, %v1617
    %v2858 = vpack.c.b16 %v1626, %v1622
    %v2859 = vpack.c.b16 %v1627, %v1623
    %v2860 = vpack.c.b16 %v1628, %v1624
    %v2861 = vpack.c.b16 %v1629, %v1625
    %v2862 = vpack.c.b16 %v1634, %v1630
    %v2863 = vpack.c.b16 %v1635, %v1631
    %v2864 = vpack.c.b16 %v1636, %v1632
    %v2865 = vpack.c.b16 %v1637, %v1633
    %v2866 = vpack.c.b16 %v1642, %v1638
    %v2867 = vpack.c.b16 %v1643, %v1639
    %v2868 = vpack.c.b16 %v1644, %v1640
    %v2869 = vpack.c.b16 %v1645, %v1641
    %v2870 = vpack.c.b16 %v1650, %v1646
    %v2871 = vpack.c.b16 %v1651, %v1647
    %v2872 = vpack.c.b16 %v1652, %v1648
    %v2873 = vpack.c.b16 %v1653, %v1649
    %v2874 = vpack.c.b16 %v1658, %v1654
    %v2875 = vpack.c.b16 %v1659, %v1655
    %v2876 = vpack.c.b16 %v1660, %v1656
    %v2877 = vpack.c.b16 %v1661, %v1657
    %v2878 = vpack.c.b16 %v1666, %v1662
    %v2879 = vpack.c.b16 %v1667, %v1663
    %v2880 = vpack.c.b16 %v1668, %v1664
    %v2881 = vpack.c.b16 %v1669, %v1665
    %v2882 = vpack.c.b16 %v1674, %v1670
    %v2883 = vpack.c.b16 %v1675, %v1671
    %v2884 = vpack.c.b16 %v1676, %v1672
    %v2885 = vpack.c.b16 %v1677, %v1673
    %v2886 = vpack.c.b16 %v1682, %v1678
    %v2887 = vpack.c.b16 %v1683, %v1679
    %v2888 = vpack.c.b16 %v1684, %v1680
    %v2889 = vpack.c.b16 %v1685, %v1681
    %v2890 = vpack.c.b16 %v1690, %v1686
    %v2891 = vpack.c.b16 %v1691, %v1687
    %v2892 = vpack.c.b16 %v1692, %v1688
    %v2893 = vpack.c.b16 %v1693, %v1689
    %v2894 = vpack.c.b16 %v1698, %v1694
    %v2895 = vpack.c.b16 %v1699, %v1695
    %v2896 = vpack.c.b16 %v1700, %v1696
    %v2897 = vpack.c.b16 %v1701, %v1697
    %v2898 = vpack.c.b16 %v1706, %v1702
    %v2899 = vpack.c.b16 %v1707, %v1703
    %v2900 = vpack.c.b16 %v1708, %v1704
    %v2901 = vpack.c.b16 %v1709, %v1705
    %v2902 = vpack.c.b16 %v1714, %v1710
    %v2903 = vpack.c.b16 %v1715, %v1711
    %v2904 = vpack.c.b16 %v1716, %v1712
    %v2905 = vpack.c.b16 %v1717, %v1713
    %v2906 = vpack.c.b16 %v1722, %v1718
    %v2907 = vpack.c.b16 %v1723, %v1719
    %v2908 = vpack.c.b16 %v1724, %v1720
    %v2909 = vpack.c.b16 %v1725, %v1721
    %v2910 = vpack.c.b16 %v1730, %v1726
    %v2911 = vpack.c.b16 %v1731, %v1727
    %v2912 = vpack.c.b16 %v1732, %v1728
    %v2913 = vpack.c.b16 %v1733, %v1729
    %v2914 = vpack.c.b16 %v1738, %v1734
    %v2915 = vpack.c.b16 %v1739, %v1735
    %v2916 = vpack.c.b16 %v1740, %v1736
    %v2917 = vpack.c.b16 %v1741, %v1737
    %v2918 = vpack.c.b16 %v1746, %v1742
    %v2919 = vpack.c.b16 %v1747, %v1743
    %v2920 = vpack.c.b16 %v1748, %v1744
    %v2921 = vpack.c.b16 %v1749, %v1745
    %v2922 = vpack.c.b16 %v1754, %v1750
    %v2923 = vpack.c.b16 %v1755, %v1751
    %v2924 = vpack.c.b16 %v1756, %v1752
    %v2925 = vpack.c.b16 %v1757, %v1753
    %v2926 = vpack.c.b16 %v1762, %v1758
    %v2927 = vpack.c.b16 %v1763, %v1759
    %v2928 = vpack.c.b16 %v1764, %v1760
    %v2929 = vpack.c.b16 %v1765, %v1761
    %v2930 = vpack.c.b16 %v1770, %v1766
    %v2931 = vpack.c.b16 %v1771, %v1767
    %v2932 = vpack.c.b16 %v1772, %v1768
    %v2933 = vpack.c.b16 %v1773, %v1769
    %v2934 = vpack.c.b16 %v1778, %v1774
    %v2935 = vpack.c.b16 %v1779, %v1775
    %v2936 = vpack.c.b16 %v1780, %v1776
    %v2937 = vpack.c.b16 %v1781, %v1777
    %v2938 = vpack.c.b16 %v1786, %v1782
    %v2939 = vpack.c.b16 %v1787, %v1783
    %v2940 = vpack.c.b16 %v1788, %v1784
    %v2941 = vpack.c.b16 %v1789, %v1785
    %v2942 = vpack.c.b16 %v1794, %v1790
    %v2943 = vpack.c.b16 %v1795, %v1791
    %v2944 = vpack.c.b16 %v1796, %v1792
    %v2945 = vpack.c.b16 %v1797, %v1793
    %v2946 = vpack.c.b16 %v1802, %v1798
    %v2947 = vpack.c.b16 %v1803, %v1799
    %v2948 = vpack.c.b16 %v1804, %v1800
    %v2949 = vpack.c.b16 %v1805, %v1801
    %v2950 = vpack.c.b16 %v1810, %v1806
    %v2951 = vpack.c.b16 %v1811, %v1807
    %v2952 = vpack.c.b16 %v1812, %v1808
    %v2953 = vpack.c.b16 %v1813, %v1809
    %v2954 = vpack.c.b16 %v1818, %v1814
    %v2955 = vpack.c.b16 %v1819, %v1815
    %v2956 = vpack.c.b16 %v1820, %v1816
    %v2957 = vpack.c.b16 %v1821, %v1817
    %v2958 = vpack.c.b16 %v1826, %v1822
    %v2959 = vpack.c.b16 %v1827, %v1823
    %v2960 = vpack.c.b16 %v1828, %v1824
    %v2961 = vpack.c.b16 %v1829, %v1825
    %v2962 = vpack.c.b16 %v1834, %v1830
    %v2963 = vpack.c.b16 %v1835, %v1831
    %v2964 = vpack.c.b16 %v1836, %v1832
    %v2965 = vpack.c.b16 %v1837, %v1833
    %v2966 = vpack.c.b16 %v1842, %v1838
    %v2967 = vpack.c.b16 %v1843, %v1839
    %v2968 = vpack.c.b16 %v1844, %v1840
    %v2969 = vpack.c.b16 %v1845, %v1841
    %v2970 = vpack.c.b16 %v1850, %v1846
    %v2971 = vpack.c.b16 %v1851, %v1847
    %v2972 = vpack.c.b16 %v1852, %v1848
    %v2973 = vpack.c.b16 %v1853, %v1849
    %v2974 = vpack.c.b16 %v1858, %v1854
    %v2975 = vpack.c.b16 %v1859, %v1855
    %v2976 = vpack.c.b16 %v1860, %v1856
    %v2977 = vpack.c.b16 %v1861, %v1857
    %v2978 = vpack.c.b16 %v1866, %v1862
    %v2979 = vpack.c.b16 %v1867, %v1863
    %v2980 = vpack.c.b16 %v1868, %v1864
    %v2981 = vpack.c.b16 %v1869, %v1865
    %v2982 = vpack.c.b16 %v1874, %v1870
    %v2983 = vpack.c.b16 %v1875, %v1871
    %v2984 = vpack.c.b16 %v1876, %v1872
    %v2985 = vpack.c.b16 %v1877, %v1873
    %v2986 = vpack.c.b16 %v1882, %v1878
    %v2987 = vpack.c.b16 %v1883, %v1879
    %v2988 = vpack.c.b16 %v1884, %v1880
    %v2989 = vpack.c.b16 %v1885, %v1881
    %v2990 = vpack.c.b16 %v1890, %v1886
    %v2991 = vpack.c.b16 %v1891, %v1887
    %v2992 = vpack.c.b16 %v1892, %v1888
    %v2993 = vpack.c.b16 %v1893, %v1889
    %v2994 = vpack.c.b16 %v1898, %v1894
    %v2995 = vpack.c.b16 %v1899, %v1895
    %v2996 = vpack.c.b16 %v1900, %v1896
    %v2997 = vpack.c.b16 %v1901, %v1897
    %v2998 = vpack.c.b16 %v1906, %v1902
    %v2999 = vpack.c.b16 %v1907, %v1903
    %v3000 = vpack.c.b16 %v1908, %v1904
    %v3001 = vpack.c.b16 %v1909, %v1905
    %v3002 = vpack.c.b16 %v1914, %v1910
    %v3003 = vpack.c.b16 %v1915, %v1911
    %v3004 = vpack.c.b16 %v1916, %v1912
    %v3005 = vpack.c.b16 %v1917, %v1913
    %v3006 = vpack.c.b16 %v1922, %v1918
    %v3007 = vpack.c.b16 %v1923, %v1919
    %v3008 = vpack.c.b16 %v1924, %v1920
    %v3009 = vpack.c.b16 %v1925, %v1921
    %v3010 = vpack.c.b16 %v1930, %v1926
    %v3011 = vpack.c.b16 %v1931, %v1927
    %v3012 = vpack.c.b16 %v1932, %v1928
    %v3013 = vpack.c.b16 %v1933, %v1929
    %v3014 = vpack.c.b16 %v1938, %v1934
    %v3015 = vpack.c.b16 %v1939, %v1935
    %v3016 = vpack.c.b16 %v1940, %v1936
    %v3017 = vpack.c.b16 %v1941, %v1937
    %v3018 = vpack.c.b16 %v1946, %v1942
    %v3019 = vpack.c.b16 %v1947, %v1943
    %v3020 = vpack.c.b16 %v1948, %v1944
    %v3021 = vpack.c.b16 %v1949, %v1945
    %v3022 = vpack.c.b16 %v1954, %v1950
    %v3023 = vpack.c.b16 %v1955, %v1951
    %v3024 = vpack.c.b16 %v1956, %v1952
    %v3025 = vpack.c.b16 %v1957, %v1953
    %v3026 = vpack.c.b16 %v1962, %v1958
    %v3027 = vpack.c.b16 %v1963, %v1959
    %v3028 = vpack.c.b16 %v1964, %v1960
    %v3029 = vpack.c.b16 %v1965, %v1961
    %v3030 = vpack.c.b16 %v1970, %v1966
    %v3031 = vpack.c.b16 %v1971, %v1967
    %v3032 = vpack.c.b16 %v1972, %v1968
    %v3033 = vpack.c.b16 %v1973, %v1969
    %v3034 = vpack.c.b16 %v1978, %v1974
    %v3035 = vpack.c.b16 %v1979, %v1975
    %v3036 = vpack.c.b16 %v1980, %v1976
    %v3037 = vpack.c.b16 %v1981, %v1977
    %v3038 = vpack.c.b16 %v1986, %v1982
    %v3039 = vpack.c.b16 %v1987, %v1983
    %v3040 = vpack.c.b16 %v1988, %v1984
    %v3041 = vpack.c.b16 %v1989, %v1985
    %v3042 = vpack.c.b16 %v1994, %v1990
    %v3043 = vpack.c.b16 %v1995, %v1991
    %v3044 = vpack.c.b16 %v1996, %v1992
    %v3045 = vpack.c.b16 %v1997, %v1993
    %v3046 = vpack.c.b16 %v2002, %v1998
    %v3047 = vpack.c.b16 %v2003, %v1999
    %v3048 = vpack.c.b16 %v2004, %v2000
    %v3049 = vpack.c.b16 %v2005, %v2001
    %v3050 = vpack.c.b16 %v2010, %v2006
    %v3051 = vpack.c.b16 %v2011, %v2007
    %v3052 = vpack.c.b16 %v2012, %v2008
    %v3053 = vpack.c.b16 %v2013, %v2009
    %v3054 = vpack.c.b16 %v2018, %v2014
    %v3055 = vpack.c.b16 %v2019, %v2015
    %v3056 = vpack.c.b16 %v2020, %v2016
    %v3057 = vpack.c.b16 %v2021, %v2017
    %v3058 = vpack.c.b16 %v2026, %v2022
    %v3059 = vpack.c.b16 %v2027, %v2023
    %v3060 = vpack.c.b16 %v2028, %v2024
    %v3061 = vpack.c.b16 %v2029, %v2025
    %v3062 = vpack.c.b16 %v2034, %v2030
    %v3063 = vpack.c.b16 %v2035, %v2031
    %v3064 = vpack.c.b16 %v2036, %v2032
    %v3065 = vpack.c.b16 %v2037, %v2033
    %v3066 = vpack.c.b16 %v2042, %v2038
    %v3067 = vpack.c.b16 %v2043, %v2039
    %v3068 = vpack.c.b16 %v2044, %v2040
    %v3069 = vpack.c.b16 %v2045, %v2041
    %v3070 = vpack.c.b16 %v2050, %v2046
    %v3071 = vpack.c.b16 %v2051, %v2047
    %v3072 = vpack.c.b16 %v2052, %v2048
    %v3073 = vpack.c.b16 %v2053, %v2049
    %v3074 = vpack.c.b16 %v2058, %v2054
    %v3075 = vpack.c.b16 %v2059, %v2055
    %v3076 = vpack.c.b16 %v2060, %v2056
    %v3077 = vpack.c.b16 %v2061, %v2057
    %v3078 = vpack.c.b16 %v2066, %v2062
    %v3079 = vpack.c.b16 %v2067, %v2063
    %v3080 = vpack.c.b16 %v2068, %v2064
    %v3081 = vpack.c.b16 %v2069, %v2065
    %v3082 = vpack.c.b16 %v2074, %v2070
    %v3083 = vpack.c.b16 %v2075, %v2071
    %v3084 = vpack.c.b16 %v2076, %v2072
    %v3085 = vpack.c.b16 %v2077, %v2073
    %v3086 = vpack.c.b16 %v2082, %v2078
    %v3087 = vpack.c.b16 %v2083, %v2079
    %v3088 = vpack.c.b16 %v2084, %v2080
    %v3089 = vpack.c.b16 %v2085, %v2081
    %v3090 = vpack.c.b16 %v2090, %v2086
    %v3091 = vpack.c.b16 %v2091, %v2087
    %v3092 = vpack.c.b16 %v2092, %v2088
    %v3093 = vpack.c.b16 %v2093, %v2089
    %v3094 = vpack.c.b16 %v2098, %v2094
    %v3095 = vpack.c.b16 %v2099, %v2095
    %v3096 = vpack.c.b16 %v2100, %v2096
    %v3097 = vpack.c.b16 %v2101, %v2097
    %v3098 = vpack.c.b16 %v2106, %v2102
    %v3099 = vpack.c.b16 %v2107, %v2103
    %v3100 = vpack.c.b16 %v2108, %v2104
    %v3101 = vpack.c.b16 %v2109, %v2105
    %v3102 = vpack.c.b16 %v2114, %v2110
    %v3103 = vpack.c.b16 %v2115, %v2111
    %v3104 = vpack.c.b16 %v2116, %v2112
    %v3105 = vpack.c.b16 %v2117, %v2113
    %v3106 = vpack.c.b16 %v2122, %v2118
    %v3107 = vpack.c.b16 %v2123, %v2119
    %v3108 = vpack.c.b16 %v2124, %v2120
    %v3109 = vpack.c.b16 %v2125, %v2121
    %v3110 = vpack.c.b16 %v2130, %v2126
    %v3111 = vpack.c.b16 %v2131, %v2127
    %v3112 = vpack.c.b16 %v2132, %v2128
    %v3113 = vpack.c.b16 %v2133, %v2129
    %v3114 = vpack.c.b16 %v2138, %v2134
    %v3115 = vpack.c.b16 %v2139, %v2135
    %v3116 = vpack.c.b16 %v2140, %v2136
    %v3117 = vpack.c.b16 %v2141, %v2137
    %v3118 = vpack.c.b16 %v2146, %v2142
    %v3119 = vpack.c.b16 %v2147, %v2143
    %v3120 = vpack.c.b16 %v2148, %v2144
    %v3121 = vpack.c.b16 %v2149, %v2145
    %v3122 = vpack.c.b16 %v2154, %v2150
    %v3123 = vpack.c.b16 %v2155, %v2151
    %v3124 = vpack.c.b16 %v2156, %v2152
    %v3125 = vpack.c.b16 %v2157, %v2153
    %v3126 = vpack.c.b16 %v2162, %v2158
    %v3127 = vpack.c.b16 %v2163, %v2159
    %v3128 = vpack.c.b16 %v2164, %v2160
    %v3129 = vpack.c.b16 %v2165, %v2161
    %v3130 = vpack.c.b16 %v2170, %v2166
    %v3131 = vpack.c.b16 %v2171, %v2167
    %v3132 = vpack.c.b16 %v2172, %v2168
    %v3133 = vpack.c.b16 %v2173, %v2169
    %v3134 = vpack.c.b16 %v2178, %v2174
    %v3135 = vpack.c.b16 %v2179, %v2175
    %v3136 = vpack.c.b16 %v2180, %v2176
    %v3137 = vpack.c.b16 %v2181, %v2177
    %v3138 = vpack.c.b16 %v2186, %v2182
    %v3139 = vpack.c.b16 %v2187, %v2183
    %v3140 = vpack.c.b16 %v2188, %v2184
    %v3141 = vpack.c.b16 %v2189, %v2185
    %v3142 = vpack.c.b16 %v2194, %v2190
    %v3143 = vpack.c.b16 %v2195, %v2191
    %v3144 = vpack.c.b16 %v2196, %v2192
    %v3145 = vpack.c.b16 %v2197, %v2193
    %v3146 = vpack.c.b16 %v2202, %v2198
    %v3147 = vpack.c.b16 %v2203, %v2199
    %v3148 = vpack.c.b16 %v2204, %v2200
    %v3149 = vpack.c.b16 %v2205, %v2201
    %v3150 = vpack.c.b16 %v2210, %v2206
    %v3151 = vpack.c.b16 %v2211, %v2207
    %v3152 = vpack.c.b16 %v2212, %v2208
    %v3153 = vpack.c.b16 %v2213, %v2209
    %v3154 = vpack.c.b16 %v2218, %v2214
    %v3155 = vpack.c.b16 %v2219, %v2215
    %v3156 = vpack.c.b16 %v2220, %v2216
    %v3157 = vpack.c.b16 %v2221, %v2217
    %v3158 = vpack.c.b16 %v2226, %v2222
    %v3159 = vpack.c.b16 %v2227, %v2223
    %v3160 = vpack.c.b16 %v2228, %v2224
    %v3161 = vpack.c.b16 %v2229, %v2225
    %v3162 = vpack.c.b16 %v2234, %v2230
    %v3163 = vpack.c.b16 %v2235, %v2231
    %v3164 = vpack.c.b16 %v2236, %v2232
    %v3165 = vpack.c.b16 %v2237, %v2233
    %v3166 = vpack.c.b16 %v2242, %v2238
    %v3167 = vpack.c.b16 %v2243, %v2239
    %v3168 = vpack.c.b16 %v2244, %v2240
    %v3169 = vpack.c.b16 %v2245, %v2241
    %v3170 = vpack.c.b16 %v2250, %v2246
    %v3171 = vpack.c.b16 %v2251, %v2247
    %v3172 = vpack.c.b16 %v2252, %v2248
    %v3173 = vpack.c.b16 %v2253, %v2249
    %v3174 = vpack.c.b16 %v2258, %v2254
    %v3175 = vpack.c.b16 %v2259, %v2255
    %v3176 = vpack.c.b16 %v2260, %v2256
    %v3177 = vpack.c.b16 %v2261, %v2257
    %v3178 = vpack.c.b16 %v2266, %v2262
    %v3179 = vpack.c.b16 %v2267, %v2263
    %v3180 = vpack.c.b16 %v2268, %v2264
    %v3181 = vpack.c.b16 %v2269, %v2265
    %v3182 = vpack.c.b16 %v2274, %v2270
    %v3183 = vpack.c.b16 %v2275, %v2271
    %v3184 = vpack.c.b16 %v2276, %v2272
    %v3185 = vpack.c.b16 %v2277, %v2273
    %v3186 = vpack.c.b16 %v2282, %v2278
    %v3187 = vpack.c.b16 %v2283, %v2279
    %v3188 = vpack.c.b16 %v2284, %v2280
    %v3189 = vpack.c.b16 %v2285, %v2281
    %v3190 = vpack.c.b16 %v2290, %v2286
    %v3191 = vpack.c.b16 %v2291, %v2287
    %v3192 = vpack.c.b16 %v2292, %v2288
    %v3193 = vpack.c.b16 %v2293, %v2289
    %v3194 = vpack.c.b16 %v2298, %v2294
    %v3195 = vpack.c.b16 %v2299, %v2295
    %v3196 = vpack.c.b16 %v2300, %v2296
    %v3197 = vpack.c.b16 %v2301, %v2297
    %v3198 = vpack.c.b16 %v2306, %v2302
    %v3199 = vpack.c.b16 %v2307, %v2303
    %v3200 = vpack.c.b16 %v2308, %v2304
    %v3201 = vpack.c.b16 %v2309, %v2305
    %v3202 = vpack.c.b16 %v2314, %v2310
    %v3203 = vpack.c.b16 %v2315, %v2311
    %v3204 = vpack.c.b16 %v2316, %v2312
    %v3205 = vpack.c.b16 %v2317, %v2313
    %v3206 = vpack.c.b16 %v2322, %v2318
    %v3207 = vpack.c.b16 %v2323, %v2319
    %v3208 = vpack.c.b16 %v2324, %v2320
    %v3209 = vpack.c.b16 %v2325, %v2321
    %v3210 = vpack.c.b16 %v2330, %v2326
    %v3211 = vpack.c.b16 %v2331, %v2327
    %v3212 = vpack.c.b16 %v2332, %v2328
    %v3213 = vpack.c.b16 %v2333, %v2329
    %v3214 = vpack.c.b16 %v2338, %v2334
    %v3215 = vpack.c.b16 %v2339, %v2335
    %v3216 = vpack.c.b16 %v2340, %v2336
    %v3217 = vpack.c.b16 %v2341, %v2337
    %v3218 = vpack.c.b16 %v2346, %v2342
    %v3219 = vpack.c.b16 %v2347, %v2343
    %v3220 = vpack.c.b16 %v2348, %v2344
    %v3221 = vpack.c.b16 %v2349, %v2345
    %v3222 = vpack.c.b16 %v2354, %v2350
    %v3223 = vpack.c.b16 %v2355, %v2351
    %v3224 = vpack.c.b16 %v2356, %v2352
    %v3225 = vpack.c.b16 %v2357, %v2353
    %v3226 = vpack.c.b16 %v2362, %v2358
    %v3227 = vpack.c.b16 %v2363, %v2359
    %v3228 = vpack.c.b16 %v2364, %v2360
    %v3229 = vpack.c.b16 %v2365, %v2361
    %v3230 = vpack.c.b16 %v2370, %v2366
    %v3231 = vpack.c.b16 %v2371, %v2367
    %v3232 = vpack.c.b16 %v2372, %v2368
    %v3233 = vpack.c.b16 %v2373, %v2369
    %v3234 = vpack.c.b16 %v2378, %v2374
    %v3235 = vpack.c.b16 %v2379, %v2375
    %v3236 = vpack.c.b16 %v2380, %v2376
    %v3237 = vpack.c.b16 %v2381, %v2377
    %v3238 = vpack.c.b16 %v2386, %v2382
    %v3239 = vpack.c.b16 %v2387, %v2383
    %v3240 = vpack.c.b16 %v2388, %v2384
    %v3241 = vpack.c.b16 %v2389, %v2385
    %v3242 = vpack.c.b16 %v2394, %v2390
    %v3243 = vpack.c.b16 %v2395, %v2391
    %v3244 = vpack.c.b16 %v2396, %v2392
    %v3245 = vpack.c.b16 %v2397, %v2393
    %v3246 = vpack.c.b16 %v2402, %v2398
    %v3247 = vpack.c.b16 %v2403, %v2399
    %v3248 = vpack.c.b16 %v2404, %v2400
    %v3249 = vpack.c.b16 %v2405, %v2401
    %v3250 = vpack.c.b16 %v2410, %v2406
    %v3251 = vpack.c.b16 %v2411, %v2407
    %v3252 = vpack.c.b16 %v2412, %v2408
    %v3253 = vpack.c.b16 %v2413, %v2409
    %v3254 = vpack.c.b16 %v2418, %v2414
    %v3255 = vpack.c.b16 %v2419, %v2415
    %v3256 = vpack.c.b16 %v2420, %v2416
    %v3257 = vpack.c.b16 %v2421, %v2417
    %v3258 = vpack.c.b16 %v2426, %v2422
    %v3259 = vpack.c.b16 %v2427, %v2423
    %v3260 = vpack.c.b16 %v2428, %v2424
    %v3261 = vpack.c.b16 %v2429, %v2425
    %v3262 = vpack.c.b16 %v2434, %v2430
    %v3263 = vpack.c.b16 %v2435, %v2431
    %v3264 = vpack.c.b16 %v2436, %v2432
    %v3265 = vpack.c.b16 %v2437, %v2433
    %v3266 = vpack.c.b16 %v2442, %v2438
    %v3267 = vpack.c.b16 %v2443, %v2439
    %v3268 = vpack.c.b16 %v2444, %v2440
    %v3269 = vpack.c.b16 %v2445, %v2441
    %v3270 = vpack.c.b16 %v2450, %v2446
    %v3271 = vpack.c.b16 %v2451, %v2447
    %v3272 = vpack.c.b16 %v2452, %v2448
    %v3273 = vpack.c.b16 %v2453, %v2449
    %v3274 = vpack.c.b16 %v2458, %v2454
    %v3275 = vpack.c.b16 %v2459, %v2455
    %v3276 = vpack.c.b16 %v2460, %v2456
    %v3277 = vpack.c.b16 %v2461, %v2457
    %v3278 = vpack.c.b16 %v2466, %v2462
    %v3279 = vpack.c.b16 %v2467, %v2463
    %v3280 = vpack.c.b16 %v2468, %v2464
    %v3281 = vpack.c.b16 %v2469, %v2465
    %v3282 = vpack.c.b16 %v2474, %v2470
    %v3283 = vpack.c.b16 %v2475, %v2471
    %v3284 = vpack.c.b16 %v2476, %v2472
    %v3285 = vpack.c.b16 %v2477, %v2473
    %v3286 = vpack.c.b16 %v2482, %v2478
    %v3287 = vpack.c.b16 %v2483, %v2479
    %v3288 = vpack.c.b16 %v2484, %v2480
    %v3289 = vpack.c.b16 %v2485, %v2481
    %v3290 = vpack.c.b16 %v2490, %v2486
    %v3291 = vpack.c.b16 %v2491, %v2487
    %v3292 = vpack.c.b16 %v2492, %v2488
    %v3293 = vpack.c.b16 %v2493, %v2489
    %v3294 = vpack.c.b16 %v2498, %v2494
    %v3295 = vpack.c.b16 %v2499, %v2495
    %v3296 = vpack.c.b16 %v2500, %v2496
    %v3297 = vpack.c.b16 %v2501, %v2497
    %v3298 = vpack.c.b16 %v2506, %v2502
    %v3299 = vpack.c.b16 %v2507, %v2503
    %v3300 = vpack.c.b16 %v2508, %v2504
    %v3301 = vpack.c.b16 %v2509, %v2505
    %v3302 = vpack.c.b16 %v2514, %v2510
    %v3303 = vpack.c.b16 %v2515, %v2511
    %v3304 = vpack.c.b16 %v2516, %v2512
    %v3305 = vpack.c.b16 %v2517, %v2513
    %v3306 = vpack.c.b16 %v2522, %v2518
    %v3307 = vpack.c.b16 %v2523, %v2519
    %v3308 = vpack.c.b16 %v2524, %v2520
    %v3309 = vpack.c.b16 %v2525, %v2521
    %v3310 = vpack.c.b16 %v2530, %v2526
    %v3311 = vpack.c.b16 %v2531, %v2527
    %v3312 = vpack.c.b16 %v2532, %v2528
    %v3313 = vpack.c.b16 %v2533, %v2529
    %v3314 = vpack.c.b16 %v2538, %v2534
    %v3315 = vpack.c.b16 %v2539, %v2535
    %v3316 = vpack.c.b16 %v2540, %v2536
    %v3317 = vpack.c.b16 %v2541, %v2537
    %v3318 = vpack.c.b16 %v2546, %v2542
    %v3319 = vpack.c.b16 %v2547, %v2543
    %v3320 = vpack.c.b16 %v2548, %v2544
    %v3321 = vpack.c.b16 %v2549, %v2545
    %v3322 = vpack.c.b16 %v2554, %v2550
    %v3323 = vpack.c.b16 %v2555, %v2551
    %v3324 = vpack.c.b16 %v2556, %v2552
    %v3325 = vpack.c.b16 %v2557, %v2553
    %v3326 = vpack.c.b16 %v2562, %v2558
    %v3327 = vpack.c.b16 %v2563, %v2559
    %v3328 = vpack.c.b16 %v2564, %v2560
    %v3329 = vpack.c.b16 %v2565, %v2561
    %v3330 = vpack.c.b16 %v2570, %v2566
    %v3331 = vpack.c.b16 %v2571, %v2567
    %v3332 = vpack.c.b16 %v2572, %v2568
    %v3333 = vpack.c.b16 %v2573, %v2569
    %v3334 = vpack.c.b16 %v2578, %v2574
    %v3335 = vpack.c.b16 %v2579, %v2575
    %v3336 = vpack.c.b16 %v2580, %v2576
    %v3337 = vpack.c.b16 %v2581, %v2577
    %v3338 = vpack.c.b16 %v2586, %v2582
    %v3339 = vpack.c.b16 %v2587, %v2583
    %v3340 = vpack.c.b16 %v2588, %v2584
    %v3341 = vpack.c.b16 %v2589, %v2585
    %v3342 = vpack.c.b16 %v2594, %v2590
    %v3343 = vpack.c.b16 %v2595, %v2591
    %v3344 = vpack.c.b16 %v2596, %v2592
    %v3345 = vpack.c.b16 %v2597, %v2593
    %v3346 = vpack.c.b16 %v2602, %v2598
    %v3347 = vpack.c.b16 %v2603, %v2599
    %v3348 = vpack.c.b16 %v2604, %v2600
    %v3349 = vpack.c.b16 %v2605, %v2601
    %v3350 = vpack.c.b16 %v2610, %v2606
    %v3351 = vpack.c.b16 %v2611, %v2607
    %v3352 = vpack.c.b16 %v2612, %v2608
    %v3353 = vpack.c.b16 %v2613, %v2609
    %v3354 = vpack.c.b16 %v2618, %v2614
    %v3355 = vpack.c.b16 %v2619, %v2615
    %v3356 = vpack.c.b16 %v2620, %v2616
    %v3357 = vpack.c.b16 %v2621, %v2617
    %v3358 = vpack.c.b16 %v2626, %v2622
    %v3359 = vpack.c.b16 %v2627, %v2623
    %v3360 = vpack.c.b16 %v2628, %v2624
    %v3361 = vpack.c.b16 %v2629, %v2625
    %v3362 = vpack.c.b16 %v2634, %v2630
    %v3363 = vpack.c.b16 %v2635, %v2631
    %v3364 = vpack.c.b16 %v2636, %v2632
    %v3365 = vpack.c.b16 %v2637, %v2633
    %v3366 = vpack.c.b16 %v2642, %v2638
    %v3367 = vpack.c.b16 %v2643, %v2639
    %v3368 = vpack.c.b16 %v2644, %v2640
    %v3369 = vpack.c.b16 %v2645, %v2641
    %v3370 = vpack.c.b16 %v2650, %v2646
    %v3371 = vpack.c.b16 %v2651, %v2647
    %v3372 = vpack.c.b16 %v2652, %v2648
    %v3373 = vpack.c.b16 %v2653, %v2649
    %v3374 = vpack.c.b16 %v2658, %v2654
    %v3375 = vpack.c.b16 %v2659, %v2655
    %v3376 = vpack.c.b16 %v2660, %v2656
    %v3377 = vpack.c.b16 %v2661, %v2657
    %v3378 = vpack.c.b16 %v2666, %v2662
    %v3379 = vpack.c.b16 %v2667, %v2663
    %v3380 = vpack.c.b16 %v2668, %v2664
    %v3381 = vpack.c.b16 %v2669, %v2665
    %v3382 = vpack.c.b16 %v2674, %v2670
    %v3383 = vpack.c.b16 %v2675, %v2671
    %v3384 = vpack.c.b16 %v2676, %v2672
    %v3385 = vpack.c.b16 %v2677, %v2673
    %v3386 = vpack.c.b16 %v2682, %v2678
    %v3387 = vpack.c.b16 %v2683, %v2679
    %v3388 = vpack.c.b16 %v2684, %v2680
    %v3389 = vpack.c.b16 %v2685, %v2681
    %v3390 = vpack.c.b16 %v2690, %v2686
    %v3391 = vpack.c.b16 %v2691, %v2687
    %v3392 = vpack.c.b16 %v2692, %v2688
    %v3393 = vpack.c.b16 %v2693, %v2689
    %v3394 = vpack.c.b16 %v2698, %v2694
    %v3395 = vpack.c.b16 %v2699, %v2695
    %v3396 = vpack.c.b16 %v2700, %v2696
    %v3397 = vpack.c.b16 %v2701, %v2697
    %v3398 = vpack.c.b16 %v2706, %v2702
    %v3399 = vpack.c.b16 %v2707, %v2703
    %v3400 = vpack.c.b16 %v2708, %v2704
    %v3401 = vpack.c.b16 %v2709, %v2705
    %v3402 = vpack.c.b16 %v2714, %v2710
    %v3403 = vpack.c.b16 %v2715, %v2711
    %v3404 = vpack.c.b16 %v2716, %v2712
    %v3405 = vpack.c.b16 %v2717, %v2713
    %v3406 = vpack.c.b16 %v2722, %v2718
    %v3407 = vpack.c.b16 %v2723, %v2719
    %v3408 = vpack.c.b16 %v2724, %v2720
    %v3409 = vpack.c.b16 %v2725, %v2721
    %v3410 = vpack.c.b16 %v2730, %v2726
    %v3411 = vpack.c.b16 %v2731, %v2727
    %v3412 = vpack.c.b16 %v2732, %v2728
    %v3413 = vpack.c.b16 %v2733, %v2729
    %v3414 = vpack.c.b16 %v2738, %v2734
    %v3415 = vpack.c.b16 %v2739, %v2735
    %v3416 = vpack.c.b16 %v2740, %v2736
    %v3417 = vpack.c.b16 %v2741, %v2737
    %v3418 = vpack.c.b16 %v2746, %v2742
    %v3419 = vpack.c.b16 %v2747, %v2743
    %v3420 = vpack.c.b16 %v2748, %v2744
    %v3421 = vpack.c.b16 %v2749, %v2745
    %v3422 = vpack.c.b16 %v2754, %v2750
    %v3423 = vpack.c.b16 %v2755, %v2751
    %v3424 = vpack.c.b16 %v2756, %v2752
    %v3425 = vpack.c.b16 %v2757, %v2753
    %v3426 = vpack.c.b16 %v2762, %v2758
    %v3427 = vpack.c.b16 %v2763, %v2759
    %v3428 = vpack.c.b16 %v2764, %v2760
    %v3429 = vpack.c.b16 %v2765, %v2761
    %v3430 = vpack.c.b16 %v2770, %v2766
    %v3431 = vpack.c.b16 %v2771, %v2767
    %v3432 = vpack.c.b16 %v2772, %v2768
    %v3433 = vpack.c.b16 %v2773, %v2769
    %v3434 = vpack.c.b16 %v2778, %v2774
    %v3435 = vpack.c.b16 %v2779, %v2775
    %v3436 = vpack.c.b16 %v2780, %v2776
    %v3437 = vpack.c.b16 %v2781, %v2777
    %v3438 = vpack.c.b16 %v2786, %v2782
    %v3439 = vpack.c.b16 %v2787, %v2783
    %v3440 = vpack.c.b16 %v2788, %v2784
    %v3441 = vpack.c.b16 %v2789, %v2785
    %v3442 = vpack.c.b16 %v2794, %v2790
    %v3443 = vpack.c.b16 %v2795, %v2791
    %v3444 = vpack.c.b16 %v2796, %v2792
    %v3445 = vpack.c.b16 %v2797, %v2793
    %v3446 = vpack.c.b16 %v2802, %v2798
    %v3447 = vpack.c.b16 %v2803, %v2799
    %v3448 = vpack.c.b16 %v2804, %v2800
    %v3449 = vpack.c.b16 %v2805, %v2801
    %v3450 = vpack.c.b16 %v2810, %v2806
    %v3451 = vpack.c.b16 %v2811, %v2807
    %v3452 = vpack.c.b16 %v2812, %v2808
    %v3453 = vpack.c.b16 %v2813, %v2809
    %4094 = vmatpush.bf16.msra.mxu0 %v2842
    %4095 = vmatpush.bf16.msra.mxu0 %v2838
    %4096 = vmatpush.bf16.msra.mxu0 %v2834
    %4097 = vmatpush.bf16.msra.mxu0 %v2830
    %4098 = vmatpush.bf16.msra.mxu0 %v2826
    %4099 = vmatpush.bf16.msra.mxu0 %v2822
    %4100 = vmatpush.bf16.msra.mxu0 %v2818
    %4101 = vmatpush.bf16.msra.mxu0 %v2814
    %4102 = vmatmul.bf16.gmra.mxu0 %v854
    %v4103 = vpop.f32.mrf.mxu0
    %v4104 = vadd.f32 0.0, %v4103
    %v4105 = vpop.f32.mrf.mxu0
    %v4106 = vadd.f32 0.0, %v4105
    %4107 = vdwg.mxu0
    %4108 = vmatpush.bf16.msra.mxu0 %v2874
    %4109 = vmatpush.bf16.msra.mxu0 %v2870
    %4110 = vmatpush.bf16.msra.mxu0 %v2866
    %4111 = vmatpush.bf16.msra.mxu0 %v2862
    %4112 = vmatpush.bf16.msra.mxu0 %v2858
    %4113 = vmatpush.bf16.msra.mxu0 %v2854
    %4114 = vmatpush.bf16.msra.mxu0 %v2850
    %4115 = vmatpush.bf16.msra.mxu0 %v2846
    %4116 = vmatmul.bf16.gmra.mxu0 %v855
    %v4117 = vpop.f32.mrf.mxu0
    %v4118 = vadd.f32 %v4104, %v4117
    %v4119 = vpop.f32.mrf.mxu0
    %v4120 = vadd.f32 %v4106, %v4119
    %4121 = vdwg.mxu0
    %4122 = vmatpush.bf16.msra.mxu0 %v2906
    %4123 = vmatpush.bf16.msra.mxu0 %v2902
    %4124 = vmatpush.bf16.msra.mxu0 %v2898
    %4125 = vmatpush.bf16.msra.mxu0 %v2894
    %4126 = vmatpush.bf16.msra.mxu0 %v2890
    %4127 = vmatpush.bf16.msra.mxu0 %v2886
    %4128 = vmatpush.bf16.msra.mxu0 %v2882
    %4129 = vmatpush.bf16.msra.mxu0 %v2878
    %4130 = vmatmul.bf16.gmra.mxu0 %v856
    %v4131 = vpop.f32.mrf.mxu0
    %v4132 = vadd.f32 %v4118, %v4131
    %v4133 = vpop.f32.mrf.mxu0
    %v4134 = vadd.f32 %v4120, %v4133
    %4135 = vdwg.mxu0
    %4136 = vmatpush.bf16.msra.mxu0 %v2938
    %4137 = vmatpush.bf16.msra.mxu0 %v2934
    %4138 = vmatpush.bf16.msra.mxu0 %v2930
    %4139 = vmatpush.bf16.msra.mxu0 %v2926
    %4140 = vmatpush.bf16.msra.mxu0 %v2922
    %4141 = vmatpush.bf16.msra.mxu0 %v2918
    %4142 = vmatpush.bf16.msra.mxu0 %v2914
    %4143 = vmatpush.bf16.msra.mxu0 %v2910
    %4144 = vmatmul.bf16.gmra.mxu0 %v857
    %v4145 = vpop.f32.mrf.mxu0
    %v4146 = vadd.f32 %v4132, %v4145
    %v4147 = vpop.f32.mrf.mxu0
    %v4148 = vadd.f32 %v4134, %v4147
    %4149 = vdwg.mxu0
    %4150 = vmatpush.bf16.msra.mxu0 %v2970
    %4151 = vmatpush.bf16.msra.mxu0 %v2966
    %4152 = vmatpush.bf16.msra.mxu0 %v2962
    %4153 = vmatpush.bf16.msra.mxu0 %v2958
    %4154 = vmatpush.bf16.msra.mxu0 %v2954
    %4155 = vmatpush.bf16.msra.mxu0 %v2950
    %4156 = vmatpush.bf16.msra.mxu0 %v2946
    %4157 = vmatpush.bf16.msra.mxu0 %v2942
    %4158 = vmatmul.bf16.gmra.mxu0 %v858
    %v4159 = vpop.f32.mrf.mxu0
    %v4160 = vadd.f32 %v4146, %v4159
    %v4161 = vpop.f32.mrf.mxu0
    %v4162 = vadd.f32 %v4148, %v4161
    %4163 = vdwg.mxu0
    %4164 = vmatpush.bf16.msra.mxu0 %v3002
    %4165 = vmatpush.bf16.msra.mxu0 %v2998
    %4166 = vmatpush.bf16.msra.mxu0 %v2994
    %4167 = vmatpush.bf16.msra.mxu0 %v2990
    %4168 = vmatpush.bf16.msra.mxu0 %v2986
    %4169 = vmatpush.bf16.msra.mxu0 %v2982
    %4170 = vmatpush.bf16.msra.mxu0 %v2978
    %4171 = vmatpush.bf16.msra.mxu0 %v2974
    %4172 = vmatmul.bf16.gmra.mxu0 %v859
    %v4173 = vpop.f32.mrf.mxu0
    %v4174 = vadd.f32 %v4160, %v4173
    %v4175 = vpop.f32.mrf.mxu0
    %v4176 = vadd.f32 %v4162, %v4175
    %4177 = vdwg.mxu0
    %4178 = vmatpush.bf16.msra.mxu0 %v3034
    %4179 = vmatpush.bf16.msra.mxu0 %v3030
    %4180 = vmatpush.bf16.msra.mxu0 %v3026
    %4181 = vmatpush.bf16.msra.mxu0 %v3022
    %4182 = vmatpush.bf16.msra.mxu0 %v3018
    %4183 = vmatpush.bf16.msra.mxu0 %v3014
    %4184 = vmatpush.bf16.msra.mxu0 %v3010
    %4185 = vmatpush.bf16.msra.mxu0 %v3006
    %4186 = vmatmul.bf16.gmra.mxu0 %v860
    %v4187 = vpop.f32.mrf.mxu0
    %v4188 = vadd.f32 %v4174, %v4187
    %v4189 = vpop.f32.mrf.mxu0
    %v4190 = vadd.f32 %v4176, %v4189
    %4191 = vdwg.mxu0
    %4192 = vmatpush.bf16.msra.mxu0 %v3066
    %4193 = vmatpush.bf16.msra.mxu0 %v3062
    %4194 = vmatpush.bf16.msra.mxu0 %v3058
    %4195 = vmatpush.bf16.msra.mxu0 %v3054
    %4196 = vmatpush.bf16.msra.mxu0 %v3050
    %4197 = vmatpush.bf16.msra.mxu0 %v3046
    %4198 = vmatpush.bf16.msra.mxu0 %v3042
    %4199 = vmatpush.bf16.msra.mxu0 %v3038
    %4200 = vmatmul.bf16.gmra.mxu0 %v861
    %v4201 = vpop.f32.mrf.mxu0
    %v4202 = vadd.f32 %v4188, %v4201
    %v4203 = vpop.f32.mrf.mxu0
    %v4204 = vadd.f32 %v4190, %v4203
    %4205 = vdwg.mxu0
    %4206 = vmatpush.bf16.msra.mxu0 %v3098
    %4207 = vmatpush.bf16.msra.mxu0 %v3094
    %4208 = vmatpush.bf16.msra.mxu0 %v3090
    %4209 = vmatpush.bf16.msra.mxu0 %v3086
    %4210 = vmatpush.bf16.msra.mxu0 %v3082
    %4211 = vmatpush.bf16.msra.mxu0 %v3078
    %4212 = vmatpush.bf16.msra.mxu0 %v3074
    %4213 = vmatpush.bf16.msra.mxu0 %v3070
    %4214 = vmatmul.bf16.gmra.mxu0 %v862
    %v4215 = vpop.f32.mrf.mxu0
    %v4216 = vadd.f32 %v4202, %v4215
    %v4217 = vpop.f32.mrf.mxu0
    %v4218 = vadd.f32 %v4204, %v4217
    %4219 = vdwg.mxu0
    %4220 = vmatpush.bf16.msra.mxu0 %v3130
    %4221 = vmatpush.bf16.msra.mxu0 %v3126
    %4222 = vmatpush.bf16.msra.mxu0 %v3122
    %4223 = vmatpush.bf16.msra.mxu0 %v3118
    %4224 = vmatpush.bf16.msra.mxu0 %v3114
    %4225 = vmatpush.bf16.msra.mxu0 %v3110
    %4226 = vmatpush.bf16.msra.mxu0 %v3106
    %4227 = vmatpush.bf16.msra.mxu0 %v3102
    %4228 = vmatmul.bf16.gmra.mxu0 %v863
    %v4229 = vpop.f32.mrf.mxu0
    %v4230 = vadd.f32 %v4216, %v4229
    %v4231 = vpop.f32.mrf.mxu0
    %v4232 = vadd.f32 %v4218, %v4231
    %4233 = vdwg.mxu0
    %4234 = vmatpush.bf16.msra.mxu0 %v3162
    %4235 = vmatpush.bf16.msra.mxu0 %v3158
    %4236 = vmatpush.bf16.msra.mxu0 %v3154
    %4237 = vmatpush.bf16.msra.mxu0 %v3150
    %4238 = vmatpush.bf16.msra.mxu0 %v3146
    %4239 = vmatpush.bf16.msra.mxu0 %v3142
    %4240 = vmatpush.bf16.msra.mxu0 %v3138
    %4241 = vmatpush.bf16.msra.mxu0 %v3134
    %4242 = vmatmul.bf16.gmra.mxu0 %v864
    %v4243 = vpop.f32.mrf.mxu0
    %v4244 = vadd.f32 %v4230, %v4243
    %v4245 = vpop.f32.mrf.mxu0
    %v4246 = vadd.f32 %v4232, %v4245
    %4247 = vdwg.mxu0
    %4248 = vmatpush.bf16.msra.mxu0 %v3194
    %4249 = vmatpush.bf16.msra.mxu0 %v3190
    %4250 = vmatpush.bf16.msra.mxu0 %v3186
    %4251 = vmatpush.bf16.msra.mxu0 %v3182
    %4252 = vmatpush.bf16.msra.mxu0 %v3178
    %4253 = vmatpush.bf16.msra.mxu0 %v3174
    %4254 = vmatpush.bf16.msra.mxu0 %v3170
    %4255 = vmatpush.bf16.msra.mxu0 %v3166
    %4256 = vmatmul.bf16.gmra.mxu0 %v865
    %v4257 = vpop.f32.mrf.mxu0
    %v4258 = vadd.f32 %v4244, %v4257
    %v4259 = vpop.f32.mrf.mxu0
    %v4260 = vadd.f32 %v4246, %v4259
    %4261 = vdwg.mxu0
    %4262 = vmatpush.bf16.msra.mxu0 %v3226
    %4263 = vmatpush.bf16.msra.mxu0 %v3222
    %4264 = vmatpush.bf16.msra.mxu0 %v3218
    %4265 = vmatpush.bf16.msra.mxu0 %v3214
    %4266 = vmatpush.bf16.msra.mxu0 %v3210
    %4267 = vmatpush.bf16.msra.mxu0 %v3206
    %4268 = vmatpush.bf16.msra.mxu0 %v3202
    %4269 = vmatpush.bf16.msra.mxu0 %v3198
    %4270 = vmatmul.bf16.gmra.mxu0 %v866
    %v4271 = vpop.f32.mrf.mxu0
    %v4272 = vadd.f32 %v4258, %v4271
    %v4273 = vpop.f32.mrf.mxu0
    %v4274 = vadd.f32 %v4260, %v4273
    %4275 = vdwg.mxu0
    %4276 = vmatpush.bf16.msra.mxu0 %v3258
    %4277 = vmatpush.bf16.msra.mxu0 %v3254
    %4278 = vmatpush.bf16.msra.mxu0 %v3250
    %4279 = vmatpush.bf16.msra.mxu0 %v3246
    %4280 = vmatpush.bf16.msra.mxu0 %v3242
    %4281 = vmatpush.bf16.msra.mxu0 %v3238
    %4282 = vmatpush.bf16.msra.mxu0 %v3234
    %4283 = vmatpush.bf16.msra.mxu0 %v3230
    %4284 = vmatmul.bf16.gmra.mxu0 %v867
    %v4285 = vpop.f32.mrf.mxu0
    %v4286 = vadd.f32 %v4272, %v4285
    %v4287 = vpop.f32.mrf.mxu0
    %v4288 = vadd.f32 %v4274, %v4287
    %4289 = vdwg.mxu0
    %4290 = vmatpush.bf16.msra.mxu0 %v3290
    %4291 = vmatpush.bf16.msra.mxu0 %v3286
    %4292 = vmatpush.bf16.msra.mxu0 %v3282
    %4293 = vmatpush.bf16.msra.mxu0 %v3278
    %4294 = vmatpush.bf16.msra.mxu0 %v3274
    %4295 = vmatpush.bf16.msra.mxu0 %v3270
    %4296 = vmatpush.bf16.msra.mxu0 %v3266
    %4297 = vmatpush.bf16.msra.mxu0 %v3262
    %4298 = vmatmul.bf16.gmra.mxu0 %v868
    %v4299 = vpop.f32.mrf.mxu0
    %v4300 = vadd.f32 %v4286, %v4299
    %v4301 = vpop.f32.mrf.mxu0
    %v4302 = vadd.f32 %v4288, %v4301
    %4303 = vdwg.mxu0
    %4304 = vmatpush.bf16.msra.mxu0 %v3322
    %4305 = vmatpush.bf16.msra.mxu0 %v3318
    %4306 = vmatpush.bf16.msra.mxu0 %v3314
    %4307 = vmatpush.bf16.msra.mxu0 %v3310
    %4308 = vmatpush.bf16.msra.mxu0 %v3306
    %4309 = vmatpush.bf16.msra.mxu0 %v3302
    %4310 = vmatpush.bf16.msra.mxu0 %v3298
    %4311 = vmatpush.bf16.msra.mxu0 %v3294
    %4312 = vmatmul.bf16.gmra.mxu0 %v869
    %v4313 = vpop.f32.mrf.mxu0
    %v4314 = vadd.f32 %v4300, %v4313
    %v4315 = vpop.f32.mrf.mxu0
    %v4316 = vadd.f32 %v4302, %v4315
    %4317 = vdwg.mxu0
    %4318 = vmatpush.bf16.msra.mxu0 %v3354
    %4319 = vmatpush.bf16.msra.mxu0 %v3350
    %4320 = vmatpush.bf16.msra.mxu0 %v3346
    %4321 = vmatpush.bf16.msra.mxu0 %v3342
    %4322 = vmatpush.bf16.msra.mxu0 %v3338
    %4323 = vmatpush.bf16.msra.mxu0 %v3334
    %4324 = vmatpush.bf16.msra.mxu0 %v3330
    %4325 = vmatpush.bf16.msra.mxu0 %v3326
    %4326 = vmatmul.bf16.gmra.mxu0 %v870
    %v4327 = vpop.f32.mrf.mxu0
    %v4328 = vadd.f32 %v4314, %v4327
    %v4329 = vpop.f32.mrf.mxu0
    %v4330 = vadd.f32 %v4316, %v4329
    %4331 = vdwg.mxu0
    %4332 = vmatpush.bf16.msra.mxu0 %v3386
    %4333 = vmatpush.bf16.msra.mxu0 %v3382
    %4334 = vmatpush.bf16.msra.mxu0 %v3378
    %4335 = vmatpush.bf16.msra.mxu0 %v3374
    %4336 = vmatpush.bf16.msra.mxu0 %v3370
    %4337 = vmatpush.bf16.msra.mxu0 %v3366
    %4338 = vmatpush.bf16.msra.mxu0 %v3362
    %4339 = vmatpush.bf16.msra.mxu0 %v3358
    %4340 = vmatmul.bf16.gmra.mxu0 %v871
    %v4341 = vpop.f32.mrf.mxu0
    %v4342 = vadd.f32 %v4328, %v4341
    %v4343 = vpop.f32.mrf.mxu0
    %v4344 = vadd.f32 %v4330, %v4343
    %4345 = vdwg.mxu0
    %4346 = vmatpush.bf16.msra.mxu0 %v3418
    %4347 = vmatpush.bf16.msra.mxu0 %v3414
    %4348 = vmatpush.bf16.msra.mxu0 %v3410
    %4349 = vmatpush.bf16.msra.mxu0 %v3406
    %4350 = vmatpush.bf16.msra.mxu0 %v3402
    %4351 = vmatpush.bf16.msra.mxu0 %v3398
    %4352 = vmatpush.bf16.msra.mxu0 %v3394
    %4353 = vmatpush.bf16.msra.mxu0 %v3390
    %4354 = vmatmul.bf16.gmra.mxu0 %v872
    %v4355 = vpop.f32.mrf.mxu0
    %v4356 = vadd.f32 %v4342, %v4355
    %v4357 = vpop.f32.mrf.mxu0
    %v4358 = vadd.f32 %v4344, %v4357
    %4359 = vdwg.mxu0
    %4360 = vmatpush.bf16.msra.mxu0 %v3450
    %4361 = vmatpush.bf16.msra.mxu0 %v3446
    %4362 = vmatpush.bf16.msra.mxu0 %v3442
    %4363 = vmatpush.bf16.msra.mxu0 %v3438
    %4364 = vmatpush.bf16.msra.mxu0 %v3434
    %4365 = vmatpush.bf16.msra.mxu0 %v3430
    %4366 = vmatpush.bf16.msra.mxu0 %v3426
    %4367 = vmatpush.bf16.msra.mxu0 %v3422
    %4368 = vmatmul.bf16.gmra.mxu0 %v873
    %v4369 = vpop.f32.mrf.mxu0
    %v4370 = vadd.f32 %v4356, %v4369
    %v4371 = vpop.f32.mrf.mxu0
    %v4372 = vadd.f32 %v4358, %v4371
    %4373 = vdwg.mxu0
    %4374 = vmatpush.bf16.msra.mxu0 %v2843
    %4375 = vmatpush.bf16.msra.mxu0 %v2839
    %4376 = vmatpush.bf16.msra.mxu0 %v2835
    %4377 = vmatpush.bf16.msra.mxu0 %v2831
    %4378 = vmatpush.bf16.msra.mxu0 %v2827
    %4379 = vmatpush.bf16.msra.mxu0 %v2823
    %4380 = vmatpush.bf16.msra.mxu0 %v2819
    %4381 = vmatpush.bf16.msra.mxu0 %v2815
    %4382 = vmatmul.bf16.gmra.mxu0 %v854
    %v4383 = vpop.f32.mrf.mxu0
    %v4384 = vadd.f32 0.0, %v4383
    %v4385 = vpop.f32.mrf.mxu0
    %v4386 = vadd.f32 0.0, %v4385
    %4387 = vdwg.mxu0
    %4388 = vmatpush.bf16.msra.mxu0 %v2875
    %4389 = vmatpush.bf16.msra.mxu0 %v2871
    %4390 = vmatpush.bf16.msra.mxu0 %v2867
    %4391 = vmatpush.bf16.msra.mxu0 %v2863
    %4392 = vmatpush.bf16.msra.mxu0 %v2859
    %4393 = vmatpush.bf16.msra.mxu0 %v2855
    %4394 = vmatpush.bf16.msra.mxu0 %v2851
    %4395 = vmatpush.bf16.msra.mxu0 %v2847
    %4396 = vmatmul.bf16.gmra.mxu0 %v855
    %v4397 = vpop.f32.mrf.mxu0
    %v4398 = vadd.f32 %v4384, %v4397
    %v4399 = vpop.f32.mrf.mxu0
    %v4400 = vadd.f32 %v4386, %v4399
    %4401 = vdwg.mxu0
    %4402 = vmatpush.bf16.msra.mxu0 %v2907
    %4403 = vmatpush.bf16.msra.mxu0 %v2903
    %4404 = vmatpush.bf16.msra.mxu0 %v2899
    %4405 = vmatpush.bf16.msra.mxu0 %v2895
    %4406 = vmatpush.bf16.msra.mxu0 %v2891
    %4407 = vmatpush.bf16.msra.mxu0 %v2887
    %4408 = vmatpush.bf16.msra.mxu0 %v2883
    %4409 = vmatpush.bf16.msra.mxu0 %v2879
    %4410 = vmatmul.bf16.gmra.mxu0 %v856
    %v4411 = vpop.f32.mrf.mxu0
    %v4412 = vadd.f32 %v4398, %v4411
    %v4413 = vpop.f32.mrf.mxu0
    %v4414 = vadd.f32 %v4400, %v4413
    %4415 = vdwg.mxu0
    %4416 = vmatpush.bf16.msra.mxu0 %v2939
    %4417 = vmatpush.bf16.msra.mxu0 %v2935
    %4418 = vmatpush.bf16.msra.mxu0 %v2931
    %4419 = vmatpush.bf16.msra.mxu0 %v2927
    %4420 = vmatpush.bf16.msra.mxu0 %v2923
    %4421 = vmatpush.bf16.msra.mxu0 %v2919
    %4422 = vmatpush.bf16.msra.mxu0 %v2915
    %4423 = vmatpush.bf16.msra.mxu0 %v2911
    %4424 = vmatmul.bf16.gmra.mxu0 %v857
    %v4425 = vpop.f32.mrf.mxu0
    %v4426 = vadd.f32 %v4412, %v4425
    %v4427 = vpop.f32.mrf.mxu0
    %v4428 = vadd.f32 %v4414, %v4427
    %4429 = vdwg.mxu0
    %4430 = vmatpush.bf16.msra.mxu0 %v2971
    %4431 = vmatpush.bf16.msra.mxu0 %v2967
    %4432 = vmatpush.bf16.msra.mxu0 %v2963
    %4433 = vmatpush.bf16.msra.mxu0 %v2959
    %4434 = vmatpush.bf16.msra.mxu0 %v2955
    %4435 = vmatpush.bf16.msra.mxu0 %v2951
    %4436 = vmatpush.bf16.msra.mxu0 %v2947
    %4437 = vmatpush.bf16.msra.mxu0 %v2943
    %4438 = vmatmul.bf16.gmra.mxu0 %v858
    %v4439 = vpop.f32.mrf.mxu0
    %v4440 = vadd.f32 %v4426, %v4439
    %v4441 = vpop.f32.mrf.mxu0
    %v4442 = vadd.f32 %v4428, %v4441
    %4443 = vdwg.mxu0
    %4444 = vmatpush.bf16.msra.mxu0 %v3003
    %4445 = vmatpush.bf16.msra.mxu0 %v2999
    %4446 = vmatpush.bf16.msra.mxu0 %v2995
    %4447 = vmatpush.bf16.msra.mxu0 %v2991
    %4448 = vmatpush.bf16.msra.mxu0 %v2987
    %4449 = vmatpush.bf16.msra.mxu0 %v2983
    %4450 = vmatpush.bf16.msra.mxu0 %v2979
    %4451 = vmatpush.bf16.msra.mxu0 %v2975
    %4452 = vmatmul.bf16.gmra.mxu0 %v859
    %v4453 = vpop.f32.mrf.mxu0
    %v4454 = vadd.f32 %v4440, %v4453
    %v4455 = vpop.f32.mrf.mxu0
    %v4456 = vadd.f32 %v4442, %v4455
    %4457 = vdwg.mxu0
    %4458 = vmatpush.bf16.msra.mxu0 %v3035
    %4459 = vmatpush.bf16.msra.mxu0 %v3031
    %4460 = vmatpush.bf16.msra.mxu0 %v3027
    %4461 = vmatpush.bf16.msra.mxu0 %v3023
    %4462 = vmatpush.bf16.msra.mxu0 %v3019
    %4463 = vmatpush.bf16.msra.mxu0 %v3015
    %4464 = vmatpush.bf16.msra.mxu0 %v3011
    %4465 = vmatpush.bf16.msra.mxu0 %v3007
    %4466 = vmatmul.bf16.gmra.mxu0 %v860
    %v4467 = vpop.f32.mrf.mxu0
    %v4468 = vadd.f32 %v4454, %v4467
    %v4469 = vpop.f32.mrf.mxu0
    %v4470 = vadd.f32 %v4456, %v4469
    %4471 = vdwg.mxu0
    %4472 = vmatpush.bf16.msra.mxu0 %v3067
    %4473 = vmatpush.bf16.msra.mxu0 %v3063
    %4474 = vmatpush.bf16.msra.mxu0 %v3059
    %4475 = vmatpush.bf16.msra.mxu0 %v3055
    %4476 = vmatpush.bf16.msra.mxu0 %v3051
    %4477 = vmatpush.bf16.msra.mxu0 %v3047
    %4478 = vmatpush.bf16.msra.mxu0 %v3043
    %4479 = vmatpush.bf16.msra.mxu0 %v3039
    %4480 = vmatmul.bf16.gmra.mxu0 %v861
    %v4481 = vpop.f32.mrf.mxu0
    %v4482 = vadd.f32 %v4468, %v4481
    %v4483 = vpop.f32.mrf.mxu0
    %v4484 = vadd.f32 %v4470, %v4483
    %4485 = vdwg.mxu0
    %4486 = vmatpush.bf16.msra.mxu0 %v3099
    %4487 = vmatpush.bf16.msra.mxu0 %v3095
    %4488 = vmatpush.bf16.msra.mxu0 %v3091
    %4489 = vmatpush.bf16.msra.mxu0 %v3087
    %4490 = vmatpush.bf16.msra.mxu0 %v3083
    %4491 = vmatpush.bf16.msra.mxu0 %v3079
    %4492 = vmatpush.bf16.msra.mxu0 %v3075
    %4493 = vmatpush.bf16.msra.mxu0 %v3071
    %4494 = vmatmul.bf16.gmra.mxu0 %v862
    %v4495 = vpop.f32.mrf.mxu0
    %v4496 = vadd.f32 %v4482, %v4495
    %v4497 = vpop.f32.mrf.mxu0
    %v4498 = vadd.f32 %v4484, %v4497
    %4499 = vdwg.mxu0
    %4500 = vmatpush.bf16.msra.mxu0 %v3131
    %4501 = vmatpush.bf16.msra.mxu0 %v3127
    %4502 = vmatpush.bf16.msra.mxu0 %v3123
    %4503 = vmatpush.bf16.msra.mxu0 %v3119
    %4504 = vmatpush.bf16.msra.mxu0 %v3115
    %4505 = vmatpush.bf16.msra.mxu0 %v3111
    %4506 = vmatpush.bf16.msra.mxu0 %v3107
    %4507 = vmatpush.bf16.msra.mxu0 %v3103
    %4508 = vmatmul.bf16.gmra.mxu0 %v863
    %v4509 = vpop.f32.mrf.mxu0
    %v4510 = vadd.f32 %v4496, %v4509
    %v4511 = vpop.f32.mrf.mxu0
    %v4512 = vadd.f32 %v4498, %v4511
    %4513 = vdwg.mxu0
    %4514 = vmatpush.bf16.msra.mxu0 %v3163
    %4515 = vmatpush.bf16.msra.mxu0 %v3159
    %4516 = vmatpush.bf16.msra.mxu0 %v3155
    %4517 = vmatpush.bf16.msra.mxu0 %v3151
    %4518 = vmatpush.bf16.msra.mxu0 %v3147
    %4519 = vmatpush.bf16.msra.mxu0 %v3143
    %4520 = vmatpush.bf16.msra.mxu0 %v3139
    %4521 = vmatpush.bf16.msra.mxu0 %v3135
    %4522 = vmatmul.bf16.gmra.mxu0 %v864
    %v4523 = vpop.f32.mrf.mxu0
    %v4524 = vadd.f32 %v4510, %v4523
    %v4525 = vpop.f32.mrf.mxu0
    %v4526 = vadd.f32 %v4512, %v4525
    %4527 = vdwg.mxu0
    %4528 = vmatpush.bf16.msra.mxu0 %v3195
    %4529 = vmatpush.bf16.msra.mxu0 %v3191
    %4530 = vmatpush.bf16.msra.mxu0 %v3187
    %4531 = vmatpush.bf16.msra.mxu0 %v3183
    %4532 = vmatpush.bf16.msra.mxu0 %v3179
    %4533 = vmatpush.bf16.msra.mxu0 %v3175
    %4534 = vmatpush.bf16.msra.mxu0 %v3171
    %4535 = vmatpush.bf16.msra.mxu0 %v3167
    %4536 = vmatmul.bf16.gmra.mxu0 %v865
    %v4537 = vpop.f32.mrf.mxu0
    %v4538 = vadd.f32 %v4524, %v4537
    %v4539 = vpop.f32.mrf.mxu0
    %v4540 = vadd.f32 %v4526, %v4539
    %4541 = vdwg.mxu0
    %4542 = vmatpush.bf16.msra.mxu0 %v3227
    %4543 = vmatpush.bf16.msra.mxu0 %v3223
    %4544 = vmatpush.bf16.msra.mxu0 %v3219
    %4545 = vmatpush.bf16.msra.mxu0 %v3215
    %4546 = vmatpush.bf16.msra.mxu0 %v3211
    %4547 = vmatpush.bf16.msra.mxu0 %v3207
    %4548 = vmatpush.bf16.msra.mxu0 %v3203
    %4549 = vmatpush.bf16.msra.mxu0 %v3199
    %4550 = vmatmul.bf16.gmra.mxu0 %v866
    %v4551 = vpop.f32.mrf.mxu0
    %v4552 = vadd.f32 %v4538, %v4551
    %v4553 = vpop.f32.mrf.mxu0
    %v4554 = vadd.f32 %v4540, %v4553
    %4555 = vdwg.mxu0
    %4556 = vmatpush.bf16.msra.mxu0 %v3259
    %4557 = vmatpush.bf16.msra.mxu0 %v3255
    %4558 = vmatpush.bf16.msra.mxu0 %v3251
    %4559 = vmatpush.bf16.msra.mxu0 %v3247
    %4560 = vmatpush.bf16.msra.mxu0 %v3243
    %4561 = vmatpush.bf16.msra.mxu0 %v3239
    %4562 = vmatpush.bf16.msra.mxu0 %v3235
    %4563 = vmatpush.bf16.msra.mxu0 %v3231
    %4564 = vmatmul.bf16.gmra.mxu0 %v867
    %v4565 = vpop.f32.mrf.mxu0
    %v4566 = vadd.f32 %v4552, %v4565
    %v4567 = vpop.f32.mrf.mxu0
    %v4568 = vadd.f32 %v4554, %v4567
    %4569 = vdwg.mxu0
    %4570 = vmatpush.bf16.msra.mxu0 %v3291
    %4571 = vmatpush.bf16.msra.mxu0 %v3287
    %4572 = vmatpush.bf16.msra.mxu0 %v3283
    %4573 = vmatpush.bf16.msra.mxu0 %v3279
    %4574 = vmatpush.bf16.msra.mxu0 %v3275
    %4575 = vmatpush.bf16.msra.mxu0 %v3271
    %4576 = vmatpush.bf16.msra.mxu0 %v3267
    %4577 = vmatpush.bf16.msra.mxu0 %v3263
    %4578 = vmatmul.bf16.gmra.mxu0 %v868
    %v4579 = vpop.f32.mrf.mxu0
    %v4580 = vadd.f32 %v4566, %v4579
    %v4581 = vpop.f32.mrf.mxu0
    %v4582 = vadd.f32 %v4568, %v4581
    %4583 = vdwg.mxu0
    %4584 = vmatpush.bf16.msra.mxu0 %v3323
    %4585 = vmatpush.bf16.msra.mxu0 %v3319
    %4586 = vmatpush.bf16.msra.mxu0 %v3315
    %4587 = vmatpush.bf16.msra.mxu0 %v3311
    %4588 = vmatpush.bf16.msra.mxu0 %v3307
    %4589 = vmatpush.bf16.msra.mxu0 %v3303
    %4590 = vmatpush.bf16.msra.mxu0 %v3299
    %4591 = vmatpush.bf16.msra.mxu0 %v3295
    %4592 = vmatmul.bf16.gmra.mxu0 %v869
    %v4593 = vpop.f32.mrf.mxu0
    %v4594 = vadd.f32 %v4580, %v4593
    %v4595 = vpop.f32.mrf.mxu0
    %v4596 = vadd.f32 %v4582, %v4595
    %4597 = vdwg.mxu0
    %4598 = vmatpush.bf16.msra.mxu0 %v3355
    %4599 = vmatpush.bf16.msra.mxu0 %v3351
    %4600 = vmatpush.bf16.msra.mxu0 %v3347
    %4601 = vmatpush.bf16.msra.mxu0 %v3343
    %4602 = vmatpush.bf16.msra.mxu0 %v3339
    %4603 = vmatpush.bf16.msra.mxu0 %v3335
    %4604 = vmatpush.bf16.msra.mxu0 %v3331
    %4605 = vmatpush.bf16.msra.mxu0 %v3327
    %4606 = vmatmul.bf16.gmra.mxu0 %v870
    %v4607 = vpop.f32.mrf.mxu0
    %v4608 = vadd.f32 %v4594, %v4607
    %v4609 = vpop.f32.mrf.mxu0
    %v4610 = vadd.f32 %v4596, %v4609
    %4611 = vdwg.mxu0
    %4612 = vmatpush.bf16.msra.mxu0 %v3387
    %4613 = vmatpush.bf16.msra.mxu0 %v3383
    %4614 = vmatpush.bf16.msra.mxu0 %v3379
    %4615 = vmatpush.bf16.msra.mxu0 %v3375
    %4616 = vmatpush.bf16.msra.mxu0 %v3371
    %4617 = vmatpush.bf16.msra.mxu0 %v3367
    %4618 = vmatpush.bf16.msra.mxu0 %v3363
    %4619 = vmatpush.bf16.msra.mxu0 %v3359
    %4620 = vmatmul.bf16.gmra.mxu0 %v871
    %v4621 = vpop.f32.mrf.mxu0
    %v4622 = vadd.f32 %v4608, %v4621
    %v4623 = vpop.f32.mrf.mxu0
    %v4624 = vadd.f32 %v4610, %v4623
    %4625 = vdwg.mxu0
    %4626 = vmatpush.bf16.msra.mxu0 %v3419
    %4627 = vmatpush.bf16.msra.mxu0 %v3415
    %4628 = vmatpush.bf16.msra.mxu0 %v3411
    %4629 = vmatpush.bf16.msra.mxu0 %v3407
    %4630 = vmatpush.bf16.msra.mxu0 %v3403
    %4631 = vmatpush.bf16.msra.mxu0 %v3399
    %4632 = vmatpush.bf16.msra.mxu0 %v3395
    %4633 = vmatpush.bf16.msra.mxu0 %v3391
    %4634 = vmatmul.bf16.gmra.mxu0 %v872
    %v4635 = vpop.f32.mrf.mxu0
    %v4636 = vadd.f32 %v4622, %v4635
    %v4637 = vpop.f32.mrf.mxu0
    %v4638 = vadd.f32 %v4624, %v4637
    %4639 = vdwg.mxu0
    %4640 = vmatpush.bf16.msra.mxu0 %v3451
    %4641 = vmatpush.bf16.msra.mxu0 %v3447
    %4642 = vmatpush.bf16.msra.mxu0 %v3443
    %4643 = vmatpush.bf16.msra.mxu0 %v3439
    %4644 = vmatpush.bf16.msra.mxu0 %v3435
    %4645 = vmatpush.bf16.msra.mxu0 %v3431
    %4646 = vmatpush.bf16.msra.mxu0 %v3427
    %4647 = vmatpush.bf16.msra.mxu0 %v3423
    %4648 = vmatmul.bf16.gmra.mxu0 %v873
    %v4649 = vpop.f32.mrf.mxu0
    %v4650 = vadd.f32 %v4636, %v4649
    %v4651 = vpop.f32.mrf.mxu0
    %v4652 = vadd.f32 %v4638, %v4651
    %4653 = vdwg.mxu0
    %4654 = vmatpush.bf16.msra.mxu0 %v2844
    %4655 = vmatpush.bf16.msra.mxu0 %v2840
    %4656 = vmatpush.bf16.msra.mxu0 %v2836
    %4657 = vmatpush.bf16.msra.mxu0 %v2832
    %4658 = vmatpush.bf16.msra.mxu0 %v2828
    %4659 = vmatpush.bf16.msra.mxu0 %v2824
    %4660 = vmatpush.bf16.msra.mxu0 %v2820
    %4661 = vmatpush.bf16.msra.mxu0 %v2816
    %4662 = vmatmul.bf16.gmra.mxu0 %v854
    %v4663 = vpop.f32.mrf.mxu0
    %v4664 = vadd.f32 0.0, %v4663
    %v4665 = vpop.f32.mrf.mxu0
    %v4666 = vadd.f32 0.0, %v4665
    %4667 = vdwg.mxu0
    %4668 = vmatpush.bf16.msra.mxu0 %v2876
    %4669 = vmatpush.bf16.msra.mxu0 %v2872
    %4670 = vmatpush.bf16.msra.mxu0 %v2868
    %4671 = vmatpush.bf16.msra.mxu0 %v2864
    %4672 = vmatpush.bf16.msra.mxu0 %v2860
    %4673 = vmatpush.bf16.msra.mxu0 %v2856
    %4674 = vmatpush.bf16.msra.mxu0 %v2852
    %4675 = vmatpush.bf16.msra.mxu0 %v2848
    %4676 = vmatmul.bf16.gmra.mxu0 %v855
    %v4677 = vpop.f32.mrf.mxu0
    %v4678 = vadd.f32 %v4664, %v4677
    %v4679 = vpop.f32.mrf.mxu0
    %v4680 = vadd.f32 %v4666, %v4679
    %4681 = vdwg.mxu0
    %4682 = vmatpush.bf16.msra.mxu0 %v2908
    %4683 = vmatpush.bf16.msra.mxu0 %v2904
    %4684 = vmatpush.bf16.msra.mxu0 %v2900
    %4685 = vmatpush.bf16.msra.mxu0 %v2896
    %4686 = vmatpush.bf16.msra.mxu0 %v2892
    %4687 = vmatpush.bf16.msra.mxu0 %v2888
    %4688 = vmatpush.bf16.msra.mxu0 %v2884
    %4689 = vmatpush.bf16.msra.mxu0 %v2880
    %4690 = vmatmul.bf16.gmra.mxu0 %v856
    %v4691 = vpop.f32.mrf.mxu0
    %v4692 = vadd.f32 %v4678, %v4691
    %v4693 = vpop.f32.mrf.mxu0
    %v4694 = vadd.f32 %v4680, %v4693
    %4695 = vdwg.mxu0
    %4696 = vmatpush.bf16.msra.mxu0 %v2940
    %4697 = vmatpush.bf16.msra.mxu0 %v2936
    %4698 = vmatpush.bf16.msra.mxu0 %v2932
    %4699 = vmatpush.bf16.msra.mxu0 %v2928
    %4700 = vmatpush.bf16.msra.mxu0 %v2924
    %4701 = vmatpush.bf16.msra.mxu0 %v2920
    %4702 = vmatpush.bf16.msra.mxu0 %v2916
    %4703 = vmatpush.bf16.msra.mxu0 %v2912
    %4704 = vmatmul.bf16.gmra.mxu0 %v857
    %v4705 = vpop.f32.mrf.mxu0
    %v4706 = vadd.f32 %v4692, %v4705
    %v4707 = vpop.f32.mrf.mxu0
    %v4708 = vadd.f32 %v4694, %v4707
    %4709 = vdwg.mxu0
    %4710 = vmatpush.bf16.msra.mxu0 %v2972
    %4711 = vmatpush.bf16.msra.mxu0 %v2968
    %4712 = vmatpush.bf16.msra.mxu0 %v2964
    %4713 = vmatpush.bf16.msra.mxu0 %v2960
    %4714 = vmatpush.bf16.msra.mxu0 %v2956
    %4715 = vmatpush.bf16.msra.mxu0 %v2952
    %4716 = vmatpush.bf16.msra.mxu0 %v2948
    %4717 = vmatpush.bf16.msra.mxu0 %v2944
    %4718 = vmatmul.bf16.gmra.mxu0 %v858
    %v4719 = vpop.f32.mrf.mxu0
    %v4720 = vadd.f32 %v4706, %v4719
    %v4721 = vpop.f32.mrf.mxu0
    %v4722 = vadd.f32 %v4708, %v4721
    %4723 = vdwg.mxu0
    %4724 = vmatpush.bf16.msra.mxu0 %v3004
    %4725 = vmatpush.bf16.msra.mxu0 %v3000
    %4726 = vmatpush.bf16.msra.mxu0 %v2996
    %4727 = vmatpush.bf16.msra.mxu0 %v2992
    %4728 = vmatpush.bf16.msra.mxu0 %v2988
    %4729 = vmatpush.bf16.msra.mxu0 %v2984
    %4730 = vmatpush.bf16.msra.mxu0 %v2980
    %4731 = vmatpush.bf16.msra.mxu0 %v2976
    %4732 = vmatmul.bf16.gmra.mxu0 %v859
    %v4733 = vpop.f32.mrf.mxu0
    %v4734 = vadd.f32 %v4720, %v4733
    %v4735 = vpop.f32.mrf.mxu0
    %v4736 = vadd.f32 %v4722, %v4735
    %4737 = vdwg.mxu0
    %4738 = vmatpush.bf16.msra.mxu0 %v3036
    %4739 = vmatpush.bf16.msra.mxu0 %v3032
    %4740 = vmatpush.bf16.msra.mxu0 %v3028
    %4741 = vmatpush.bf16.msra.mxu0 %v3024
    %4742 = vmatpush.bf16.msra.mxu0 %v3020
    %4743 = vmatpush.bf16.msra.mxu0 %v3016
    %4744 = vmatpush.bf16.msra.mxu0 %v3012
    %4745 = vmatpush.bf16.msra.mxu0 %v3008
    %4746 = vmatmul.bf16.gmra.mxu0 %v860
    %v4747 = vpop.f32.mrf.mxu0
    %v4748 = vadd.f32 %v4734, %v4747
    %v4749 = vpop.f32.mrf.mxu0
    %v4750 = vadd.f32 %v4736, %v4749
    %4751 = vdwg.mxu0
    %4752 = vmatpush.bf16.msra.mxu0 %v3068
    %4753 = vmatpush.bf16.msra.mxu0 %v3064
    %4754 = vmatpush.bf16.msra.mxu0 %v3060
    %4755 = vmatpush.bf16.msra.mxu0 %v3056
    %4756 = vmatpush.bf16.msra.mxu0 %v3052
    %4757 = vmatpush.bf16.msra.mxu0 %v3048
    %4758 = vmatpush.bf16.msra.mxu0 %v3044
    %4759 = vmatpush.bf16.msra.mxu0 %v3040
    %4760 = vmatmul.bf16.gmra.mxu0 %v861
    %v4761 = vpop.f32.mrf.mxu0
    %v4762 = vadd.f32 %v4748, %v4761
    %v4763 = vpop.f32.mrf.mxu0
    %v4764 = vadd.f32 %v4750, %v4763
    %4765 = vdwg.mxu0
    %4766 = vmatpush.bf16.msra.mxu0 %v3100
    %4767 = vmatpush.bf16.msra.mxu0 %v3096
    %4768 = vmatpush.bf16.msra.mxu0 %v3092
    %4769 = vmatpush.bf16.msra.mxu0 %v3088
    %4770 = vmatpush.bf16.msra.mxu0 %v3084
    %4771 = vmatpush.bf16.msra.mxu0 %v3080
    %4772 = vmatpush.bf16.msra.mxu0 %v3076
    %4773 = vmatpush.bf16.msra.mxu0 %v3072
    %4774 = vmatmul.bf16.gmra.mxu0 %v862
    %v4775 = vpop.f32.mrf.mxu0
    %v4776 = vadd.f32 %v4762, %v4775
    %v4777 = vpop.f32.mrf.mxu0
    %v4778 = vadd.f32 %v4764, %v4777
    %4779 = vdwg.mxu0
    %4780 = vmatpush.bf16.msra.mxu0 %v3132
    %4781 = vmatpush.bf16.msra.mxu0 %v3128
    %4782 = vmatpush.bf16.msra.mxu0 %v3124
    %4783 = vmatpush.bf16.msra.mxu0 %v3120
    %4784 = vmatpush.bf16.msra.mxu0 %v3116
    %4785 = vmatpush.bf16.msra.mxu0 %v3112
    %4786 = vmatpush.bf16.msra.mxu0 %v3108
    %4787 = vmatpush.bf16.msra.mxu0 %v3104
    %4788 = vmatmul.bf16.gmra.mxu0 %v863
    %v4789 = vpop.f32.mrf.mxu0
    %v4790 = vadd.f32 %v4776, %v4789
    %v4791 = vpop.f32.mrf.mxu0
    %v4792 = vadd.f32 %v4778, %v4791
    %4793 = vdwg.mxu0
    %4794 = vmatpush.bf16.msra.mxu0 %v3164
    %4795 = vmatpush.bf16.msra.mxu0 %v3160
    %4796 = vmatpush.bf16.msra.mxu0 %v3156
    %4797 = vmatpush.bf16.msra.mxu0 %v3152
    %4798 = vmatpush.bf16.msra.mxu0 %v3148
    %4799 = vmatpush.bf16.msra.mxu0 %v3144
    %4800 = vmatpush.bf16.msra.mxu0 %v3140
    %4801 = vmatpush.bf16.msra.mxu0 %v3136
    %4802 = vmatmul.bf16.gmra.mxu0 %v864
    %v4803 = vpop.f32.mrf.mxu0
    %v4804 = vadd.f32 %v4790, %v4803
    %v4805 = vpop.f32.mrf.mxu0
    %v4806 = vadd.f32 %v4792, %v4805
    %4807 = vdwg.mxu0
    %4808 = vmatpush.bf16.msra.mxu0 %v3196
    %4809 = vmatpush.bf16.msra.mxu0 %v3192
    %4810 = vmatpush.bf16.msra.mxu0 %v3188
    %4811 = vmatpush.bf16.msra.mxu0 %v3184
    %4812 = vmatpush.bf16.msra.mxu0 %v3180
    %4813 = vmatpush.bf16.msra.mxu0 %v3176
    %4814 = vmatpush.bf16.msra.mxu0 %v3172
    %4815 = vmatpush.bf16.msra.mxu0 %v3168
    %4816 = vmatmul.bf16.gmra.mxu0 %v865
    %v4817 = vpop.f32.mrf.mxu0
    %v4818 = vadd.f32 %v4804, %v4817
    %v4819 = vpop.f32.mrf.mxu0
    %v4820 = vadd.f32 %v4806, %v4819
    %4821 = vdwg.mxu0
    %4822 = vmatpush.bf16.msra.mxu0 %v3228
    %4823 = vmatpush.bf16.msra.mxu0 %v3224
    %4824 = vmatpush.bf16.msra.mxu0 %v3220
    %4825 = vmatpush.bf16.msra.mxu0 %v3216
    %4826 = vmatpush.bf16.msra.mxu0 %v3212
    %4827 = vmatpush.bf16.msra.mxu0 %v3208
    %4828 = vmatpush.bf16.msra.mxu0 %v3204
    %4829 = vmatpush.bf16.msra.mxu0 %v3200
    %4830 = vmatmul.bf16.gmra.mxu0 %v866
    %v4831 = vpop.f32.mrf.mxu0
    %v4832 = vadd.f32 %v4818, %v4831
    %v4833 = vpop.f32.mrf.mxu0
    %v4834 = vadd.f32 %v4820, %v4833
    %4835 = vdwg.mxu0
    %4836 = vmatpush.bf16.msra.mxu0 %v3260
    %4837 = vmatpush.bf16.msra.mxu0 %v3256
    %4838 = vmatpush.bf16.msra.mxu0 %v3252
    %4839 = vmatpush.bf16.msra.mxu0 %v3248
    %4840 = vmatpush.bf16.msra.mxu0 %v3244
    %4841 = vmatpush.bf16.msra.mxu0 %v3240
    %4842 = vmatpush.bf16.msra.mxu0 %v3236
    %4843 = vmatpush.bf16.msra.mxu0 %v3232
    %4844 = vmatmul.bf16.gmra.mxu0 %v867
    %v4845 = vpop.f32.mrf.mxu0
    %v4846 = vadd.f32 %v4832, %v4845
    %v4847 = vpop.f32.mrf.mxu0
    %v4848 = vadd.f32 %v4834, %v4847
    %4849 = vdwg.mxu0
    %4850 = vmatpush.bf16.msra.mxu0 %v3292
    %4851 = vmatpush.bf16.msra.mxu0 %v3288
    %4852 = vmatpush.bf16.msra.mxu0 %v3284
    %4853 = vmatpush.bf16.msra.mxu0 %v3280
    %4854 = vmatpush.bf16.msra.mxu0 %v3276
    %4855 = vmatpush.bf16.msra.mxu0 %v3272
    %4856 = vmatpush.bf16.msra.mxu0 %v3268
    %4857 = vmatpush.bf16.msra.mxu0 %v3264
    %4858 = vmatmul.bf16.gmra.mxu0 %v868
    %v4859 = vpop.f32.mrf.mxu0
    %v4860 = vadd.f32 %v4846, %v4859
    %v4861 = vpop.f32.mrf.mxu0
    %v4862 = vadd.f32 %v4848, %v4861
    %4863 = vdwg.mxu0
    %4864 = vmatpush.bf16.msra.mxu0 %v3324
    %4865 = vmatpush.bf16.msra.mxu0 %v3320
    %4866 = vmatpush.bf16.msra.mxu0 %v3316
    %4867 = vmatpush.bf16.msra.mxu0 %v3312
    %4868 = vmatpush.bf16.msra.mxu0 %v3308
    %4869 = vmatpush.bf16.msra.mxu0 %v3304
    %4870 = vmatpush.bf16.msra.mxu0 %v3300
    %4871 = vmatpush.bf16.msra.mxu0 %v3296
    %4872 = vmatmul.bf16.gmra.mxu0 %v869
    %v4873 = vpop.f32.mrf.mxu0
    %v4874 = vadd.f32 %v4860, %v4873
    %v4875 = vpop.f32.mrf.mxu0
    %v4876 = vadd.f32 %v4862, %v4875
    %4877 = vdwg.mxu0
    %4878 = vmatpush.bf16.msra.mxu0 %v3356
    %4879 = vmatpush.bf16.msra.mxu0 %v3352
    %4880 = vmatpush.bf16.msra.mxu0 %v3348
    %4881 = vmatpush.bf16.msra.mxu0 %v3344
    %4882 = vmatpush.bf16.msra.mxu0 %v3340
    %4883 = vmatpush.bf16.msra.mxu0 %v3336
    %4884 = vmatpush.bf16.msra.mxu0 %v3332
    %4885 = vmatpush.bf16.msra.mxu0 %v3328
    %4886 = vmatmul.bf16.gmra.mxu0 %v870
    %v4887 = vpop.f32.mrf.mxu0
    %v4888 = vadd.f32 %v4874, %v4887
    %v4889 = vpop.f32.mrf.mxu0
    %v4890 = vadd.f32 %v4876, %v4889
    %4891 = vdwg.mxu0
    %4892 = vmatpush.bf16.msra.mxu0 %v3388
    %4893 = vmatpush.bf16.msra.mxu0 %v3384
    %4894 = vmatpush.bf16.msra.mxu0 %v3380
    %4895 = vmatpush.bf16.msra.mxu0 %v3376
    %4896 = vmatpush.bf16.msra.mxu0 %v3372
    %4897 = vmatpush.bf16.msra.mxu0 %v3368
    %4898 = vmatpush.bf16.msra.mxu0 %v3364
    %4899 = vmatpush.bf16.msra.mxu0 %v3360
    %4900 = vmatmul.bf16.gmra.mxu0 %v871
    %v4901 = vpop.f32.mrf.mxu0
    %v4902 = vadd.f32 %v4888, %v4901
    %v4903 = vpop.f32.mrf.mxu0
    %v4904 = vadd.f32 %v4890, %v4903
    %4905 = vdwg.mxu0
    %4906 = vmatpush.bf16.msra.mxu0 %v3420
    %4907 = vmatpush.bf16.msra.mxu0 %v3416
    %4908 = vmatpush.bf16.msra.mxu0 %v3412
    %4909 = vmatpush.bf16.msra.mxu0 %v3408
    %4910 = vmatpush.bf16.msra.mxu0 %v3404
    %4911 = vmatpush.bf16.msra.mxu0 %v3400
    %4912 = vmatpush.bf16.msra.mxu0 %v3396
    %4913 = vmatpush.bf16.msra.mxu0 %v3392
    %4914 = vmatmul.bf16.gmra.mxu0 %v872
    %v4915 = vpop.f32.mrf.mxu0
    %v4916 = vadd.f32 %v4902, %v4915
    %v4917 = vpop.f32.mrf.mxu0
    %v4918 = vadd.f32 %v4904, %v4917
    %4919 = vdwg.mxu0
    %4920 = vmatpush.bf16.msra.mxu0 %v3452
    %4921 = vmatpush.bf16.msra.mxu0 %v3448
    %4922 = vmatpush.bf16.msra.mxu0 %v3444
    %4923 = vmatpush.bf16.msra.mxu0 %v3440
    %4924 = vmatpush.bf16.msra.mxu0 %v3436
    %4925 = vmatpush.bf16.msra.mxu0 %v3432
    %4926 = vmatpush.bf16.msra.mxu0 %v3428
    %4927 = vmatpush.bf16.msra.mxu0 %v3424
    %4928 = vmatmul.bf16.gmra.mxu0 %v873
    %v4929 = vpop.f32.mrf.mxu0
    %v4930 = vadd.f32 %v4916, %v4929
    %v4931 = vpop.f32.mrf.mxu0
    %v4932 = vadd.f32 %v4918, %v4931
    %4933 = vdwg.mxu0
    %4934 = vmatpush.bf16.msra.mxu0 %v2845
    %4935 = vmatpush.bf16.msra.mxu0 %v2841
    %4936 = vmatpush.bf16.msra.mxu0 %v2837
    %4937 = vmatpush.bf16.msra.mxu0 %v2833
    %4938 = vmatpush.bf16.msra.mxu0 %v2829
    %4939 = vmatpush.bf16.msra.mxu0 %v2825
    %4940 = vmatpush.bf16.msra.mxu0 %v2821
    %4941 = vmatpush.bf16.msra.mxu0 %v2817
    %4942 = vmatmul.bf16.gmra.mxu0 %v854
    %v4943 = vpop.f32.mrf.mxu0
    %v4944 = vadd.f32 0.0, %v4943
    %v4945 = vpop.f32.mrf.mxu0
    %v4946 = vadd.f32 0.0, %v4945
    %4947 = vdwg.mxu0
    %4948 = vmatpush.bf16.msra.mxu0 %v2877
    %4949 = vmatpush.bf16.msra.mxu0 %v2873
    %4950 = vmatpush.bf16.msra.mxu0 %v2869
    %4951 = vmatpush.bf16.msra.mxu0 %v2865
    %4952 = vmatpush.bf16.msra.mxu0 %v2861
    %4953 = vmatpush.bf16.msra.mxu0 %v2857
    %4954 = vmatpush.bf16.msra.mxu0 %v2853
    %4955 = vmatpush.bf16.msra.mxu0 %v2849
    %4956 = vmatmul.bf16.gmra.mxu0 %v855
    %v4957 = vpop.f32.mrf.mxu0
    %v4958 = vadd.f32 %v4944, %v4957
    %v4959 = vpop.f32.mrf.mxu0
    %v4960 = vadd.f32 %v4946, %v4959
    %4961 = vdwg.mxu0
    %4962 = vmatpush.bf16.msra.mxu0 %v2909
    %4963 = vmatpush.bf16.msra.mxu0 %v2905
    %4964 = vmatpush.bf16.msra.mxu0 %v2901
    %4965 = vmatpush.bf16.msra.mxu0 %v2897
    %4966 = vmatpush.bf16.msra.mxu0 %v2893
    %4967 = vmatpush.bf16.msra.mxu0 %v2889
    %4968 = vmatpush.bf16.msra.mxu0 %v2885
    %4969 = vmatpush.bf16.msra.mxu0 %v2881
    %4970 = vmatmul.bf16.gmra.mxu0 %v856
    %v4971 = vpop.f32.mrf.mxu0
    %v4972 = vadd.f32 %v4958, %v4971
    %v4973 = vpop.f32.mrf.mxu0
    %v4974 = vadd.f32 %v4960, %v4973
    %4975 = vdwg.mxu0
    %4976 = vmatpush.bf16.msra.mxu0 %v2941
    %4977 = vmatpush.bf16.msra.mxu0 %v2937
    %4978 = vmatpush.bf16.msra.mxu0 %v2933
    %4979 = vmatpush.bf16.msra.mxu0 %v2929
    %4980 = vmatpush.bf16.msra.mxu0 %v2925
    %4981 = vmatpush.bf16.msra.mxu0 %v2921
    %4982 = vmatpush.bf16.msra.mxu0 %v2917
    %4983 = vmatpush.bf16.msra.mxu0 %v2913
    %4984 = vmatmul.bf16.gmra.mxu0 %v857
    %v4985 = vpop.f32.mrf.mxu0
    %v4986 = vadd.f32 %v4972, %v4985
    %v4987 = vpop.f32.mrf.mxu0
    %v4988 = vadd.f32 %v4974, %v4987
    %4989 = vdwg.mxu0
    %4990 = vmatpush.bf16.msra.mxu0 %v2973
    %4991 = vmatpush.bf16.msra.mxu0 %v2969
    %4992 = vmatpush.bf16.msra.mxu0 %v2965
    %4993 = vmatpush.bf16.msra.mxu0 %v2961
    %4994 = vmatpush.bf16.msra.mxu0 %v2957
    %4995 = vmatpush.bf16.msra.mxu0 %v2953
    %4996 = vmatpush.bf16.msra.mxu0 %v2949
    %4997 = vmatpush.bf16.msra.mxu0 %v2945
    %4998 = vmatmul.bf16.gmra.mxu0 %v858
    %v4999 = vpop.f32.mrf.mxu0
    %v5000 = vadd.f32 %v4986, %v4999
    %v5001 = vpop.f32.mrf.mxu0
    %v5002 = vadd.f32 %v4988, %v5001
    %5003 = vdwg.mxu0
    %5004 = vmatpush.bf16.msra.mxu0 %v3005
    %5005 = vmatpush.bf16.msra.mxu0 %v3001
    %5006 = vmatpush.bf16.msra.mxu0 %v2997
    %5007 = vmatpush.bf16.msra.mxu0 %v2993
    %5008 = vmatpush.bf16.msra.mxu0 %v2989
    %5009 = vmatpush.bf16.msra.mxu0 %v2985
    %5010 = vmatpush.bf16.msra.mxu0 %v2981
    %5011 = vmatpush.bf16.msra.mxu0 %v2977
    %5012 = vmatmul.bf16.gmra.mxu0 %v859
    %v5013 = vpop.f32.mrf.mxu0
    %v5014 = vadd.f32 %v5000, %v5013
    %v5015 = vpop.f32.mrf.mxu0
    %v5016 = vadd.f32 %v5002, %v5015
    %5017 = vdwg.mxu0
    %5018 = vmatpush.bf16.msra.mxu0 %v3037
    %5019 = vmatpush.bf16.msra.mxu0 %v3033
    %5020 = vmatpush.bf16.msra.mxu0 %v3029
    %5021 = vmatpush.bf16.msra.mxu0 %v3025
    %5022 = vmatpush.bf16.msra.mxu0 %v3021
    %5023 = vmatpush.bf16.msra.mxu0 %v3017
    %5024 = vmatpush.bf16.msra.mxu0 %v3013
    %5025 = vmatpush.bf16.msra.mxu0 %v3009
    %5026 = vmatmul.bf16.gmra.mxu0 %v860
    %v5027 = vpop.f32.mrf.mxu0
    %v5028 = vadd.f32 %v5014, %v5027
    %v5029 = vpop.f32.mrf.mxu0
    %v5030 = vadd.f32 %v5016, %v5029
    %5031 = vdwg.mxu0
    %5032 = vmatpush.bf16.msra.mxu0 %v3069
    %5033 = vmatpush.bf16.msra.mxu0 %v3065
    %5034 = vmatpush.bf16.msra.mxu0 %v3061
    %5035 = vmatpush.bf16.msra.mxu0 %v3057
    %5036 = vmatpush.bf16.msra.mxu0 %v3053
    %5037 = vmatpush.bf16.msra.mxu0 %v3049
    %5038 = vmatpush.bf16.msra.mxu0 %v3045
    %5039 = vmatpush.bf16.msra.mxu0 %v3041
    %5040 = vmatmul.bf16.gmra.mxu0 %v861
    %v5041 = vpop.f32.mrf.mxu0
    %v5042 = vadd.f32 %v5028, %v5041
    %v5043 = vpop.f32.mrf.mxu0
    %v5044 = vadd.f32 %v5030, %v5043
    %5045 = vdwg.mxu0
    %5046 = vmatpush.bf16.msra.mxu0 %v3101
    %5047 = vmatpush.bf16.msra.mxu0 %v3097
    %5048 = vmatpush.bf16.msra.mxu0 %v3093
    %5049 = vmatpush.bf16.msra.mxu0 %v3089
    %5050 = vmatpush.bf16.msra.mxu0 %v3085
    %5051 = vmatpush.bf16.msra.mxu0 %v3081
    %5052 = vmatpush.bf16.msra.mxu0 %v3077
    %5053 = vmatpush.bf16.msra.mxu0 %v3073
    %5054 = vmatmul.bf16.gmra.mxu0 %v862
    %v5055 = vpop.f32.mrf.mxu0
    %v5056 = vadd.f32 %v5042, %v5055
    %v5057 = vpop.f32.mrf.mxu0
    %v5058 = vadd.f32 %v5044, %v5057
    %5059 = vdwg.mxu0
    %5060 = vmatpush.bf16.msra.mxu0 %v3133
    %5061 = vmatpush.bf16.msra.mxu0 %v3129
    %5062 = vmatpush.bf16.msra.mxu0 %v3125
    %5063 = vmatpush.bf16.msra.mxu0 %v3121
    %5064 = vmatpush.bf16.msra.mxu0 %v3117
    %5065 = vmatpush.bf16.msra.mxu0 %v3113
    %5066 = vmatpush.bf16.msra.mxu0 %v3109
    %5067 = vmatpush.bf16.msra.mxu0 %v3105
    %5068 = vmatmul.bf16.gmra.mxu0 %v863
    %v5069 = vpop.f32.mrf.mxu0
    %v5070 = vadd.f32 %v5056, %v5069
    %v5071 = vpop.f32.mrf.mxu0
    %v5072 = vadd.f32 %v5058, %v5071
    %5073 = vdwg.mxu0
    %5074 = vmatpush.bf16.msra.mxu0 %v3165
    %5075 = vmatpush.bf16.msra.mxu0 %v3161
    %5076 = vmatpush.bf16.msra.mxu0 %v3157
    %5077 = vmatpush.bf16.msra.mxu0 %v3153
    %5078 = vmatpush.bf16.msra.mxu0 %v3149
    %5079 = vmatpush.bf16.msra.mxu0 %v3145
    %5080 = vmatpush.bf16.msra.mxu0 %v3141
    %5081 = vmatpush.bf16.msra.mxu0 %v3137
    %5082 = vmatmul.bf16.gmra.mxu0 %v864
    %v5083 = vpop.f32.mrf.mxu0
    %v5084 = vadd.f32 %v5070, %v5083
    %v5085 = vpop.f32.mrf.mxu0
    %v5086 = vadd.f32 %v5072, %v5085
    %5087 = vdwg.mxu0
    %5088 = vmatpush.bf16.msra.mxu0 %v3197
    %5089 = vmatpush.bf16.msra.mxu0 %v3193
    %5090 = vmatpush.bf16.msra.mxu0 %v3189
    %5091 = vmatpush.bf16.msra.mxu0 %v3185
    %5092 = vmatpush.bf16.msra.mxu0 %v3181
    %5093 = vmatpush.bf16.msra.mxu0 %v3177
    %5094 = vmatpush.bf16.msra.mxu0 %v3173
    %5095 = vmatpush.bf16.msra.mxu0 %v3169
    %5096 = vmatmul.bf16.gmra.mxu0 %v865
    %v5097 = vpop.f32.mrf.mxu0
    %v5098 = vadd.f32 %v5084, %v5097
    %v5099 = vpop.f32.mrf.mxu0
    %v5100 = vadd.f32 %v5086, %v5099
    %5101 = vdwg.mxu0
    %5102 = vmatpush.bf16.msra.mxu0 %v3229
    %5103 = vmatpush.bf16.msra.mxu0 %v3225
    %5104 = vmatpush.bf16.msra.mxu0 %v3221
    %5105 = vmatpush.bf16.msra.mxu0 %v3217
    %5106 = vmatpush.bf16.msra.mxu0 %v3213
    %5107 = vmatpush.bf16.msra.mxu0 %v3209
    %5108 = vmatpush.bf16.msra.mxu0 %v3205
    %5109 = vmatpush.bf16.msra.mxu0 %v3201
    %5110 = vmatmul.bf16.gmra.mxu0 %v866
    %v5111 = vpop.f32.mrf.mxu0
    %v5112 = vadd.f32 %v5098, %v5111
    %v5113 = vpop.f32.mrf.mxu0
    %v5114 = vadd.f32 %v5100, %v5113
    %5115 = vdwg.mxu0
    %5116 = vmatpush.bf16.msra.mxu0 %v3261
    %5117 = vmatpush.bf16.msra.mxu0 %v3257
    %5118 = vmatpush.bf16.msra.mxu0 %v3253
    %5119 = vmatpush.bf16.msra.mxu0 %v3249
    %5120 = vmatpush.bf16.msra.mxu0 %v3245
    %5121 = vmatpush.bf16.msra.mxu0 %v3241
    %5122 = vmatpush.bf16.msra.mxu0 %v3237
    %5123 = vmatpush.bf16.msra.mxu0 %v3233
    %5124 = vmatmul.bf16.gmra.mxu0 %v867
    %v5125 = vpop.f32.mrf.mxu0
    %v5126 = vadd.f32 %v5112, %v5125
    %v5127 = vpop.f32.mrf.mxu0
    %v5128 = vadd.f32 %v5114, %v5127
    %5129 = vdwg.mxu0
    %5130 = vmatpush.bf16.msra.mxu0 %v3293
    %5131 = vmatpush.bf16.msra.mxu0 %v3289
    %5132 = vmatpush.bf16.msra.mxu0 %v3285
    %5133 = vmatpush.bf16.msra.mxu0 %v3281
    %5134 = vmatpush.bf16.msra.mxu0 %v3277
    %5135 = vmatpush.bf16.msra.mxu0 %v3273
    %5136 = vmatpush.bf16.msra.mxu0 %v3269
    %5137 = vmatpush.bf16.msra.mxu0 %v3265
    %5138 = vmatmul.bf16.gmra.mxu0 %v868
    %v5139 = vpop.f32.mrf.mxu0
    %v5140 = vadd.f32 %v5126, %v5139
    %v5141 = vpop.f32.mrf.mxu0
    %v5142 = vadd.f32 %v5128, %v5141
    %5143 = vdwg.mxu0
    %5144 = vmatpush.bf16.msra.mxu0 %v3325
    %5145 = vmatpush.bf16.msra.mxu0 %v3321
    %5146 = vmatpush.bf16.msra.mxu0 %v3317
    %5147 = vmatpush.bf16.msra.mxu0 %v3313
    %5148 = vmatpush.bf16.msra.mxu0 %v3309
    %5149 = vmatpush.bf16.msra.mxu0 %v3305
    %5150 = vmatpush.bf16.msra.mxu0 %v3301
    %5151 = vmatpush.bf16.msra.mxu0 %v3297
    %5152 = vmatmul.bf16.gmra.mxu0 %v869
    %v5153 = vpop.f32.mrf.mxu0
    %v5154 = vadd.f32 %v5140, %v5153
    %v5155 = vpop.f32.mrf.mxu0
    %v5156 = vadd.f32 %v5142, %v5155
    %5157 = vdwg.mxu0
    %5158 = vmatpush.bf16.msra.mxu0 %v3357
    %5159 = vmatpush.bf16.msra.mxu0 %v3353
    %5160 = vmatpush.bf16.msra.mxu0 %v3349
    %5161 = vmatpush.bf16.msra.mxu0 %v3345
    %5162 = vmatpush.bf16.msra.mxu0 %v3341
    %5163 = vmatpush.bf16.msra.mxu0 %v3337
    %5164 = vmatpush.bf16.msra.mxu0 %v3333
    %5165 = vmatpush.bf16.msra.mxu0 %v3329
    %5166 = vmatmul.bf16.gmra.mxu0 %v870
    %v5167 = vpop.f32.mrf.mxu0
    %v5168 = vadd.f32 %v5154, %v5167
    %v5169 = vpop.f32.mrf.mxu0
    %v5170 = vadd.f32 %v5156, %v5169
    %5171 = vdwg.mxu0
    %5172 = vmatpush.bf16.msra.mxu0 %v3389
    %5173 = vmatpush.bf16.msra.mxu0 %v3385
    %5174 = vmatpush.bf16.msra.mxu0 %v3381
    %5175 = vmatpush.bf16.msra.mxu0 %v3377
    %5176 = vmatpush.bf16.msra.mxu0 %v3373
    %5177 = vmatpush.bf16.msra.mxu0 %v3369
    %5178 = vmatpush.bf16.msra.mxu0 %v3365
    %5179 = vmatpush.bf16.msra.mxu0 %v3361
    %5180 = vmatmul.bf16.gmra.mxu0 %v871
    %v5181 = vpop.f32.mrf.mxu0
    %v5182 = vadd.f32 %v5168, %v5181
    %v5183 = vpop.f32.mrf.mxu0
    %v5184 = vadd.f32 %v5170, %v5183
    %5185 = vdwg.mxu0
    %5186 = vmatpush.bf16.msra.mxu0 %v3421
    %5187 = vmatpush.bf16.msra.mxu0 %v3417
    %5188 = vmatpush.bf16.msra.mxu0 %v3413
    %5189 = vmatpush.bf16.msra.mxu0 %v3409
    %5190 = vmatpush.bf16.msra.mxu0 %v3405
    %5191 = vmatpush.bf16.msra.mxu0 %v3401
    %5192 = vmatpush.bf16.msra.mxu0 %v3397
    %5193 = vmatpush.bf16.msra.mxu0 %v3393
    %5194 = vmatmul.bf16.gmra.mxu0 %v872
    %v5195 = vpop.f32.mrf.mxu0
    %v5196 = vadd.f32 %v5182, %v5195
    %v5197 = vpop.f32.mrf.mxu0
    %v5198 = vadd.f32 %v5184, %v5197
    %5199 = vdwg.mxu0
    %5200 = vmatpush.bf16.msra.mxu0 %v3453
    %5201 = vmatpush.bf16.msra.mxu0 %v3449
    %5202 = vmatpush.bf16.msra.mxu0 %v3445
    %5203 = vmatpush.bf16.msra.mxu0 %v3441
    %5204 = vmatpush.bf16.msra.mxu0 %v3437
    %5205 = vmatpush.bf16.msra.mxu0 %v3433
    %5206 = vmatpush.bf16.msra.mxu0 %v3429
    %5207 = vmatpush.bf16.msra.mxu0 %v3425
    %5208 = vmatmul.bf16.gmra.mxu0 %v873
    %v5209 = vpop.f32.mrf.mxu0
    %v5210 = vadd.f32 %v5196, %v5209
    %v5211 = vpop.f32.mrf.mxu0
    %v5212 = vadd.f32 %v5198, %v5211
    %5213 = vdwg.mxu0
    %v5214 = vld [vmem:[#allocation5] sm:$0xff]
    %v5215 = vld [vmem:[#allocation5 + $0x8] sm:$0xff]
    %v5216 = vld [vmem:[#allocation5 + $0x10] sm:$0xff]
    %v5217 = vld [vmem:[#allocation5 + $0x18] sm:$0xff]
    %v5218 = vld [vmem:[#allocation5 + $0x20] sm:$0xff]
    %v5219 = vld [vmem:[#allocation5 + $0x28] sm:$0xff]
    %v5220 = vld [vmem:[#allocation8] sm:$0xff]
    %v5221 = vld [vmem:[#allocation8 + $0x8] sm:$0xff]
    %v5222 = vld [vmem:[#allocation8 + $0x10] sm:$0xff]
    %v5223 = vld [vmem:[#allocation8 + $0x18] sm:$0xff]
    %v5224 = vld [vmem:[#allocation8 + $0x20] sm:$0xff]
    %v5225 = vld [vmem:[#allocation8 + $0x28] sm:$0xff]
    %v5226 = vld [vmem:[#allocation8 + $0x30] sm:$0xff]
    %v5227 = vld [vmem:[#allocation8 + $0x38] sm:$0xff]
    %v5228 = vld [vmem:[#allocation8 + $0x40] sm:$0xff]
    %v5229 = vld [vmem:[#allocation8 + $0x48] sm:$0xff]
    %v5230 = vld [vmem:[#allocation8 + $0x50] sm:$0xff]
    %v5231 = vld [vmem:[#allocation8 + $0x58] sm:$0xff]
    %v5232 = vld [vmem:[#allocation8 + $0x60] sm:$0xff]
    %v5233 = vld [vmem:[#allocation8 + $0x68] sm:$0xff]
    %v5234 = vld [vmem:[#allocation8 + $0x70] sm:$0xff]
    %v5235 = vld [vmem:[#allocation8 + $0x78] sm:$0xff]
    %v5236 = vld [vmem:[#allocation8 + $0x80] sm:$0xff]
    %v5237 = vld [vmem:[#allocation8 + $0x88] sm:$0xff]
    %v5238 = vld [vmem:[#allocation8 + $0x90] sm:$0xff]
    %v5239 = vld [vmem:[#allocation8 + $0x98] sm:$0xff]
    %v5240 = vld [vmem:[#allocation8 + $0xa0] sm:$0xff]
    %v5241 = vld [vmem:[#allocation8 + $0xa8] sm:$0xff]
    %v5242 = vld [vmem:[#allocation8 + $0xb0] sm:$0xff]
    %v5243 = vld [vmem:[#allocation8 + $0xb8] sm:$0xff]
    %v5244 = vld [vmem:[#allocation8 + $0xc0] sm:$0xff]
    %v5245 = vld [vmem:[#allocation8 + $0xc8] sm:$0xff]
    %v5246 = vld [vmem:[#allocation8 + $0xd0] sm:$0xff]
    %v5247 = vld [vmem:[#allocation8 + $0xd8] sm:$0xff]
    %v5248 = vld [vmem:[#allocation8 + $0xe0] sm:$0xff]
    %v5249 = vld [vmem:[#allocation8 + $0xe8] sm:$0xff]
    %v5250 = vld [vmem:[#allocation8 + $0xf0] sm:$0xff]
    %v5251 = vld [vmem:[#allocation8 + $0xf8] sm:$0xff]
    %v5252 = vld [vmem:[#allocation8 + $0x100] sm:$0xff]
    %v5253 = vld [vmem:[#allocation8 + $0x108] sm:$0xff]
    %v5254 = vld [vmem:[#allocation8 + $0x110] sm:$0xff]
    %v5255 = vld [vmem:[#allocation8 + $0x118] sm:$0xff]
    %v5256 = vld [vmem:[#allocation8 + $0x120] sm:$0xff]
    %v5257 = vld [vmem:[#allocation8 + $0x128] sm:$0xff]
    %v5258 = vld [vmem:[#allocation8 + $0x130] sm:$0xff]
    %v5259 = vld [vmem:[#allocation8 + $0x138] sm:$0xff]
    %v5260 = vld [vmem:[#allocation8 + $0x140] sm:$0xff]
    %v5261 = vld [vmem:[#allocation8 + $0x148] sm:$0xff]
    %v5262 = vld [vmem:[#allocation8 + $0x150] sm:$0xff]
    %v5263 = vld [vmem:[#allocation8 + $0x158] sm:$0xff]
    %v5264 = vld [vmem:[#allocation8 + $0x160] sm:$0xff]
    %v5265 = vld [vmem:[#allocation8 + $0x168] sm:$0xff]
    %v5266 = vld [vmem:[#allocation8 + $0x170] sm:$0xff]
    %v5267 = vld [vmem:[#allocation8 + $0x178] sm:$0xff]
    %v5268 = vld [vmem:[#allocation8 + $0x180] sm:$0xff]
    %v5269 = vld [vmem:[#allocation8 + $0x188] sm:$0xff]
    %v5270 = vld [vmem:[#allocation8 + $0x190] sm:$0xff]
    %v5271 = vld [vmem:[#allocation8 + $0x198] sm:$0xff]
    %v5272 = vld [vmem:[#allocation8 + $0x1a0] sm:$0xff]
    %v5273 = vld [vmem:[#allocation8 + $0x1a8] sm:$0xff]
    %v5274 = vld [vmem:[#allocation8 + $0x1b0] sm:$0xff]
    %v5275 = vld [vmem:[#allocation8 + $0x1b8] sm:$0xff]
    %v5276 = vld [vmem:[#allocation8 + $0x1c0] sm:$0xff]
    %v5277 = vld [vmem:[#allocation8 + $0x1c8] sm:$0xff]
    %v5278 = vld [vmem:[#allocation8 + $0x1d0] sm:$0xff]
    %v5279 = vld [vmem:[#allocation8 + $0x1d8] sm:$0xff]
    %v5280 = vld [vmem:[#allocation8 + $0x1e0] sm:$0xff]
    %v5281 = vld [vmem:[#allocation8 + $0x1e8] sm:$0xff]
    %v5282 = vld [vmem:[#allocation8 + $0x1f0] sm:$0xff]
    %v5283 = vld [vmem:[#allocation8 + $0x1f8] sm:$0xff]
    %v5284 = vld [vmem:[#allocation8 + $0x200] sm:$0xff]
    %v5285 = vld [vmem:[#allocation8 + $0x208] sm:$0xff]
    %v5286 = vld [vmem:[#allocation8 + $0x210] sm:$0xff]
    %v5287 = vld [vmem:[#allocation8 + $0x218] sm:$0xff]
    %v5288 = vld [vmem:[#allocation8 + $0x220] sm:$0xff]
    %v5289 = vld [vmem:[#allocation8 + $0x228] sm:$0xff]
    %v5290 = vld [vmem:[#allocation8 + $0x230] sm:$0xff]
    %v5291 = vld [vmem:[#allocation8 + $0x238] sm:$0xff]
    %v5292 = vld [vmem:[#allocation8 + $0x240] sm:$0xff]
    %v5293 = vld [vmem:[#allocation8 + $0x248] sm:$0xff]
    %v5294 = vld [vmem:[#allocation8 + $0x250] sm:$0xff]
    %v5295 = vld [vmem:[#allocation8 + $0x258] sm:$0xff]
    %v5296 = vld [vmem:[#allocation8 + $0x260] sm:$0xff]
    %v5297 = vld [vmem:[#allocation8 + $0x268] sm:$0xff]
    %v5298 = vld [vmem:[#allocation8 + $0x270] sm:$0xff]
    %v5299 = vld [vmem:[#allocation8 + $0x278] sm:$0xff]
    %v5300 = vld [vmem:[#allocation8 + $0x280] sm:$0xff]
    %v5301 = vld [vmem:[#allocation8 + $0x288] sm:$0xff]
    %v5302 = vld [vmem:[#allocation8 + $0x290] sm:$0xff]
    %v5303 = vld [vmem:[#allocation8 + $0x298] sm:$0xff]
    %v5304 = vld [vmem:[#allocation8 + $0x2a0] sm:$0xff]
    %v5305 = vld [vmem:[#allocation8 + $0x2a8] sm:$0xff]
    %v5306 = vld [vmem:[#allocation8 + $0x2b0] sm:$0xff]
    %v5307 = vld [vmem:[#allocation8 + $0x2b8] sm:$0xff]
    %v5308 = vld [vmem:[#allocation8 + $0x2c0] sm:$0xff]
    %v5309 = vld [vmem:[#allocation8 + $0x2c8] sm:$0xff]
    %v5310 = vld [vmem:[#allocation8 + $0x2d0] sm:$0xff]
    %v5311 = vld [vmem:[#allocation8 + $0x2d8] sm:$0xff]
    %v5312 = vld [vmem:[#allocation8 + $0x2e0] sm:$0xff]
    %v5313 = vld [vmem:[#allocation8 + $0x2e8] sm:$0xff]
    %v5314 = vld [vmem:[#allocation8 + $0x2f0] sm:$0xff]
    %v5315 = vld [vmem:[#allocation8 + $0x2f8] sm:$0xff]
    %v5316 = vld [vmem:[#allocation8 + $0x300] sm:$0xff]
    %v5317 = vld [vmem:[#allocation8 + $0x308] sm:$0xff]
    %v5318 = vld [vmem:[#allocation8 + $0x310] sm:$0xff]
    %v5319 = vld [vmem:[#allocation8 + $0x318] sm:$0xff]
    %v5320 = vld [vmem:[#allocation8 + $0x320] sm:$0xff]
    %v5321 = vld [vmem:[#allocation8 + $0x328] sm:$0xff]
    %v5322 = vld [vmem:[#allocation8 + $0x330] sm:$0xff]
    %v5323 = vld [vmem:[#allocation8 + $0x338] sm:$0xff]
    %v5324 = vld [vmem:[#allocation8 + $0x340] sm:$0xff]
    %v5325 = vld [vmem:[#allocation8 + $0x348] sm:$0xff]
    %v5326 = vld [vmem:[#allocation8 + $0x350] sm:$0xff]
    %v5327 = vld [vmem:[#allocation8 + $0x358] sm:$0xff]
    %v5328 = vld [vmem:[#allocation8 + $0x360] sm:$0xff]
    %v5329 = vld [vmem:[#allocation8 + $0x368] sm:$0xff]
    %v5330 = vld [vmem:[#allocation8 + $0x370] sm:$0xff]
    %v5331 = vld [vmem:[#allocation8 + $0x378] sm:$0xff]
    %v5332 = vld [vmem:[#allocation8 + $0x380] sm:$0xff]
    %v5333 = vld [vmem:[#allocation8 + $0x388] sm:$0xff]
    %v5334 = vld [vmem:[#allocation8 + $0x390] sm:$0xff]
    %v5335 = vld [vmem:[#allocation8 + $0x398] sm:$0xff]
    %v5336 = vld [vmem:[#allocation8 + $0x3a0] sm:$0xff]
    %v5337 = vld [vmem:[#allocation8 + $0x3a8] sm:$0xff]
    %v5338 = vld [vmem:[#allocation8 + $0x3b0] sm:$0xff]
    %v5339 = vld [vmem:[#allocation8 + $0x3b8] sm:$0xff]
    %v5340 = vld [vmem:[#allocation8 + $0x3c0] sm:$0xff]
    %v5341 = vld [vmem:[#allocation8 + $0x3c8] sm:$0xff]
    %v5342 = vld [vmem:[#allocation8 + $0x3d0] sm:$0xff]
    %v5343 = vld [vmem:[#allocation8 + $0x3d8] sm:$0xff]
    %v5344 = vld [vmem:[#allocation8 + $0x3e0] sm:$0xff]
    %v5345 = vld [vmem:[#allocation8 + $0x3e8] sm:$0xff]
    %v5346 = vld [vmem:[#allocation8 + $0x3f0] sm:$0xff]
    %v5347 = vld [vmem:[#allocation8 + $0x3f8] sm:$0xff]
    %v5348 = vld [vmem:[#allocation8 + $0x400] sm:$0xff]
    %v5349 = vld [vmem:[#allocation8 + $0x408] sm:$0xff]
    %v5350 = vld [vmem:[#allocation8 + $0x410] sm:$0xff]
    %v5351 = vld [vmem:[#allocation8 + $0x418] sm:$0xff]
    %v5352 = vld [vmem:[#allocation8 + $0x420] sm:$0xff]
    %v5353 = vld [vmem:[#allocation8 + $0x428] sm:$0xff]
    %v5354 = vld [vmem:[#allocation8 + $0x430] sm:$0xff]
    %v5355 = vld [vmem:[#allocation8 + $0x438] sm:$0xff]
    %v5356 = vld [vmem:[#allocation8 + $0x440] sm:$0xff]
    %v5357 = vld [vmem:[#allocation8 + $0x448] sm:$0xff]
    %v5358 = vld [vmem:[#allocation8 + $0x450] sm:$0xff]
    %v5359 = vld [vmem:[#allocation8 + $0x458] sm:$0xff]
    %v5360 = vld [vmem:[#allocation8 + $0x460] sm:$0xff]
    %v5361 = vld [vmem:[#allocation8 + $0x468] sm:$0xff]
    %v5362 = vld [vmem:[#allocation8 + $0x470] sm:$0xff]
    %v5363 = vld [vmem:[#allocation8 + $0x478] sm:$0xff]
    %v5364 = vld [vmem:[#allocation8 + $0x480] sm:$0xff]
    %v5365 = vld [vmem:[#allocation8 + $0x488] sm:$0xff]
    %v5366 = vld [vmem:[#allocation8 + $0x490] sm:$0xff]
    %v5367 = vld [vmem:[#allocation8 + $0x498] sm:$0xff]
    %v5368 = vld [vmem:[#allocation8 + $0x4a0] sm:$0xff]
    %v5369 = vld [vmem:[#allocation8 + $0x4a8] sm:$0xff]
    %v5370 = vld [vmem:[#allocation8 + $0x4b0] sm:$0xff]
    %v5371 = vld [vmem:[#allocation8 + $0x4b8] sm:$0xff]
    %v5372 = vld [vmem:[#allocation8 + $0x4c0] sm:$0xff]
    %v5373 = vld [vmem:[#allocation8 + $0x4c8] sm:$0xff]
    %v5374 = vld [vmem:[#allocation8 + $0x4d0] sm:$0xff]
    %v5375 = vld [vmem:[#allocation8 + $0x4d8] sm:$0xff]
    %v5376 = vld [vmem:[#allocation8 + $0x4e0] sm:$0xff]
    %v5377 = vld [vmem:[#allocation8 + $0x4e8] sm:$0xff]
    %v5378 = vld [vmem:[#allocation8 + $0x4f0] sm:$0xff]
    %v5379 = vld [vmem:[#allocation8 + $0x4f8] sm:$0xff]
    %v5380 = vld [vmem:[#allocation8 + $0x500] sm:$0xff]
    %v5381 = vld [vmem:[#allocation8 + $0x508] sm:$0xff]
    %v5382 = vld [vmem:[#allocation8 + $0x510] sm:$0xff]
    %v5383 = vld [vmem:[#allocation8 + $0x518] sm:$0xff]
    %v5384 = vld [vmem:[#allocation8 + $0x520] sm:$0xff]
    %v5385 = vld [vmem:[#allocation8 + $0x528] sm:$0xff]
    %v5386 = vld [vmem:[#allocation8 + $0x530] sm:$0xff]
    %v5387 = vld [vmem:[#allocation8 + $0x538] sm:$0xff]
    %v5388 = vld [vmem:[#allocation8 + $0x540] sm:$0xff]
    %v5389 = vld [vmem:[#allocation8 + $0x548] sm:$0xff]
    %v5390 = vld [vmem:[#allocation8 + $0x550] sm:$0xff]
    %v5391 = vld [vmem:[#allocation8 + $0x558] sm:$0xff]
    %v5392 = vld [vmem:[#allocation8 + $0x560] sm:$0xff]
    %v5393 = vld [vmem:[#allocation8 + $0x568] sm:$0xff]
    %v5394 = vld [vmem:[#allocation8 + $0x570] sm:$0xff]
    %v5395 = vld [vmem:[#allocation8 + $0x578] sm:$0xff]
    %v5396 = vld [vmem:[#allocation8 + $0x580] sm:$0xff]
    %v5397 = vld [vmem:[#allocation8 + $0x588] sm:$0xff]
    %v5398 = vld [vmem:[#allocation8 + $0x590] sm:$0xff]
    %v5399 = vld [vmem:[#allocation8 + $0x598] sm:$0xff]
    %v5400 = vld [vmem:[#allocation8 + $0x5a0] sm:$0xff]
    %v5401 = vld [vmem:[#allocation8 + $0x5a8] sm:$0xff]
    %v5402 = vld [vmem:[#allocation8 + $0x5b0] sm:$0xff]
    %v5403 = vld [vmem:[#allocation8 + $0x5b8] sm:$0xff]
    %v5404 = vld [vmem:[#allocation8 + $0x5c0] sm:$0xff]
    %v5405 = vld [vmem:[#allocation8 + $0x5c8] sm:$0xff]
    %v5406 = vld [vmem:[#allocation8 + $0x5d0] sm:$0xff]
    %v5407 = vld [vmem:[#allocation8 + $0x5d8] sm:$0xff]
    %v5408 = vld [vmem:[#allocation8 + $0x5e0] sm:$0xff]
    %v5409 = vld [vmem:[#allocation8 + $0x5e8] sm:$0xff]
    %v5410 = vld [vmem:[#allocation8 + $0x5f0] sm:$0xff]
    %v5411 = vld [vmem:[#allocation8 + $0x5f8] sm:$0xff]
    %v5418 = vunpack.c.l.b16 %v5214
    %v5419 = vunpack.c.h.b16 %v5214
    %v5420 = vunpack.c.l.b16 %v5215
    %v5421 = vunpack.c.h.b16 %v5215
    %v5422 = vunpack.c.l.b16 %v5216
    %v5423 = vunpack.c.h.b16 %v5216
    %v5424 = vunpack.c.l.b16 %v5217
    %v5425 = vunpack.c.h.b16 %v5217
    %v5426 = vunpack.c.l.b16 %v5218
    %v5427 = vunpack.c.h.b16 %v5218
    %v5428 = vunpack.c.l.b16 %v5219
    %v5429 = vunpack.c.h.b16 %v5219
    %v5430 = vpack.c.b16 %v5424, %v5418
    %v5431 = vpack.c.b16 %v5425, %v5419
    %v5432 = vpack.c.b16 %v5426, %v5420
    %v5433 = vpack.c.b16 %v5427, %v5421
    %v5434 = vpack.c.b16 %v5428, %v5422
    %v5435 = vpack.c.b16 %v5429, %v5423
    %v5634 = vunpack.c.l.b16 %v5220
    %v5635 = vunpack.c.h.b16 %v5220
    %v5636 = vunpack.c.l.b16 %v5221
    %v5637 = vunpack.c.h.b16 %v5221
    %v5638 = vunpack.c.l.b16 %v5222
    %v5639 = vunpack.c.h.b16 %v5222
    %v5640 = vunpack.c.l.b16 %v5223
    %v5641 = vunpack.c.h.b16 %v5223
    %v5642 = vunpack.c.l.b16 %v5224
    %v5643 = vunpack.c.h.b16 %v5224
    %v5644 = vunpack.c.l.b16 %v5225
    %v5645 = vunpack.c.h.b16 %v5225
    %v5646 = vunpack.c.l.b16 %v5226
    %v5647 = vunpack.c.h.b16 %v5226
    %v5648 = vunpack.c.l.b16 %v5227
    %v5649 = vunpack.c.h.b16 %v5227
    %v5650 = vunpack.c.l.b16 %v5228
    %v5651 = vunpack.c.h.b16 %v5228
    %v5652 = vunpack.c.l.b16 %v5229
    %v5653 = vunpack.c.h.b16 %v5229
    %v5654 = vunpack.c.l.b16 %v5230
    %v5655 = vunpack.c.h.b16 %v5230
    %v5656 = vunpack.c.l.b16 %v5231
    %v5657 = vunpack.c.h.b16 %v5231
    %v5658 = vunpack.c.l.b16 %v5232
    %v5659 = vunpack.c.h.b16 %v5232
    %v5660 = vunpack.c.l.b16 %v5233
    %v5661 = vunpack.c.h.b16 %v5233
    %v5662 = vunpack.c.l.b16 %v5234
    %v5663 = vunpack.c.h.b16 %v5234
    %v5664 = vunpack.c.l.b16 %v5235
    %v5665 = vunpack.c.h.b16 %v5235
    %v5666 = vunpack.c.l.b16 %v5236
    %v5667 = vunpack.c.h.b16 %v5236
    %v5668 = vunpack.c.l.b16 %v5237
    %v5669 = vunpack.c.h.b16 %v5237
    %v5670 = vunpack.c.l.b16 %v5238
    %v5671 = vunpack.c.h.b16 %v5238
    %v5672 = vunpack.c.l.b16 %v5239
    %v5673 = vunpack.c.h.b16 %v5239
    %v5674 = vunpack.c.l.b16 %v5240
    %v5675 = vunpack.c.h.b16 %v5240
    %v5676 = vunpack.c.l.b16 %v5241
    %v5677 = vunpack.c.h.b16 %v5241
    %v5678 = vunpack.c.l.b16 %v5242
    %v5679 = vunpack.c.h.b16 %v5242
    %v5680 = vunpack.c.l.b16 %v5243
    %v5681 = vunpack.c.h.b16 %v5243
    %v5682 = vunpack.c.l.b16 %v5244
    %v5683 = vunpack.c.h.b16 %v5244
    %v5684 = vunpack.c.l.b16 %v5245
    %v5685 = vunpack.c.h.b16 %v5245
    %v5686 = vunpack.c.l.b16 %v5246
    %v5687 = vunpack.c.h.b16 %v5246
    %v5688 = vunpack.c.l.b16 %v5247
    %v5689 = vunpack.c.h.b16 %v5247
    %v5690 = vunpack.c.l.b16 %v5248
    %v5691 = vunpack.c.h.b16 %v5248
    %v5692 = vunpack.c.l.b16 %v5249
    %v5693 = vunpack.c.h.b16 %v5249
    %v5694 = vunpack.c.l.b16 %v5250
    %v5695 = vunpack.c.h.b16 %v5250
    %v5696 = vunpack.c.l.b16 %v5251
    %v5697 = vunpack.c.h.b16 %v5251
    %v5698 = vunpack.c.l.b16 %v5252
    %v5699 = vunpack.c.h.b16 %v5252
    %v5700 = vunpack.c.l.b16 %v5253
    %v5701 = vunpack.c.h.b16 %v5253
    %v5702 = vunpack.c.l.b16 %v5254
    %v5703 = vunpack.c.h.b16 %v5254
    %v5704 = vunpack.c.l.b16 %v5255
    %v5705 = vunpack.c.h.b16 %v5255
    %v5706 = vunpack.c.l.b16 %v5256
    %v5707 = vunpack.c.h.b16 %v5256
    %v5708 = vunpack.c.l.b16 %v5257
    %v5709 = vunpack.c.h.b16 %v5257
    %v5710 = vunpack.c.l.b16 %v5258
    %v5711 = vunpack.c.h.b16 %v5258
    %v5712 = vunpack.c.l.b16 %v5259
    %v5713 = vunpack.c.h.b16 %v5259
    %v5714 = vunpack.c.l.b16 %v5260
    %v5715 = vunpack.c.h.b16 %v5260
    %v5716 = vunpack.c.l.b16 %v5261
    %v5717 = vunpack.c.h.b16 %v5261
    %v5718 = vunpack.c.l.b16 %v5262
    %v5719 = vunpack.c.h.b16 %v5262
    %v5720 = vunpack.c.l.b16 %v5263
    %v5721 = vunpack.c.h.b16 %v5263
    %v5722 = vunpack.c.l.b16 %v5264
    %v5723 = vunpack.c.h.b16 %v5264
    %v5724 = vunpack.c.l.b16 %v5265
    %v5725 = vunpack.c.h.b16 %v5265
    %v5726 = vunpack.c.l.b16 %v5266
    %v5727 = vunpack.c.h.b16 %v5266
    %v5728 = vunpack.c.l.b16 %v5267
    %v5729 = vunpack.c.h.b16 %v5267
    %v5730 = vunpack.c.l.b16 %v5268
    %v5731 = vunpack.c.h.b16 %v5268
    %v5732 = vunpack.c.l.b16 %v5269
    %v5733 = vunpack.c.h.b16 %v5269
    %v5734 = vunpack.c.l.b16 %v5270
    %v5735 = vunpack.c.h.b16 %v5270
    %v5736 = vunpack.c.l.b16 %v5271
    %v5737 = vunpack.c.h.b16 %v5271
    %v5738 = vunpack.c.l.b16 %v5272
    %v5739 = vunpack.c.h.b16 %v5272
    %v5740 = vunpack.c.l.b16 %v5273
    %v5741 = vunpack.c.h.b16 %v5273
    %v5742 = vunpack.c.l.b16 %v5274
    %v5743 = vunpack.c.h.b16 %v5274
    %v5744 = vunpack.c.l.b16 %v5275
    %v5745 = vunpack.c.h.b16 %v5275
    %v5746 = vunpack.c.l.b16 %v5276
    %v5747 = vunpack.c.h.b16 %v5276
    %v5748 = vunpack.c.l.b16 %v5277
    %v5749 = vunpack.c.h.b16 %v5277
    %v5750 = vunpack.c.l.b16 %v5278
    %v5751 = vunpack.c.h.b16 %v5278
    %v5752 = vunpack.c.l.b16 %v5279
    %v5753 = vunpack.c.h.b16 %v5279
    %v5754 = vunpack.c.l.b16 %v5280
    %v5755 = vunpack.c.h.b16 %v5280
    %v5756 = vunpack.c.l.b16 %v5281
    %v5757 = vunpack.c.h.b16 %v5281
    %v5758 = vunpack.c.l.b16 %v5282
    %v5759 = vunpack.c.h.b16 %v5282
    %v5760 = vunpack.c.l.b16 %v5283
    %v5761 = vunpack.c.h.b16 %v5283
    %v5762 = vunpack.c.l.b16 %v5284
    %v5763 = vunpack.c.h.b16 %v5284
    %v5764 = vunpack.c.l.b16 %v5285
    %v5765 = vunpack.c.h.b16 %v5285
    %v5766 = vunpack.c.l.b16 %v5286
    %v5767 = vunpack.c.h.b16 %v5286
    %v5768 = vunpack.c.l.b16 %v5287
    %v5769 = vunpack.c.h.b16 %v5287
    %v5770 = vunpack.c.l.b16 %v5288
    %v5771 = vunpack.c.h.b16 %v5288
    %v5772 = vunpack.c.l.b16 %v5289
    %v5773 = vunpack.c.h.b16 %v5289
    %v5774 = vunpack.c.l.b16 %v5290
    %v5775 = vunpack.c.h.b16 %v5290
    %v5776 = vunpack.c.l.b16 %v5291
    %v5777 = vunpack.c.h.b16 %v5291
    %v5778 = vunpack.c.l.b16 %v5292
    %v5779 = vunpack.c.h.b16 %v5292
    %v5780 = vunpack.c.l.b16 %v5293
    %v5781 = vunpack.c.h.b16 %v5293
    %v5782 = vunpack.c.l.b16 %v5294
    %v5783 = vunpack.c.h.b16 %v5294
    %v5784 = vunpack.c.l.b16 %v5295
    %v5785 = vunpack.c.h.b16 %v5295
    %v5786 = vunpack.c.l.b16 %v5296
    %v5787 = vunpack.c.h.b16 %v5296
    %v5788 = vunpack.c.l.b16 %v5297
    %v5789 = vunpack.c.h.b16 %v5297
    %v5790 = vunpack.c.l.b16 %v5298
    %v5791 = vunpack.c.h.b16 %v5298
    %v5792 = vunpack.c.l.b16 %v5299
    %v5793 = vunpack.c.h.b16 %v5299
    %v5794 = vunpack.c.l.b16 %v5300
    %v5795 = vunpack.c.h.b16 %v5300
    %v5796 = vunpack.c.l.b16 %v5301
    %v5797 = vunpack.c.h.b16 %v5301
    %v5798 = vunpack.c.l.b16 %v5302
    %v5799 = vunpack.c.h.b16 %v5302
    %v5800 = vunpack.c.l.b16 %v5303
    %v5801 = vunpack.c.h.b16 %v5303
    %v5802 = vunpack.c.l.b16 %v5304
    %v5803 = vunpack.c.h.b16 %v5304
    %v5804 = vunpack.c.l.b16 %v5305
    %v5805 = vunpack.c.h.b16 %v5305
    %v5806 = vunpack.c.l.b16 %v5306
    %v5807 = vunpack.c.h.b16 %v5306
    %v5808 = vunpack.c.l.b16 %v5307
    %v5809 = vunpack.c.h.b16 %v5307
    %v5810 = vunpack.c.l.b16 %v5308
    %v5811 = vunpack.c.h.b16 %v5308
    %v5812 = vunpack.c.l.b16 %v5309
    %v5813 = vunpack.c.h.b16 %v5309
    %v5814 = vunpack.c.l.b16 %v5310
    %v5815 = vunpack.c.h.b16 %v5310
    %v5816 = vunpack.c.l.b16 %v5311
    %v5817 = vunpack.c.h.b16 %v5311
    %v5818 = vunpack.c.l.b16 %v5312
    %v5819 = vunpack.c.h.b16 %v5312
    %v5820 = vunpack.c.l.b16 %v5313
    %v5821 = vunpack.c.h.b16 %v5313
    %v5822 = vunpack.c.l.b16 %v5314
    %v5823 = vunpack.c.h.b16 %v5314
    %v5824 = vunpack.c.l.b16 %v5315
    %v5825 = vunpack.c.h.b16 %v5315
    %v5826 = vunpack.c.l.b16 %v5316
    %v5827 = vunpack.c.h.b16 %v5316
    %v5828 = vunpack.c.l.b16 %v5317
    %v5829 = vunpack.c.h.b16 %v5317
    %v5830 = vunpack.c.l.b16 %v5318
    %v5831 = vunpack.c.h.b16 %v5318
    %v5832 = vunpack.c.l.b16 %v5319
    %v5833 = vunpack.c.h.b16 %v5319
    %v5834 = vunpack.c.l.b16 %v5320
    %v5835 = vunpack.c.h.b16 %v5320
    %v5836 = vunpack.c.l.b16 %v5321
    %v5837 = vunpack.c.h.b16 %v5321
    %v5838 = vunpack.c.l.b16 %v5322
    %v5839 = vunpack.c.h.b16 %v5322
    %v5840 = vunpack.c.l.b16 %v5323
    %v5841 = vunpack.c.h.b16 %v5323
    %v5842 = vunpack.c.l.b16 %v5324
    %v5843 = vunpack.c.h.b16 %v5324
    %v5844 = vunpack.c.l.b16 %v5325
    %v5845 = vunpack.c.h.b16 %v5325
    %v5846 = vunpack.c.l.b16 %v5326
    %v5847 = vunpack.c.h.b16 %v5326
    %v5848 = vunpack.c.l.b16 %v5327
    %v5849 = vunpack.c.h.b16 %v5327
    %v5850 = vunpack.c.l.b16 %v5328
    %v5851 = vunpack.c.h.b16 %v5328
    %v5852 = vunpack.c.l.b16 %v5329
    %v5853 = vunpack.c.h.b16 %v5329
    %v5854 = vunpack.c.l.b16 %v5330
    %v5855 = vunpack.c.h.b16 %v5330
    %v5856 = vunpack.c.l.b16 %v5331
    %v5857 = vunpack.c.h.b16 %v5331
    %v5858 = vunpack.c.l.b16 %v5332
    %v5859 = vunpack.c.h.b16 %v5332
    %v5860 = vunpack.c.l.b16 %v5333
    %v5861 = vunpack.c.h.b16 %v5333
    %v5862 = vunpack.c.l.b16 %v5334
    %v5863 = vunpack.c.h.b16 %v5334
    %v5864 = vunpack.c.l.b16 %v5335
    %v5865 = vunpack.c.h.b16 %v5335
    %v5866 = vunpack.c.l.b16 %v5336
    %v5867 = vunpack.c.h.b16 %v5336
    %v5868 = vunpack.c.l.b16 %v5337
    %v5869 = vunpack.c.h.b16 %v5337
    %v5870 = vunpack.c.l.b16 %v5338
    %v5871 = vunpack.c.h.b16 %v5338
    %v5872 = vunpack.c.l.b16 %v5339
    %v5873 = vunpack.c.h.b16 %v5339
    %v5874 = vunpack.c.l.b16 %v5340
    %v5875 = vunpack.c.h.b16 %v5340
    %v5876 = vunpack.c.l.b16 %v5341
    %v5877 = vunpack.c.h.b16 %v5341
    %v5878 = vunpack.c.l.b16 %v5342
    %v5879 = vunpack.c.h.b16 %v5342
    %v5880 = vunpack.c.l.b16 %v5343
    %v5881 = vunpack.c.h.b16 %v5343
    %v5882 = vunpack.c.l.b16 %v5344
    %v5883 = vunpack.c.h.b16 %v5344
    %v5884 = vunpack.c.l.b16 %v5345
    %v5885 = vunpack.c.h.b16 %v5345
    %v5886 = vunpack.c.l.b16 %v5346
    %v5887 = vunpack.c.h.b16 %v5346
    %v5888 = vunpack.c.l.b16 %v5347
    %v5889 = vunpack.c.h.b16 %v5347
    %v5890 = vunpack.c.l.b16 %v5348
    %v5891 = vunpack.c.h.b16 %v5348
    %v5892 = vunpack.c.l.b16 %v5349
    %v5893 = vunpack.c.h.b16 %v5349
    %v5894 = vunpack.c.l.b16 %v5350
    %v5895 = vunpack.c.h.b16 %v5350
    %v5896 = vunpack.c.l.b16 %v5351
    %v5897 = vunpack.c.h.b16 %v5351
    %v5898 = vunpack.c.l.b16 %v5352
    %v5899 = vunpack.c.h.b16 %v5352
    %v5900 = vunpack.c.l.b16 %v5353
    %v5901 = vunpack.c.h.b16 %v5353
    %v5902 = vunpack.c.l.b16 %v5354
    %v5903 = vunpack.c.h.b16 %v5354
    %v5904 = vunpack.c.l.b16 %v5355
    %v5905 = vunpack.c.h.b16 %v5355
    %v5906 = vunpack.c.l.b16 %v5356
    %v5907 = vunpack.c.h.b16 %v5356
    %v5908 = vunpack.c.l.b16 %v5357
    %v5909 = vunpack.c.h.b16 %v5357
    %v5910 = vunpack.c.l.b16 %v5358
    %v5911 = vunpack.c.h.b16 %v5358
    %v5912 = vunpack.c.l.b16 %v5359
    %v5913 = vunpack.c.h.b16 %v5359
    %v5914 = vunpack.c.l.b16 %v5360
    %v5915 = vunpack.c.h.b16 %v5360
    %v5916 = vunpack.c.l.b16 %v5361
    %v5917 = vunpack.c.h.b16 %v5361
    %v5918 = vunpack.c.l.b16 %v5362
    %v5919 = vunpack.c.h.b16 %v5362
    %v5920 = vunpack.c.l.b16 %v5363
    %v5921 = vunpack.c.h.b16 %v5363
    %v5922 = vunpack.c.l.b16 %v5364
    %v5923 = vunpack.c.h.b16 %v5364
    %v5924 = vunpack.c.l.b16 %v5365
    %v5925 = vunpack.c.h.b16 %v5365
    %v5926 = vunpack.c.l.b16 %v5366
    %v5927 = vunpack.c.h.b16 %v5366
    %v5928 = vunpack.c.l.b16 %v5367
    %v5929 = vunpack.c.h.b16 %v5367
    %v5930 = vunpack.c.l.b16 %v5368
    %v5931 = vunpack.c.h.b16 %v5368
    %v5932 = vunpack.c.l.b16 %v5369
    %v5933 = vunpack.c.h.b16 %v5369
    %v5934 = vunpack.c.l.b16 %v5370
    %v5935 = vunpack.c.h.b16 %v5370
    %v5936 = vunpack.c.l.b16 %v5371
    %v5937 = vunpack.c.h.b16 %v5371
    %v5938 = vunpack.c.l.b16 %v5372
    %v5939 = vunpack.c.h.b16 %v5372
    %v5940 = vunpack.c.l.b16 %v5373
    %v5941 = vunpack.c.h.b16 %v5373
    %v5942 = vunpack.c.l.b16 %v5374
    %v5943 = vunpack.c.h.b16 %v5374
    %v5944 = vunpack.c.l.b16 %v5375
    %v5945 = vunpack.c.h.b16 %v5375
    %v5946 = vunpack.c.l.b16 %v5376
    %v5947 = vunpack.c.h.b16 %v5376
    %v5948 = vunpack.c.l.b16 %v5377
    %v5949 = vunpack.c.h.b16 %v5377
    %v5950 = vunpack.c.l.b16 %v5378
    %v5951 = vunpack.c.h.b16 %v5378
    %v5952 = vunpack.c.l.b16 %v5379
    %v5953 = vunpack.c.h.b16 %v5379
    %v5954 = vunpack.c.l.b16 %v5380
    %v5955 = vunpack.c.h.b16 %v5380
    %v5956 = vunpack.c.l.b16 %v5381
    %v5957 = vunpack.c.h.b16 %v5381
    %v5958 = vunpack.c.l.b16 %v5382
    %v5959 = vunpack.c.h.b16 %v5382
    %v5960 = vunpack.c.l.b16 %v5383
    %v5961 = vunpack.c.h.b16 %v5383
    %v5962 = vunpack.c.l.b16 %v5384
    %v5963 = vunpack.c.h.b16 %v5384
    %v5964 = vunpack.c.l.b16 %v5385
    %v5965 = vunpack.c.h.b16 %v5385
    %v5966 = vunpack.c.l.b16 %v5386
    %v5967 = vunpack.c.h.b16 %v5386
    %v5968 = vunpack.c.l.b16 %v5387
    %v5969 = vunpack.c.h.b16 %v5387
    %v5970 = vunpack.c.l.b16 %v5388
    %v5971 = vunpack.c.h.b16 %v5388
    %v5972 = vunpack.c.l.b16 %v5389
    %v5973 = vunpack.c.h.b16 %v5389
    %v5974 = vunpack.c.l.b16 %v5390
    %v5975 = vunpack.c.h.b16 %v5390
    %v5976 = vunpack.c.l.b16 %v5391
    %v5977 = vunpack.c.h.b16 %v5391
    %v5978 = vunpack.c.l.b16 %v5392
    %v5979 = vunpack.c.h.b16 %v5392
    %v5980 = vunpack.c.l.b16 %v5393
    %v5981 = vunpack.c.h.b16 %v5393
    %v5982 = vunpack.c.l.b16 %v5394
    %v5983 = vunpack.c.h.b16 %v5394
    %v5984 = vunpack.c.l.b16 %v5395
    %v5985 = vunpack.c.h.b16 %v5395
    %v5986 = vunpack.c.l.b16 %v5396
    %v5987 = vunpack.c.h.b16 %v5396
    %v5988 = vunpack.c.l.b16 %v5397
    %v5989 = vunpack.c.h.b16 %v5397
    %v5990 = vunpack.c.l.b16 %v5398
    %v5991 = vunpack.c.h.b16 %v5398
    %v5992 = vunpack.c.l.b16 %v5399
    %v5993 = vunpack.c.h.b16 %v5399
    %v5994 = vunpack.c.l.b16 %v5400
    %v5995 = vunpack.c.h.b16 %v5400
    %v5996 = vunpack.c.l.b16 %v5401
    %v5997 = vunpack.c.h.b16 %v5401
    %v5998 = vunpack.c.l.b16 %v5402
    %v5999 = vunpack.c.h.b16 %v5402
    %v6000 = vunpack.c.l.b16 %v5403
    %v6001 = vunpack.c.h.b16 %v5403
    %v6002 = vunpack.c.l.b16 %v5404
    %v6003 = vunpack.c.h.b16 %v5404
    %v6004 = vunpack.c.l.b16 %v5405
    %v6005 = vunpack.c.h.b16 %v5405
    %v6006 = vunpack.c.l.b16 %v5406
    %v6007 = vunpack.c.h.b16 %v5406
    %v6008 = vunpack.c.l.b16 %v5407
    %v6009 = vunpack.c.h.b16 %v5407
    %v6010 = vunpack.c.l.b16 %v5408
    %v6011 = vunpack.c.h.b16 %v5408
    %v6012 = vunpack.c.l.b16 %v5409
    %v6013 = vunpack.c.h.b16 %v5409
    %v6014 = vunpack.c.l.b16 %v5410
    %v6015 = vunpack.c.h.b16 %v5410
    %v6016 = vunpack.c.l.b16 %v5411
    %v6017 = vunpack.c.h.b16 %v5411
    %v6018 = vpack.c.b16 %v5638, %v5634
    %v6019 = vpack.c.b16 %v5639, %v5635
    %v6020 = vpack.c.b16 %v5640, %v5636
    %v6021 = vpack.c.b16 %v5641, %v5637
    %v6022 = vpack.c.b16 %v5646, %v5642
    %v6023 = vpack.c.b16 %v5647, %v5643
    %v6024 = vpack.c.b16 %v5648, %v5644
    %v6025 = vpack.c.b16 %v5649, %v5645
    %v6026 = vpack.c.b16 %v5654, %v5650
    %v6027 = vpack.c.b16 %v5655, %v5651
    %v6028 = vpack.c.b16 %v5656, %v5652
    %v6029 = vpack.c.b16 %v5657, %v5653
    %v6030 = vpack.c.b16 %v5662, %v5658
    %v6031 = vpack.c.b16 %v5663, %v5659
    %v6032 = vpack.c.b16 %v5664, %v5660
    %v6033 = vpack.c.b16 %v5665, %v5661
    %v6034 = vpack.c.b16 %v5670, %v5666
    %v6035 = vpack.c.b16 %v5671, %v5667
    %v6036 = vpack.c.b16 %v5672, %v5668
    %v6037 = vpack.c.b16 %v5673, %v5669
    %v6038 = vpack.c.b16 %v5678, %v5674
    %v6039 = vpack.c.b16 %v5679, %v5675
    %v6040 = vpack.c.b16 %v5680, %v5676
    %v6041 = vpack.c.b16 %v5681, %v5677
    %v6042 = vpack.c.b16 %v5686, %v5682
    %v6043 = vpack.c.b16 %v5687, %v5683
    %v6044 = vpack.c.b16 %v5688, %v5684
    %v6045 = vpack.c.b16 %v5689, %v5685
    %v6046 = vpack.c.b16 %v5694, %v5690
    %v6047 = vpack.c.b16 %v5695, %v5691
    %v6048 = vpack.c.b16 %v5696, %v5692
    %v6049 = vpack.c.b16 %v5697, %v5693
    %v6050 = vpack.c.b16 %v5702, %v5698
    %v6051 = vpack.c.b16 %v5703, %v5699
    %v6052 = vpack.c.b16 %v5704, %v5700
    %v6053 = vpack.c.b16 %v5705, %v5701
    %v6054 = vpack.c.b16 %v5710, %v5706
    %v6055 = vpack.c.b16 %v5711, %v5707
    %v6056 = vpack.c.b16 %v5712, %v5708
    %v6057 = vpack.c.b16 %v5713, %v5709
    %v6058 = vpack.c.b16 %v5718, %v5714
    %v6059 = vpack.c.b16 %v5719, %v5715
    %v6060 = vpack.c.b16 %v5720, %v5716
    %v6061 = vpack.c.b16 %v5721, %v5717
    %v6062 = vpack.c.b16 %v5726, %v5722
    %v6063 = vpack.c.b16 %v5727, %v5723
    %v6064 = vpack.c.b16 %v5728, %v5724
    %v6065 = vpack.c.b16 %v5729, %v5725
    %v6066 = vpack.c.b16 %v5734, %v5730
    %v6067 = vpack.c.b16 %v5735, %v5731
    %v6068 = vpack.c.b16 %v5736, %v5732
    %v6069 = vpack.c.b16 %v5737, %v5733
    %v6070 = vpack.c.b16 %v5742, %v5738
    %v6071 = vpack.c.b16 %v5743, %v5739
    %v6072 = vpack.c.b16 %v5744, %v5740
    %v6073 = vpack.c.b16 %v5745, %v5741
    %v6074 = vpack.c.b16 %v5750, %v5746
    %v6075 = vpack.c.b16 %v5751, %v5747
    %v6076 = vpack.c.b16 %v5752, %v5748
    %v6077 = vpack.c.b16 %v5753, %v5749
    %v6078 = vpack.c.b16 %v5758, %v5754
    %v6079 = vpack.c.b16 %v5759, %v5755
    %v6080 = vpack.c.b16 %v5760, %v5756
    %v6081 = vpack.c.b16 %v5761, %v5757
    %v6082 = vpack.c.b16 %v5766, %v5762
    %v6083 = vpack.c.b16 %v5767, %v5763
    %v6084 = vpack.c.b16 %v5768, %v5764
    %v6085 = vpack.c.b16 %v5769, %v5765
    %v6086 = vpack.c.b16 %v5774, %v5770
    %v6087 = vpack.c.b16 %v5775, %v5771
    %v6088 = vpack.c.b16 %v5776, %v5772
    %v6089 = vpack.c.b16 %v5777, %v5773
    %v6090 = vpack.c.b16 %v5782, %v5778
    %v6091 = vpack.c.b16 %v5783, %v5779
    %v6092 = vpack.c.b16 %v5784, %v5780
    %v6093 = vpack.c.b16 %v5785, %v5781
    %v6094 = vpack.c.b16 %v5790, %v5786
    %v6095 = vpack.c.b16 %v5791, %v5787
    %v6096 = vpack.c.b16 %v5792, %v5788
    %v6097 = vpack.c.b16 %v5793, %v5789
    %v6098 = vpack.c.b16 %v5798, %v5794
    %v6099 = vpack.c.b16 %v5799, %v5795
    %v6100 = vpack.c.b16 %v5800, %v5796
    %v6101 = vpack.c.b16 %v5801, %v5797
    %v6102 = vpack.c.b16 %v5806, %v5802
    %v6103 = vpack.c.b16 %v5807, %v5803
    %v6104 = vpack.c.b16 %v5808, %v5804
    %v6105 = vpack.c.b16 %v5809, %v5805
    %v6106 = vpack.c.b16 %v5814, %v5810
    %v6107 = vpack.c.b16 %v5815, %v5811
    %v6108 = vpack.c.b16 %v5816, %v5812
    %v6109 = vpack.c.b16 %v5817, %v5813
    %v6110 = vpack.c.b16 %v5822, %v5818
    %v6111 = vpack.c.b16 %v5823, %v5819
    %v6112 = vpack.c.b16 %v5824, %v5820
    %v6113 = vpack.c.b16 %v5825, %v5821
    %v6114 = vpack.c.b16 %v5830, %v5826
    %v6115 = vpack.c.b16 %v5831, %v5827
    %v6116 = vpack.c.b16 %v5832, %v5828
    %v6117 = vpack.c.b16 %v5833, %v5829
    %v6118 = vpack.c.b16 %v5838, %v5834
    %v6119 = vpack.c.b16 %v5839, %v5835
    %v6120 = vpack.c.b16 %v5840, %v5836
    %v6121 = vpack.c.b16 %v5841, %v5837
    %v6122 = vpack.c.b16 %v5846, %v5842
    %v6123 = vpack.c.b16 %v5847, %v5843
    %v6124 = vpack.c.b16 %v5848, %v5844
    %v6125 = vpack.c.b16 %v5849, %v5845
    %v6126 = vpack.c.b16 %v5854, %v5850
    %v6127 = vpack.c.b16 %v5855, %v5851
    %v6128 = vpack.c.b16 %v5856, %v5852
    %v6129 = vpack.c.b16 %v5857, %v5853
    %v6130 = vpack.c.b16 %v5862, %v5858
    %v6131 = vpack.c.b16 %v5863, %v5859
    %v6132 = vpack.c.b16 %v5864, %v5860
    %v6133 = vpack.c.b16 %v5865, %v5861
    %v6134 = vpack.c.b16 %v5870, %v5866
    %v6135 = vpack.c.b16 %v5871, %v5867
    %v6136 = vpack.c.b16 %v5872, %v5868
    %v6137 = vpack.c.b16 %v5873, %v5869
    %v6138 = vpack.c.b16 %v5878, %v5874
    %v6139 = vpack.c.b16 %v5879, %v5875
    %v6140 = vpack.c.b16 %v5880, %v5876
    %v6141 = vpack.c.b16 %v5881, %v5877
    %v6142 = vpack.c.b16 %v5886, %v5882
    %v6143 = vpack.c.b16 %v5887, %v5883
    %v6144 = vpack.c.b16 %v5888, %v5884
    %v6145 = vpack.c.b16 %v5889, %v5885
    %v6146 = vpack.c.b16 %v5894, %v5890
    %v6147 = vpack.c.b16 %v5895, %v5891
    %v6148 = vpack.c.b16 %v5896, %v5892
    %v6149 = vpack.c.b16 %v5897, %v5893
    %v6150 = vpack.c.b16 %v5902, %v5898
    %v6151 = vpack.c.b16 %v5903, %v5899
    %v6152 = vpack.c.b16 %v5904, %v5900
    %v6153 = vpack.c.b16 %v5905, %v5901
    %v6154 = vpack.c.b16 %v5910, %v5906
    %v6155 = vpack.c.b16 %v5911, %v5907
    %v6156 = vpack.c.b16 %v5912, %v5908
    %v6157 = vpack.c.b16 %v5913, %v5909
    %v6158 = vpack.c.b16 %v5918, %v5914
    %v6159 = vpack.c.b16 %v5919, %v5915
    %v6160 = vpack.c.b16 %v5920, %v5916
    %v6161 = vpack.c.b16 %v5921, %v5917
    %v6162 = vpack.c.b16 %v5926, %v5922
    %v6163 = vpack.c.b16 %v5927, %v5923
    %v6164 = vpack.c.b16 %v5928, %v5924
    %v6165 = vpack.c.b16 %v5929, %v5925
    %v6166 = vpack.c.b16 %v5934, %v5930
    %v6167 = vpack.c.b16 %v5935, %v5931
    %v6168 = vpack.c.b16 %v5936, %v5932
    %v6169 = vpack.c.b16 %v5937, %v5933
    %v6170 = vpack.c.b16 %v5942, %v5938
    %v6171 = vpack.c.b16 %v5943, %v5939
    %v6172 = vpack.c.b16 %v5944, %v5940
    %v6173 = vpack.c.b16 %v5945, %v5941
    %v6174 = vpack.c.b16 %v5950, %v5946
    %v6175 = vpack.c.b16 %v5951, %v5947
    %v6176 = vpack.c.b16 %v5952, %v5948
    %v6177 = vpack.c.b16 %v5953, %v5949
    %v6178 = vpack.c.b16 %v5958, %v5954
    %v6179 = vpack.c.b16 %v5959, %v5955
    %v6180 = vpack.c.b16 %v5960, %v5956
    %v6181 = vpack.c.b16 %v5961, %v5957
    %v6182 = vpack.c.b16 %v5966, %v5962
    %v6183 = vpack.c.b16 %v5967, %v5963
    %v6184 = vpack.c.b16 %v5968, %v5964
    %v6185 = vpack.c.b16 %v5969, %v5965
    %v6186 = vpack.c.b16 %v5974, %v5970
    %v6187 = vpack.c.b16 %v5975, %v5971
    %v6188 = vpack.c.b16 %v5976, %v5972
    %v6189 = vpack.c.b16 %v5977, %v5973
    %v6190 = vpack.c.b16 %v5982, %v5978
    %v6191 = vpack.c.b16 %v5983, %v5979
    %v6192 = vpack.c.b16 %v5984, %v5980
    %v6193 = vpack.c.b16 %v5985, %v5981
    %v6194 = vpack.c.b16 %v5990, %v5986
    %v6195 = vpack.c.b16 %v5991, %v5987
    %v6196 = vpack.c.b16 %v5992, %v5988
    %v6197 = vpack.c.b16 %v5993, %v5989
    %v6198 = vpack.c.b16 %v5998, %v5994
    %v6199 = vpack.c.b16 %v5999, %v5995
    %v6200 = vpack.c.b16 %v6000, %v5996
    %v6201 = vpack.c.b16 %v6001, %v5997
    %v6202 = vpack.c.b16 %v6006, %v6002
    %v6203 = vpack.c.b16 %v6007, %v6003
    %v6204 = vpack.c.b16 %v6008, %v6004
    %v6205 = vpack.c.b16 %v6009, %v6005
    %v6206 = vpack.c.b16 %v6014, %v6010
    %v6207 = vpack.c.b16 %v6015, %v6011
    %v6208 = vpack.c.b16 %v6016, %v6012
    %v6209 = vpack.c.b16 %v6017, %v6013
    %6402 = vmatpush.bf16.msra.mxu0 %v6046
    %6403 = vmatpush.bf16.msra.mxu0 %v6042
    %6404 = vmatpush.bf16.msra.mxu0 %v6038
    %6405 = vmatpush.bf16.msra.mxu0 %v6034
    %6406 = vmatpush.bf16.msra.mxu0 %v6030
    %6407 = vmatpush.bf16.msra.mxu0 %v6026
    %6408 = vmatpush.bf16.msra.mxu0 %v6022
    %6409 = vmatpush.bf16.msra.mxu0 %v6018
    %6410 = vmatmul.bf16.gmra.mxu0 %v5430
    %v6411 = vpop.f32.mrf.mxu0
    %v6412 = vadd.f32 0.0, %v6411
    %v6413 = vpop.f32.mrf.mxu0
    %v6414 = vadd.f32 0.0, %v6413
    %6415 = vdwg.mxu0
    %6416 = vmatpush.bf16.msra.mxu0 %v6078
    %6417 = vmatpush.bf16.msra.mxu0 %v6074
    %6418 = vmatpush.bf16.msra.mxu0 %v6070
    %6419 = vmatpush.bf16.msra.mxu0 %v6066
    %6420 = vmatpush.bf16.msra.mxu0 %v6062
    %6421 = vmatpush.bf16.msra.mxu0 %v6058
    %6422 = vmatpush.bf16.msra.mxu0 %v6054
    %6423 = vmatpush.bf16.msra.mxu0 %v6050
    %6424 = vmatmul.bf16.gmra.mxu0 %v5431
    %v6425 = vpop.f32.mrf.mxu0
    %v6426 = vadd.f32 %v6412, %v6425
    %v6427 = vpop.f32.mrf.mxu0
    %v6428 = vadd.f32 %v6414, %v6427
    %6429 = vdwg.mxu0
    %6430 = vmatpush.bf16.msra.mxu0 %v6110
    %6431 = vmatpush.bf16.msra.mxu0 %v6106
    %6432 = vmatpush.bf16.msra.mxu0 %v6102
    %6433 = vmatpush.bf16.msra.mxu0 %v6098
    %6434 = vmatpush.bf16.msra.mxu0 %v6094
    %6435 = vmatpush.bf16.msra.mxu0 %v6090
    %6436 = vmatpush.bf16.msra.mxu0 %v6086
    %6437 = vmatpush.bf16.msra.mxu0 %v6082
    %6438 = vmatmul.bf16.gmra.mxu0 %v5432
    %v6439 = vpop.f32.mrf.mxu0
    %v6440 = vadd.f32 %v6426, %v6439
    %v6441 = vpop.f32.mrf.mxu0
    %v6442 = vadd.f32 %v6428, %v6441
    %6443 = vdwg.mxu0
    %6444 = vmatpush.bf16.msra.mxu0 %v6142
    %6445 = vmatpush.bf16.msra.mxu0 %v6138
    %6446 = vmatpush.bf16.msra.mxu0 %v6134
    %6447 = vmatpush.bf16.msra.mxu0 %v6130
    %6448 = vmatpush.bf16.msra.mxu0 %v6126
    %6449 = vmatpush.bf16.msra.mxu0 %v6122
    %6450 = vmatpush.bf16.msra.mxu0 %v6118
    %6451 = vmatpush.bf16.msra.mxu0 %v6114
    %6452 = vmatmul.bf16.gmra.mxu0 %v5433
    %v6453 = vpop.f32.mrf.mxu0
    %v6454 = vadd.f32 %v6440, %v6453
    %v6455 = vpop.f32.mrf.mxu0
    %v6456 = vadd.f32 %v6442, %v6455
    %6457 = vdwg.mxu0
    %6458 = vmatpush.bf16.msra.mxu0 %v6174
    %6459 = vmatpush.bf16.msra.mxu0 %v6170
    %6460 = vmatpush.bf16.msra.mxu0 %v6166
    %6461 = vmatpush.bf16.msra.mxu0 %v6162
    %6462 = vmatpush.bf16.msra.mxu0 %v6158
    %6463 = vmatpush.bf16.msra.mxu0 %v6154
    %6464 = vmatpush.bf16.msra.mxu0 %v6150
    %6465 = vmatpush.bf16.msra.mxu0 %v6146
    %6466 = vmatmul.bf16.gmra.mxu0 %v5434
    %v6467 = vpop.f32.mrf.mxu0
    %v6468 = vadd.f32 %v6454, %v6467
    %v6469 = vpop.f32.mrf.mxu0
    %v6470 = vadd.f32 %v6456, %v6469
    %6471 = vdwg.mxu0
    %6472 = vmatpush.bf16.msra.mxu0 %v6206
    %6473 = vmatpush.bf16.msra.mxu0 %v6202
    %6474 = vmatpush.bf16.msra.mxu0 %v6198
    %6475 = vmatpush.bf16.msra.mxu0 %v6194
    %6476 = vmatpush.bf16.msra.mxu0 %v6190
    %6477 = vmatpush.bf16.msra.mxu0 %v6186
    %6478 = vmatpush.bf16.msra.mxu0 %v6182
    %6479 = vmatpush.bf16.msra.mxu0 %v6178
    %6480 = vmatmul.bf16.gmra.mxu0 %v5435
    %v6481 = vpop.f32.mrf.mxu0
    %v6482 = vadd.f32 %v6468, %v6481
    %v6483 = vpop.f32.mrf.mxu0
    %v6484 = vadd.f32 %v6470, %v6483
    %6485 = vdwg.mxu0
    %6486 = vmatpush.bf16.msra.mxu0 %v6047
    %6487 = vmatpush.bf16.msra.mxu0 %v6043
    %6488 = vmatpush.bf16.msra.mxu0 %v6039
    %6489 = vmatpush.bf16.msra.mxu0 %v6035
    %6490 = vmatpush.bf16.msra.mxu0 %v6031
    %6491 = vmatpush.bf16.msra.mxu0 %v6027
    %6492 = vmatpush.bf16.msra.mxu0 %v6023
    %6493 = vmatpush.bf16.msra.mxu0 %v6019
    %6494 = vmatmul.bf16.gmra.mxu0 %v5430
    %v6495 = vpop.f32.mrf.mxu0
    %v6496 = vadd.f32 0.0, %v6495
    %v6497 = vpop.f32.mrf.mxu0
    %v6498 = vadd.f32 0.0, %v6497
    %6499 = vdwg.mxu0
    %6500 = vmatpush.bf16.msra.mxu0 %v6079
    %6501 = vmatpush.bf16.msra.mxu0 %v6075
    %6502 = vmatpush.bf16.msra.mxu0 %v6071
    %6503 = vmatpush.bf16.msra.mxu0 %v6067
    %6504 = vmatpush.bf16.msra.mxu0 %v6063
    %6505 = vmatpush.bf16.msra.mxu0 %v6059
    %6506 = vmatpush.bf16.msra.mxu0 %v6055
    %6507 = vmatpush.bf16.msra.mxu0 %v6051
    %6508 = vmatmul.bf16.gmra.mxu0 %v5431
    %v6509 = vpop.f32.mrf.mxu0
    %v6510 = vadd.f32 %v6496, %v6509
    %v6511 = vpop.f32.mrf.mxu0
    %v6512 = vadd.f32 %v6498, %v6511
    %6513 = vdwg.mxu0
    %6514 = vmatpush.bf16.msra.mxu0 %v6111
    %6515 = vmatpush.bf16.msra.mxu0 %v6107
    %6516 = vmatpush.bf16.msra.mxu0 %v6103
    %6517 = vmatpush.bf16.msra.mxu0 %v6099
    %6518 = vmatpush.bf16.msra.mxu0 %v6095
    %6519 = vmatpush.bf16.msra.mxu0 %v6091
    %6520 = vmatpush.bf16.msra.mxu0 %v6087
    %6521 = vmatpush.bf16.msra.mxu0 %v6083
    %6522 = vmatmul.bf16.gmra.mxu0 %v5432
    %v6523 = vpop.f32.mrf.mxu0
    %v6524 = vadd.f32 %v6510, %v6523
    %v6525 = vpop.f32.mrf.mxu0
    %v6526 = vadd.f32 %v6512, %v6525
    %6527 = vdwg.mxu0
    %6528 = vmatpush.bf16.msra.mxu0 %v6143
    %6529 = vmatpush.bf16.msra.mxu0 %v6139
    %6530 = vmatpush.bf16.msra.mxu0 %v6135
    %6531 = vmatpush.bf16.msra.mxu0 %v6131
    %6532 = vmatpush.bf16.msra.mxu0 %v6127
    %6533 = vmatpush.bf16.msra.mxu0 %v6123
    %6534 = vmatpush.bf16.msra.mxu0 %v6119
    %6535 = vmatpush.bf16.msra.mxu0 %v6115
    %6536 = vmatmul.bf16.gmra.mxu0 %v5433
    %v6537 = vpop.f32.mrf.mxu0
    %v6538 = vadd.f32 %v6524, %v6537
    %v6539 = vpop.f32.mrf.mxu0
    %v6540 = vadd.f32 %v6526, %v6539
    %6541 = vdwg.mxu0
    %6542 = vmatpush.bf16.msra.mxu0 %v6175
    %6543 = vmatpush.bf16.msra.mxu0 %v6171
    %6544 = vmatpush.bf16.msra.mxu0 %v6167
    %6545 = vmatpush.bf16.msra.mxu0 %v6163
    %6546 = vmatpush.bf16.msra.mxu0 %v6159
    %6547 = vmatpush.bf16.msra.mxu0 %v6155
    %6548 = vmatpush.bf16.msra.mxu0 %v6151
    %6549 = vmatpush.bf16.msra.mxu0 %v6147
    %6550 = vmatmul.bf16.gmra.mxu0 %v5434
    %v6551 = vpop.f32.mrf.mxu0
    %v6552 = vadd.f32 %v6538, %v6551
    %v6553 = vpop.f32.mrf.mxu0
    %v6554 = vadd.f32 %v6540, %v6553
    %6555 = vdwg.mxu0
    %6556 = vmatpush.bf16.msra.mxu0 %v6207
    %6557 = vmatpush.bf16.msra.mxu0 %v6203
    %6558 = vmatpush.bf16.msra.mxu0 %v6199
    %6559 = vmatpush.bf16.msra.mxu0 %v6195
    %6560 = vmatpush.bf16.msra.mxu0 %v6191
    %6561 = vmatpush.bf16.msra.mxu0 %v6187
    %6562 = vmatpush.bf16.msra.mxu0 %v6183
    %6563 = vmatpush.bf16.msra.mxu0 %v6179
    %6564 = vmatmul.bf16.gmra.mxu0 %v5435
    %v6565 = vpop.f32.mrf.mxu0
    %v6566 = vadd.f32 %v6552, %v6565
    %v6567 = vpop.f32.mrf.mxu0
    %v6568 = vadd.f32 %v6554, %v6567
    %6569 = vdwg.mxu0
    %6570 = vmatpush.bf16.msra.mxu0 %v6048
    %6571 = vmatpush.bf16.msra.mxu0 %v6044
    %6572 = vmatpush.bf16.msra.mxu0 %v6040
    %6573 = vmatpush.bf16.msra.mxu0 %v6036
    %6574 = vmatpush.bf16.msra.mxu0 %v6032
    %6575 = vmatpush.bf16.msra.mxu0 %v6028
    %6576 = vmatpush.bf16.msra.mxu0 %v6024
    %6577 = vmatpush.bf16.msra.mxu0 %v6020
    %6578 = vmatmul.bf16.gmra.mxu0 %v5430
    %v6579 = vpop.f32.mrf.mxu0
    %v6580 = vadd.f32 0.0, %v6579
    %v6581 = vpop.f32.mrf.mxu0
    %v6582 = vadd.f32 0.0, %v6581
    %6583 = vdwg.mxu0
    %6584 = vmatpush.bf16.msra.mxu0 %v6080
    %6585 = vmatpush.bf16.msra.mxu0 %v6076
    %6586 = vmatpush.bf16.msra.mxu0 %v6072
    %6587 = vmatpush.bf16.msra.mxu0 %v6068
    %6588 = vmatpush.bf16.msra.mxu0 %v6064
    %6589 = vmatpush.bf16.msra.mxu0 %v6060
    %6590 = vmatpush.bf16.msra.mxu0 %v6056
    %6591 = vmatpush.bf16.msra.mxu0 %v6052
    %6592 = vmatmul.bf16.gmra.mxu0 %v5431
    %v6593 = vpop.f32.mrf.mxu0
    %v6594 = vadd.f32 %v6580, %v6593
    %v6595 = vpop.f32.mrf.mxu0
    %v6596 = vadd.f32 %v6582, %v6595
    %6597 = vdwg.mxu0
    %6598 = vmatpush.bf16.msra.mxu0 %v6112
    %6599 = vmatpush.bf16.msra.mxu0 %v6108
    %6600 = vmatpush.bf16.msra.mxu0 %v6104
    %6601 = vmatpush.bf16.msra.mxu0 %v6100
    %6602 = vmatpush.bf16.msra.mxu0 %v6096
    %6603 = vmatpush.bf16.msra.mxu0 %v6092
    %6604 = vmatpush.bf16.msra.mxu0 %v6088
    %6605 = vmatpush.bf16.msra.mxu0 %v6084
    %6606 = vmatmul.bf16.gmra.mxu0 %v5432
    %v6607 = vpop.f32.mrf.mxu0
    %v6608 = vadd.f32 %v6594, %v6607
    %v6609 = vpop.f32.mrf.mxu0
    %v6610 = vadd.f32 %v6596, %v6609
    %6611 = vdwg.mxu0
    %6612 = vmatpush.bf16.msra.mxu0 %v6144
    %6613 = vmatpush.bf16.msra.mxu0 %v6140
    %6614 = vmatpush.bf16.msra.mxu0 %v6136
    %6615 = vmatpush.bf16.msra.mxu0 %v6132
    %6616 = vmatpush.bf16.msra.mxu0 %v6128
    %6617 = vmatpush.bf16.msra.mxu0 %v6124
    %6618 = vmatpush.bf16.msra.mxu0 %v6120
    %6619 = vmatpush.bf16.msra.mxu0 %v6116
    %6620 = vmatmul.bf16.gmra.mxu0 %v5433
    %v6621 = vpop.f32.mrf.mxu0
    %v6622 = vadd.f32 %v6608, %v6621
    %v6623 = vpop.f32.mrf.mxu0
    %v6624 = vadd.f32 %v6610, %v6623
    %6625 = vdwg.mxu0
    %6626 = vmatpush.bf16.msra.mxu0 %v6176
    %6627 = vmatpush.bf16.msra.mxu0 %v6172
    %6628 = vmatpush.bf16.msra.mxu0 %v6168
    %6629 = vmatpush.bf16.msra.mxu0 %v6164
    %6630 = vmatpush.bf16.msra.mxu0 %v6160
    %6631 = vmatpush.bf16.msra.mxu0 %v6156
    %6632 = vmatpush.bf16.msra.mxu0 %v6152
    %6633 = vmatpush.bf16.msra.mxu0 %v6148
    %6634 = vmatmul.bf16.gmra.mxu0 %v5434
    %v6635 = vpop.f32.mrf.mxu0
    %v6636 = vadd.f32 %v6622, %v6635
    %v6637 = vpop.f32.mrf.mxu0
    %v6638 = vadd.f32 %v6624, %v6637
    %6639 = vdwg.mxu0
    %6640 = vmatpush.bf16.msra.mxu0 %v6208
    %6641 = vmatpush.bf16.msra.mxu0 %v6204
    %6642 = vmatpush.bf16.msra.mxu0 %v6200
    %6643 = vmatpush.bf16.msra.mxu0 %v6196
    %6644 = vmatpush.bf16.msra.mxu0 %v6192
    %6645 = vmatpush.bf16.msra.mxu0 %v6188
    %6646 = vmatpush.bf16.msra.mxu0 %v6184
    %6647 = vmatpush.bf16.msra.mxu0 %v6180
    %6648 = vmatmul.bf16.gmra.mxu0 %v5435
    %v6649 = vpop.f32.mrf.mxu0
    %v6650 = vadd.f32 %v6636, %v6649
    %v6651 = vpop.f32.mrf.mxu0
    %v6652 = vadd.f32 %v6638, %v6651
    %6653 = vdwg.mxu0
    %6654 = vmatpush.bf16.msra.mxu0 %v6049
    %6655 = vmatpush.bf16.msra.mxu0 %v6045
    %6656 = vmatpush.bf16.msra.mxu0 %v6041
    %6657 = vmatpush.bf16.msra.mxu0 %v6037
    %6658 = vmatpush.bf16.msra.mxu0 %v6033
    %6659 = vmatpush.bf16.msra.mxu0 %v6029
    %6660 = vmatpush.bf16.msra.mxu0 %v6025
    %6661 = vmatpush.bf16.msra.mxu0 %v6021
    %6662 = vmatmul.bf16.gmra.mxu0 %v5430
    %v6663 = vpop.f32.mrf.mxu0
    %v6664 = vadd.f32 0.0, %v6663
    %v6665 = vpop.f32.mrf.mxu0
    %v6666 = vadd.f32 0.0, %v6665
    %6667 = vdwg.mxu0
    %6668 = vmatpush.bf16.msra.mxu0 %v6081
    %6669 = vmatpush.bf16.msra.mxu0 %v6077
    %6670 = vmatpush.bf16.msra.mxu0 %v6073
    %6671 = vmatpush.bf16.msra.mxu0 %v6069
    %6672 = vmatpush.bf16.msra.mxu0 %v6065
    %6673 = vmatpush.bf16.msra.mxu0 %v6061
    %6674 = vmatpush.bf16.msra.mxu0 %v6057
    %6675 = vmatpush.bf16.msra.mxu0 %v6053
    %6676 = vmatmul.bf16.gmra.mxu0 %v5431
    %v6677 = vpop.f32.mrf.mxu0
    %v6678 = vadd.f32 %v6664, %v6677
    %v6679 = vpop.f32.mrf.mxu0
    %v6680 = vadd.f32 %v6666, %v6679
    %6681 = vdwg.mxu0
    %6682 = vmatpush.bf16.msra.mxu0 %v6113
    %6683 = vmatpush.bf16.msra.mxu0 %v6109
    %6684 = vmatpush.bf16.msra.mxu0 %v6105
    %6685 = vmatpush.bf16.msra.mxu0 %v6101
    %6686 = vmatpush.bf16.msra.mxu0 %v6097
    %6687 = vmatpush.bf16.msra.mxu0 %v6093
    %6688 = vmatpush.bf16.msra.mxu0 %v6089
    %6689 = vmatpush.bf16.msra.mxu0 %v6085
    %6690 = vmatmul.bf16.gmra.mxu0 %v5432
    %v6691 = vpop.f32.mrf.mxu0
    %v6692 = vadd.f32 %v6678, %v6691
    %v6693 = vpop.f32.mrf.mxu0
    %v6694 = vadd.f32 %v6680, %v6693
    %6695 = vdwg.mxu0
    %6696 = vmatpush.bf16.msra.mxu0 %v6145
    %6697 = vmatpush.bf16.msra.mxu0 %v6141
    %6698 = vmatpush.bf16.msra.mxu0 %v6137
    %6699 = vmatpush.bf16.msra.mxu0 %v6133
    %6700 = vmatpush.bf16.msra.mxu0 %v6129
    %6701 = vmatpush.bf16.msra.mxu0 %v6125
    %6702 = vmatpush.bf16.msra.mxu0 %v6121
    %6703 = vmatpush.bf16.msra.mxu0 %v6117
    %6704 = vmatmul.bf16.gmra.mxu0 %v5433
    %v6705 = vpop.f32.mrf.mxu0
    %v6706 = vadd.f32 %v6692, %v6705
    %v6707 = vpop.f32.mrf.mxu0
    %v6708 = vadd.f32 %v6694, %v6707
    %6709 = vdwg.mxu0
    %6710 = vmatpush.bf16.msra.mxu0 %v6177
    %6711 = vmatpush.bf16.msra.mxu0 %v6173
    %6712 = vmatpush.bf16.msra.mxu0 %v6169
    %6713 = vmatpush.bf16.msra.mxu0 %v6165
    %6714 = vmatpush.bf16.msra.mxu0 %v6161
    %6715 = vmatpush.bf16.msra.mxu0 %v6157
    %6716 = vmatpush.bf16.msra.mxu0 %v6153
    %6717 = vmatpush.bf16.msra.mxu0 %v6149
    %6718 = vmatmul.bf16.gmra.mxu0 %v5434
    %v6719 = vpop.f32.mrf.mxu0
    %v6720 = vadd.f32 %v6706, %v6719
    %v6721 = vpop.f32.mrf.mxu0
    %v6722 = vadd.f32 %v6708, %v6721
    %6723 = vdwg.mxu0
    %6724 = vmatpush.bf16.msra.mxu0 %v6209
    %6725 = vmatpush.bf16.msra.mxu0 %v6205
    %6726 = vmatpush.bf16.msra.mxu0 %v6201
    %6727 = vmatpush.bf16.msra.mxu0 %v6197
    %6728 = vmatpush.bf16.msra.mxu0 %v6193
    %6729 = vmatpush.bf16.msra.mxu0 %v6189
    %6730 = vmatpush.bf16.msra.mxu0 %v6185
    %6731 = vmatpush.bf16.msra.mxu0 %v6181
    %6732 = vmatmul.bf16.gmra.mxu0 %v5435
    %v6733 = vpop.f32.mrf.mxu0
    %v6734 = vadd.f32 %v6720, %v6733
    %v6735 = vpop.f32.mrf.mxu0
    %v6736 = vadd.f32 %v6722, %v6735
    %6737 = vdwg.mxu0
    %v6738 = vpack.c.bf16 %v4372, %v4370
    %v6739 = vpack.c.bf16 %v4652, %v4650
    %v6740 = vpack.c.bf16 %v4932, %v4930
    %v6741 = vpack.c.bf16 %v5212, %v5210
    %v6742 = vld [vmem:[#allocation10] sm:$0xf]
    %v6743 = vld [vmem:[#allocation10 + $0x4] sm:$0xf]
    %v6744 = vld [vmem:[#allocation10 + $0x8] sm:$0xf]
    %v6745 = vld [vmem:[#allocation10 + $0xc] sm:$0xf]
    %v6746 = vld [vmem:[#allocation10 + $0x10] sm:$0xf]
    %v6747 = vld [vmem:[#allocation10 + $0x14] sm:$0xf]
    %v6748 = vld [vmem:[#allocation10 + $0x18] sm:$0xf]
    %v6749 = vld [vmem:[#allocation10 + $0x1c] sm:$0xf]
    %v6750 = vld [vmem:[#allocation10 + $0x20] sm:$0xf]
    %v6751 = vld [vmem:[#allocation10 + $0x24] sm:$0xf]
    %v6752 = vld [vmem:[#allocation10 + $0x28] sm:$0xf]
    %v6753 = vld [vmem:[#allocation10 + $0x2c] sm:$0xf]
    %v6754 = vld [vmem:[#allocation10 + $0x30] sm:$0xf]
    %v6755 = vld [vmem:[#allocation10 + $0x34] sm:$0xf]
    %v6756 = vld [vmem:[#allocation10 + $0x38] sm:$0xf]
    %v6757 = vld [vmem:[#allocation10 + $0x3c] sm:$0xf]
    %v6758 = vld [vmem:[#allocation10 + $0x40] sm:$0xf]
    %v6759 = vld [vmem:[#allocation10 + $0x44] sm:$0xf]
    %v6760 = vld [vmem:[#allocation10 + $0x48] sm:$0xf]
    %v6761 = vld [vmem:[#allocation10 + $0x4c] sm:$0xf]
    %v6762 = vld [vmem:[#allocation10 + $0x50] sm:$0xf]
    %v6763 = vld [vmem:[#allocation10 + $0x54] sm:$0xf]
    %v6764 = vld [vmem:[#allocation10 + $0x58] sm:$0xf]
    %v6765 = vld [vmem:[#allocation10 + $0x5c] sm:$0xf]
    %v6766 = vld [vmem:[#allocation10 + $0x60] sm:$0xf]
    %v6767 = vld [vmem:[#allocation10 + $0x64] sm:$0xf]
    %v6768 = vld [vmem:[#allocation10 + $0x68] sm:$0xf]
    %v6769 = vld [vmem:[#allocation10 + $0x6c] sm:$0xf]
    %v6770 = vld [vmem:[#allocation10 + $0x70] sm:$0xf]
    %v6771 = vld [vmem:[#allocation10 + $0x74] sm:$0xf]
    %v6772 = vld [vmem:[#allocation10 + $0x78] sm:$0xf]
    %v6773 = vld [vmem:[#allocation10 + $0x7c] sm:$0xf]
    %v6774 = vld [vmem:[#allocation10 + $0x80] sm:$0xf]
    %v6775 = vld [vmem:[#allocation10 + $0x84] sm:$0xf]
    %v6776 = vld [vmem:[#allocation10 + $0x88] sm:$0xf]
    %v6777 = vld [vmem:[#allocation10 + $0x8c] sm:$0xf]
    %v6778 = vld [vmem:[#allocation10 + $0x90] sm:$0xf]
    %v6779 = vld [vmem:[#allocation10 + $0x94] sm:$0xf]
    %v6780 = vld [vmem:[#allocation10 + $0x98] sm:$0xf]
    %v6781 = vld [vmem:[#allocation10 + $0x9c] sm:$0xf]
    %v6782 = vld [vmem:[#allocation10 + $0xa0] sm:$0xf]
    %v6783 = vld [vmem:[#allocation10 + $0xa4] sm:$0xf]
    %v6784 = vld [vmem:[#allocation10 + $0xa8] sm:$0xf]
    %v6785 = vld [vmem:[#allocation10 + $0xac] sm:$0xf]
    %v6786 = vld [vmem:[#allocation10 + $0xb0] sm:$0xf]
    %v6787 = vld [vmem:[#allocation10 + $0xb4] sm:$0xf]
    %v6788 = vld [vmem:[#allocation10 + $0xb8] sm:$0xf]
    %v6789 = vld [vmem:[#allocation10 + $0xbc] sm:$0xf]
    %v6790 = vld [vmem:[#allocation10 + $0xc0] sm:$0xf]
    %v6791 = vld [vmem:[#allocation10 + $0xc4] sm:$0xf]
    %v6792 = vld [vmem:[#allocation10 + $0xc8] sm:$0xf]
    %v6793 = vld [vmem:[#allocation10 + $0xcc] sm:$0xf]
    %v6794 = vld [vmem:[#allocation10 + $0xd0] sm:$0xf]
    %v6795 = vld [vmem:[#allocation10 + $0xd4] sm:$0xf]
    %v6796 = vld [vmem:[#allocation10 + $0xd8] sm:$0xf]
    %v6797 = vld [vmem:[#allocation10 + $0xdc] sm:$0xf]
    %v6798 = vld [vmem:[#allocation10 + $0xe0] sm:$0xf]
    %v6799 = vld [vmem:[#allocation10 + $0xe4] sm:$0xf]
    %v6800 = vld [vmem:[#allocation10 + $0xe8] sm:$0xf]
    %v6801 = vld [vmem:[#allocation10 + $0xec] sm:$0xf]
    %v6802 = vld [vmem:[#allocation10 + $0xf0] sm:$0xf]
    %v6803 = vld [vmem:[#allocation10 + $0xf4] sm:$0xf]
    %v6804 = vld [vmem:[#allocation10 + $0xf8] sm:$0xf]
    %v6805 = vld [vmem:[#allocation10 + $0xfc] sm:$0xf]
    %v6806 = vpack.c.bf16 %v6484, %v6482
    %v6807 = vpack.c.bf16 %v6568, %v6566
    %v6808 = vpack.c.bf16 %v6652, %v6650
    %v6809 = vpack.c.bf16 %v6736, %v6734
    %v6810 = vld [vmem:[#allocation11] sm:$0xf]
    %v6811 = vld [vmem:[#allocation11 + $0x4] sm:$0xf]
    %v6812 = vld [vmem:[#allocation11 + $0x8] sm:$0xf]
    %v6813 = vld [vmem:[#allocation11 + $0xc] sm:$0xf]
    %v6814 = vld [vmem:[#allocation11 + $0x10] sm:$0xf]
    %v6815 = vld [vmem:[#allocation11 + $0x14] sm:$0xf]
    %v6816 = vld [vmem:[#allocation11 + $0x18] sm:$0xf]
    %v6817 = vld [vmem:[#allocation11 + $0x1c] sm:$0xf]
    %v6818 = vld [vmem:[#allocation11 + $0x20] sm:$0xf]
    %v6819 = vld [vmem:[#allocation11 + $0x24] sm:$0xf]
    %v6820 = vld [vmem:[#allocation11 + $0x28] sm:$0xf]
    %v6821 = vld [vmem:[#allocation11 + $0x2c] sm:$0xf]
    %v6822 = vld [vmem:[#allocation11 + $0x30] sm:$0xf]
    %v6823 = vld [vmem:[#allocation11 + $0x34] sm:$0xf]
    %v6824 = vld [vmem:[#allocation11 + $0x38] sm:$0xf]
    %v6825 = vld [vmem:[#allocation11 + $0x3c] sm:$0xf]
    %v6826 = vld [vmem:[#allocation11 + $0x40] sm:$0xf]
    %v6827 = vld [vmem:[#allocation11 + $0x44] sm:$0xf]
    %v6828 = vld [vmem:[#allocation11 + $0x48] sm:$0xf]
    %v6829 = vld [vmem:[#allocation11 + $0x4c] sm:$0xf]
    %v6830 = vld [vmem:[#allocation11 + $0x50] sm:$0xf]
    %v6831 = vld [vmem:[#allocation11 + $0x54] sm:$0xf]
    %v6832 = vld [vmem:[#allocation11 + $0x58] sm:$0xf]
    %v6833 = vld [vmem:[#allocation11 + $0x5c] sm:$0xf]
    %v6834 = vld [vmem:[#allocation11 + $0x60] sm:$0xf]
    %v6835 = vld [vmem:[#allocation11 + $0x64] sm:$0xf]
    %v6836 = vld [vmem:[#allocation11 + $0x68] sm:$0xf]
    %v6837 = vld [vmem:[#allocation11 + $0x6c] sm:$0xf]
    %v6838 = vld [vmem:[#allocation11 + $0x70] sm:$0xf]
    %v6839 = vld [vmem:[#allocation11 + $0x74] sm:$0xf]
    %v6840 = vld [vmem:[#allocation11 + $0x78] sm:$0xf]
    %v6841 = vld [vmem:[#allocation11 + $0x7c] sm:$0xf]
    %v6842 = vld [vmem:[#allocation11 + $0x80] sm:$0xf]
    %v6843 = vld [vmem:[#allocation11 + $0x84] sm:$0xf]
    %v6844 = vld [vmem:[#allocation11 + $0x88] sm:$0xf]
    %v6845 = vld [vmem:[#allocation11 + $0x8c] sm:$0xf]
    %v6846 = vld [vmem:[#allocation11 + $0x90] sm:$0xf]
    %v6847 = vld [vmem:[#allocation11 + $0x94] sm:$0xf]
    %v6848 = vld [vmem:[#allocation11 + $0x98] sm:$0xf]
    %v6849 = vld [vmem:[#allocation11 + $0x9c] sm:$0xf]
    %v6850 = vld [vmem:[#allocation11 + $0xa0] sm:$0xf]
    %v6851 = vld [vmem:[#allocation11 + $0xa4] sm:$0xf]
    %v6852 = vld [vmem:[#allocation11 + $0xa8] sm:$0xf]
    %v6853 = vld [vmem:[#allocation11 + $0xac] sm:$0xf]
    %v6854 = vld [vmem:[#allocation11 + $0xb0] sm:$0xf]
    %v6855 = vld [vmem:[#allocation11 + $0xb4] sm:$0xf]
    %v6856 = vld [vmem:[#allocation11 + $0xb8] sm:$0xf]
    %v6857 = vld [vmem:[#allocation11 + $0xbc] sm:$0xf]
    %v6858 = vld [vmem:[#allocation11 + $0xc0] sm:$0xf]
    %v6859 = vld [vmem:[#allocation11 + $0xc4] sm:$0xf]
    %v6860 = vld [vmem:[#allocation11 + $0xc8] sm:$0xf]
    %v6861 = vld [vmem:[#allocation11 + $0xcc] sm:$0xf]
    %v6862 = vld [vmem:[#allocation11 + $0xd0] sm:$0xf]
    %v6863 = vld [vmem:[#allocation11 + $0xd4] sm:$0xf]
    %v6864 = vld [vmem:[#allocation11 + $0xd8] sm:$0xf]
    %v6865 = vld [vmem:[#allocation11 + $0xdc] sm:$0xf]
    %v6866 = vld [vmem:[#allocation11 + $0xe0] sm:$0xf]
    %v6867 = vld [vmem:[#allocation11 + $0xe4] sm:$0xf]
    %v6868 = vld [vmem:[#allocation11 + $0xe8] sm:$0xf]
    %v6869 = vld [vmem:[#allocation11 + $0xec] sm:$0xf]
    %v6870 = vld [vmem:[#allocation11 + $0xf0] sm:$0xf]
    %v6871 = vld [vmem:[#allocation11 + $0xf4] sm:$0xf]
    %v6872 = vld [vmem:[#allocation11 + $0xf8] sm:$0xf]
    %v6873 = vld [vmem:[#allocation11 + $0xfc] sm:$0xf]
    %v6938 = vunpack.c.l.b16 %v6810
    %v6939 = vunpack.c.l.b16 %v6811
    %v6940 = vunpack.c.l.b16 %v6812
    %v6941 = vunpack.c.l.b16 %v6813
    %v6942 = vunpack.c.l.b16 %v6814
    %v6943 = vunpack.c.l.b16 %v6815
    %v6944 = vunpack.c.l.b16 %v6816
    %v6945 = vunpack.c.l.b16 %v6817
    %v6946 = vunpack.c.l.b16 %v6818
    %v6947 = vunpack.c.l.b16 %v6819
    %v6948 = vunpack.c.l.b16 %v6820
    %v6949 = vunpack.c.l.b16 %v6821
    %v6950 = vunpack.c.l.b16 %v6822
    %v6951 = vunpack.c.l.b16 %v6823
    %v6952 = vunpack.c.l.b16 %v6824
    %v6953 = vunpack.c.l.b16 %v6825
    %v6954 = vunpack.c.l.b16 %v6826
    %v6955 = vunpack.c.l.b16 %v6827
    %v6956 = vunpack.c.l.b16 %v6828
    %v6957 = vunpack.c.l.b16 %v6829
    %v6958 = vunpack.c.l.b16 %v6830
    %v6959 = vunpack.c.l.b16 %v6831
    %v6960 = vunpack.c.l.b16 %v6832
    %v6961 = vunpack.c.l.b16 %v6833
    %v6962 = vunpack.c.l.b16 %v6834
    %v6963 = vunpack.c.l.b16 %v6835
    %v6964 = vunpack.c.l.b16 %v6836
    %v6965 = vunpack.c.l.b16 %v6837
    %v6966 = vunpack.c.l.b16 %v6838
    %v6967 = vunpack.c.l.b16 %v6839
    %v6968 = vunpack.c.l.b16 %v6840
    %v6969 = vunpack.c.l.b16 %v6841
    %v6970 = vunpack.c.l.b16 %v6842
    %v6971 = vunpack.c.l.b16 %v6843
    %v6972 = vunpack.c.l.b16 %v6844
    %v6973 = vunpack.c.l.b16 %v6845
    %v6974 = vunpack.c.l.b16 %v6846
    %v6975 = vunpack.c.l.b16 %v6847
    %v6976 = vunpack.c.l.b16 %v6848
    %v6977 = vunpack.c.l.b16 %v6849
    %v6978 = vunpack.c.l.b16 %v6850
    %v6979 = vunpack.c.l.b16 %v6851
    %v6980 = vunpack.c.l.b16 %v6852
    %v6981 = vunpack.c.l.b16 %v6853
    %v6982 = vunpack.c.l.b16 %v6854
    %v6983 = vunpack.c.l.b16 %v6855
    %v6984 = vunpack.c.l.b16 %v6856
    %v6985 = vunpack.c.l.b16 %v6857
    %v6986 = vunpack.c.l.b16 %v6858
    %v6987 = vunpack.c.l.b16 %v6859
    %v6988 = vunpack.c.l.b16 %v6860
    %v6989 = vunpack.c.l.b16 %v6861
    %v6990 = vunpack.c.l.b16 %v6862
    %v6991 = vunpack.c.l.b16 %v6863
    %v6992 = vunpack.c.l.b16 %v6864
    %v6993 = vunpack.c.l.b16 %v6865
    %v6994 = vunpack.c.l.b16 %v6866
    %v6995 = vunpack.c.l.b16 %v6867
    %v6996 = vunpack.c.l.b16 %v6868
    %v6997 = vunpack.c.l.b16 %v6869
    %v6998 = vunpack.c.l.b16 %v6870
    %v6999 = vunpack.c.l.b16 %v6871
    %v7000 = vunpack.c.l.b16 %v6872
    %v7001 = vunpack.c.l.b16 %v6873
    %v7002 = vpack.c.b16 %v6939, %v6938
    %v7003 = vpack.c.b16 %v6941, %v6940
    %v7004 = vpack.c.b16 %v6943, %v6942
    %v7005 = vpack.c.b16 %v6945, %v6944
    %v7006 = vpack.c.b16 %v6947, %v6946
    %v7007 = vpack.c.b16 %v6949, %v6948
    %v7008 = vpack.c.b16 %v6951, %v6950
    %v7009 = vpack.c.b16 %v6953, %v6952
    %v7010 = vpack.c.b16 %v6955, %v6954
    %v7011 = vpack.c.b16 %v6957, %v6956
    %v7012 = vpack.c.b16 %v6959, %v6958
    %v7013 = vpack.c.b16 %v6961, %v6960
    %v7014 = vpack.c.b16 %v6963, %v6962
    %v7015 = vpack.c.b16 %v6965, %v6964
    %v7016 = vpack.c.b16 %v6967, %v6966
    %v7017 = vpack.c.b16 %v6969, %v6968
    %v7018 = vpack.c.b16 %v6971, %v6970
    %v7019 = vpack.c.b16 %v6973, %v6972
    %v7020 = vpack.c.b16 %v6975, %v6974
    %v7021 = vpack.c.b16 %v6977, %v6976
    %v7022 = vpack.c.b16 %v6979, %v6978
    %v7023 = vpack.c.b16 %v6981, %v6980
    %v7024 = vpack.c.b16 %v6983, %v6982
    %v7025 = vpack.c.b16 %v6985, %v6984
    %v7026 = vpack.c.b16 %v6987, %v6986
    %v7027 = vpack.c.b16 %v6989, %v6988
    %v7028 = vpack.c.b16 %v6991, %v6990
    %v7029 = vpack.c.b16 %v6993, %v6992
    %v7030 = vpack.c.b16 %v6995, %v6994
    %v7031 = vpack.c.b16 %v6997, %v6996
    %v7032 = vpack.c.b16 %v6999, %v6998
    %v7033 = vpack.c.b16 %v7001, %v7000
    %7066 = vmatpush.bf16.msra.mxu0 %v7009
    %7067 = vmatpush.bf16.msra.mxu0 %v7008
    %7068 = vmatpush.bf16.msra.mxu0 %v7007
    %7069 = vmatpush.bf16.msra.mxu0 %v7006
    %7070 = vmatpush.bf16.msra.mxu0 %v7005
    %7071 = vmatpush.bf16.msra.mxu0 %v7004
    %7072 = vmatpush.bf16.msra.mxu0 %v7003
    %7073 = vmatpush.bf16.msra.mxu0 %v7002
    %7074 = vmatmul.bf16.gmra.mxu0 %v6806
    %v7075 = vpop.f32.mrf.mxu0
    %v7076 = vadd.f32 0.0, %v7075
    %v7077 = vpop.f32.mrf.mxu0
    %v7078 = vadd.f32 0.0, %v7077
    %7079 = vdwg.mxu0
    %7080 = vmatpush.bf16.msra.mxu0 %v7017
    %7081 = vmatpush.bf16.msra.mxu0 %v7016
    %7082 = vmatpush.bf16.msra.mxu0 %v7015
    %7083 = vmatpush.bf16.msra.mxu0 %v7014
    %7084 = vmatpush.bf16.msra.mxu0 %v7013
    %7085 = vmatpush.bf16.msra.mxu0 %v7012
    %7086 = vmatpush.bf16.msra.mxu0 %v7011
    %7087 = vmatpush.bf16.msra.mxu0 %v7010
    %7088 = vmatmul.bf16.gmra.mxu0 %v6807
    %v7089 = vpop.f32.mrf.mxu0
    %v7090 = vadd.f32 %v7076, %v7089
    %v7091 = vpop.f32.mrf.mxu0
    %v7092 = vadd.f32 %v7078, %v7091
    %7093 = vdwg.mxu0
    %7094 = vmatpush.bf16.msra.mxu0 %v7025
    %7095 = vmatpush.bf16.msra.mxu0 %v7024
    %7096 = vmatpush.bf16.msra.mxu0 %v7023
    %7097 = vmatpush.bf16.msra.mxu0 %v7022
    %7098 = vmatpush.bf16.msra.mxu0 %v7021
    %7099 = vmatpush.bf16.msra.mxu0 %v7020
    %7100 = vmatpush.bf16.msra.mxu0 %v7019
    %7101 = vmatpush.bf16.msra.mxu0 %v7018
    %7102 = vmatmul.bf16.gmra.mxu0 %v6808
    %v7103 = vpop.f32.mrf.mxu0
    %v7104 = vadd.f32 %v7090, %v7103
    %v7105 = vpop.f32.mrf.mxu0
    %v7106 = vadd.f32 %v7092, %v7105
    %7107 = vdwg.mxu0
    %7108 = vmatpush.bf16.msra.mxu0 %v7033
    %7109 = vmatpush.bf16.msra.mxu0 %v7032
    %7110 = vmatpush.bf16.msra.mxu0 %v7031
    %7111 = vmatpush.bf16.msra.mxu0 %v7030
    %7112 = vmatpush.bf16.msra.mxu0 %v7029
    %7113 = vmatpush.bf16.msra.mxu0 %v7028
    %7114 = vmatpush.bf16.msra.mxu0 %v7027
    %7115 = vmatpush.bf16.msra.mxu0 %v7026
    %7116 = vmatmul.bf16.gmra.mxu0 %v6809
    %v7117 = vpop.f32.mrf.mxu0
    %v7118 = vadd.f32 %v7104, %v7117
    %v7119 = vpop.f32.mrf.mxu0
    %v7120 = vadd.f32 %v7106, %v7119
    %7121 = vdwg.mxu0
    %v7186 = vunpack.c.l.b16 %v6742
    %v7187 = vunpack.c.l.b16 %v6743
    %v7188 = vunpack.c.l.b16 %v6744
    %v7189 = vunpack.c.l.b16 %v6745
    %v7190 = vunpack.c.l.b16 %v6746
    %v7191 = vunpack.c.l.b16 %v6747
    %v7192 = vunpack.c.l.b16 %v6748
    %v7193 = vunpack.c.l.b16 %v6749
    %v7194 = vunpack.c.l.b16 %v6750
    %v7195 = vunpack.c.l.b16 %v6751
    %v7196 = vunpack.c.l.b16 %v6752
    %v7197 = vunpack.c.l.b16 %v6753
    %v7198 = vunpack.c.l.b16 %v6754
    %v7199 = vunpack.c.l.b16 %v6755
    %v7200 = vunpack.c.l.b16 %v6756
    %v7201 = vunpack.c.l.b16 %v6757
    %v7202 = vunpack.c.l.b16 %v6758
    %v7203 = vunpack.c.l.b16 %v6759
    %v7204 = vunpack.c.l.b16 %v6760
    %v7205 = vunpack.c.l.b16 %v6761
    %v7206 = vunpack.c.l.b16 %v6762
    %v7207 = vunpack.c.l.b16 %v6763
    %v7208 = vunpack.c.l.b16 %v6764
    %v7209 = vunpack.c.l.b16 %v6765
    %v7210 = vunpack.c.l.b16 %v6766
    %v7211 = vunpack.c.l.b16 %v6767
    %v7212 = vunpack.c.l.b16 %v6768
    %v7213 = vunpack.c.l.b16 %v6769
    %v7214 = vunpack.c.l.b16 %v6770
    %v7215 = vunpack.c.l.b16 %v6771
    %v7216 = vunpack.c.l.b16 %v6772
    %v7217 = vunpack.c.l.b16 %v6773
    %v7218 = vunpack.c.l.b16 %v6774
    %v7219 = vunpack.c.l.b16 %v6775
    %v7220 = vunpack.c.l.b16 %v6776
    %v7221 = vunpack.c.l.b16 %v6777
    %v7222 = vunpack.c.l.b16 %v6778
    %v7223 = vunpack.c.l.b16 %v6779
    %v7224 = vunpack.c.l.b16 %v6780
    %v7225 = vunpack.c.l.b16 %v6781
    %v7226 = vunpack.c.l.b16 %v6782
    %v7227 = vunpack.c.l.b16 %v6783
    %v7228 = vunpack.c.l.b16 %v6784
    %v7229 = vunpack.c.l.b16 %v6785
    %v7230 = vunpack.c.l.b16 %v6786
    %v7231 = vunpack.c.l.b16 %v6787
    %v7232 = vunpack.c.l.b16 %v6788
    %v7233 = vunpack.c.l.b16 %v6789
    %v7234 = vunpack.c.l.b16 %v6790
    %v7235 = vunpack.c.l.b16 %v6791
    %v7236 = vunpack.c.l.b16 %v6792
    %v7237 = vunpack.c.l.b16 %v6793
    %v7238 = vunpack.c.l.b16 %v6794
    %v7239 = vunpack.c.l.b16 %v6795
    %v7240 = vunpack.c.l.b16 %v6796
    %v7241 = vunpack.c.l.b16 %v6797
    %v7242 = vunpack.c.l.b16 %v6798
    %v7243 = vunpack.c.l.b16 %v6799
    %v7244 = vunpack.c.l.b16 %v6800
    %v7245 = vunpack.c.l.b16 %v6801
    %v7246 = vunpack.c.l.b16 %v6802
    %v7247 = vunpack.c.l.b16 %v6803
    %v7248 = vunpack.c.l.b16 %v6804
    %v7249 = vunpack.c.l.b16 %v6805
    %v7250 = vpack.c.b16 %v7187, %v7186
    %v7251 = vpack.c.b16 %v7189, %v7188
    %v7252 = vpack.c.b16 %v7191, %v7190
    %v7253 = vpack.c.b16 %v7193, %v7192
    %v7254 = vpack.c.b16 %v7195, %v7194
    %v7255 = vpack.c.b16 %v7197, %v7196
    %v7256 = vpack.c.b16 %v7199, %v7198
    %v7257 = vpack.c.b16 %v7201, %v7200
    %v7258 = vpack.c.b16 %v7203, %v7202
    %v7259 = vpack.c.b16 %v7205, %v7204
    %v7260 = vpack.c.b16 %v7207, %v7206
    %v7261 = vpack.c.b16 %v7209, %v7208
    %v7262 = vpack.c.b16 %v7211, %v7210
    %v7263 = vpack.c.b16 %v7213, %v7212
    %v7264 = vpack.c.b16 %v7215, %v7214
    %v7265 = vpack.c.b16 %v7217, %v7216
    %v7266 = vpack.c.b16 %v7219, %v7218
    %v7267 = vpack.c.b16 %v7221, %v7220
    %v7268 = vpack.c.b16 %v7223, %v7222
    %v7269 = vpack.c.b16 %v7225, %v7224
    %v7270 = vpack.c.b16 %v7227, %v7226
    %v7271 = vpack.c.b16 %v7229, %v7228
    %v7272 = vpack.c.b16 %v7231, %v7230
    %v7273 = vpack.c.b16 %v7233, %v7232
    %v7274 = vpack.c.b16 %v7235, %v7234
    %v7275 = vpack.c.b16 %v7237, %v7236
    %v7276 = vpack.c.b16 %v7239, %v7238
    %v7277 = vpack.c.b16 %v7241, %v7240
    %v7278 = vpack.c.b16 %v7243, %v7242
    %v7279 = vpack.c.b16 %v7245, %v7244
    %v7280 = vpack.c.b16 %v7247, %v7246
    %v7281 = vpack.c.b16 %v7249, %v7248
    %7314 = vmatpush.bf16.msra.mxu0 %v7257
    %7315 = vmatpush.bf16.msra.mxu0 %v7256
    %7316 = vmatpush.bf16.msra.mxu0 %v7255
    %7317 = vmatpush.bf16.msra.mxu0 %v7254
    %7318 = vmatpush.bf16.msra.mxu0 %v7253
    %7319 = vmatpush.bf16.msra.mxu0 %v7252
    %7320 = vmatpush.bf16.msra.mxu0 %v7251
    %7321 = vmatpush.bf16.msra.mxu0 %v7250
    %7322 = vmatmul.bf16.gmra.mxu0 %v6738
    %v7323 = vpop.f32.mrf.mxu0
    %v7324 = vadd.f32 %v7118, %v7323
    %v7325 = vpop.f32.mrf.mxu0
    %v7326 = vadd.f32 %v7120, %v7325
    %7327 = vdwg.mxu0
    %7328 = vmatpush.bf16.msra.mxu0 %v7265
    %7329 = vmatpush.bf16.msra.mxu0 %v7264
    %7330 = vmatpush.bf16.msra.mxu0 %v7263
    %7331 = vmatpush.bf16.msra.mxu0 %v7262
    %7332 = vmatpush.bf16.msra.mxu0 %v7261
    %7333 = vmatpush.bf16.msra.mxu0 %v7260
    %7334 = vmatpush.bf16.msra.mxu0 %v7259
    %7335 = vmatpush.bf16.msra.mxu0 %v7258
    %7336 = vmatmul.bf16.gmra.mxu0 %v6739
    %v7337 = vpop.f32.mrf.mxu0
    %v7338 = vadd.f32 %v7324, %v7337
    %v7339 = vpop.f32.mrf.mxu0
    %v7340 = vadd.f32 %v7326, %v7339
    %7341 = vdwg.mxu0
    %7342 = vmatpush.bf16.msra.mxu0 %v7273
    %7343 = vmatpush.bf16.msra.mxu0 %v7272
    %7344 = vmatpush.bf16.msra.mxu0 %v7271
    %7345 = vmatpush.bf16.msra.mxu0 %v7270
    %7346 = vmatpush.bf16.msra.mxu0 %v7269
    %7347 = vmatpush.bf16.msra.mxu0 %v7268
    %7348 = vmatpush.bf16.msra.mxu0 %v7267
    %7349 = vmatpush.bf16.msra.mxu0 %v7266
    %7350 = vmatmul.bf16.gmra.mxu0 %v6740
    %v7351 = vpop.f32.mrf.mxu0
    %v7352 = vadd.f32 %v7338, %v7351
    %v7353 = vpop.f32.mrf.mxu0
    %v7354 = vadd.f32 %v7340, %v7353
    %7355 = vdwg.mxu0
    %7356 = vmatpush.bf16.msra.mxu0 %v7281
    %7357 = vmatpush.bf16.msra.mxu0 %v7280
    %7358 = vmatpush.bf16.msra.mxu0 %v7279
    %7359 = vmatpush.bf16.msra.mxu0 %v7278
    %7360 = vmatpush.bf16.msra.mxu0 %v7277
    %7361 = vmatpush.bf16.msra.mxu0 %v7276
    %7362 = vmatpush.bf16.msra.mxu0 %v7275
    %7363 = vmatpush.bf16.msra.mxu0 %v7274
    %7364 = vmatmul.bf16.gmra.mxu0 %v6741
    %v7365 = vpop.f32.mrf.mxu0
    %v7366 = vadd.f32 %v7352, %v7365
    %v7367 = vpop.f32.mrf.mxu0
    %v7368 = vadd.f32 %v7354, %v7367
    %7369 = vdwg.mxu0
    %v7370 = vld [vmem:[#allocation13] sm:$0x1]
    %v7372 = vperm.slane %v7370, 0
    %v7374 = vadd.f32 %v7366, %v7372
    %v7375 = vadd.f32 %v7368, %v7372
    %7376 = vst [vmem:[#allocation14] sm:$0xff] %v7374
    %7377 = vst [vmem:[#allocation14 + $0x8] sm:$0xff] %v7375
    // Predicated region
    $region58: #{tpu_custom_call.1} parent=1 // pred_check
      _
    $region59: #{tpu_custom_call.1} parent=1 // pred_check_branch
      %7379 = sbr.rel (0) target = $region61
    $region60: #{tpu_custom_call.1} parent=1 // pred_region
      %7381 = vsyncadd [#allocation4], 0
      %s7382 = sshll.u32 [#allocation14], 4
      %s7383 = int_to_ptr.vmem [resolvable:$true] %s7382
      %s7384 = sshll.u32 %s7, 4
      %s7385 = int_to_ptr.hbm [resolvable:$true] %s7384
      %7390 = dma.vmem_to_hbm [thread:$0]  %s7383, 256, %s7385, [#allocation4], 128, 128, 8
    $region61: #{tpu_custom_call.1} parent=1 // pred_fallthru
      _
    // Predicated region
    $region62: #{tpu_custom_call.1} parent=1 // pred_check
      _
    $region63: #{tpu_custom_call.1} parent=1 // pred_check_branch
      %7392 = sbr.rel (0) target = $region65
    $region64: #{tpu_custom_call.1} parent=1 // pred_region
      %7394 = dma.done [#allocation4], 256
    $region65: #{tpu_custom_call.1} parent=1 // pred_fallthru
      _
    %7395 = vsyncpa [#allocation3], 1
    %7396 = vsyncpa [#allocation6], 1
    %7397 = vsyncpa [#allocation9], 1
    %7398 = vsyncpa [#allocation12], 1
    %7399 = vsyncpa [#allocation4], 1

</llo_original>
